<compile_context>
chip_gen: v7x
topology: tpu7x:2x2x1
jax: 0.10.0
libtpu: 0.0.40
codegen_flags: <defaults>
</compile_context>

<pallas_src>
import functools

import jax
import jax.numpy as jnp
from jax.experimental import pallas as pl
from jax.experimental.pallas import tpu as pltpu

BN_EPS = 1e-5


def mlp_fused_kernel(x_ref, w1_ref, gamma_ref, beta_ref, w2_ref, b2_ref,
                     o_ref, h_sc, sum_sc, sumsq_sc, *, inv_batch):
    """Fused Linear(no bias) -> BatchNorm1d -> ReLU -> Linear(bias).

    grid = (nb,), batch tiles, "arbitrary".  h and the BN statistics live in
    VMEM scratch across the whole grid; the epilogue fires on the last tile and
    writes the full (B, out_dim) output block (constant index_map -> resident,
    written back once at the end of the grid).
    """
    bi = pl.program_id(0)
    nb = pl.num_programs(0)
    block_b = x_ref.shape[0]

    @pl.when(bi == 0)
    def _init():
        sum_sc[...] = jnp.zeros_like(sum_sc)
        sumsq_sc[...] = jnp.zeros_like(sumsq_sc)

    # First (bias-free) linear: bf16 MXU operands, f32 accumulation.
    # x arrives as f32 and is cast in VMEM (no wrapper-side cast copy in HBM).
    h = jnp.dot(x_ref[...].astype(jnp.bfloat16), w1_ref[...],
                preferred_element_type=jnp.float32)

    # Stash this batch tile of h in the resident VMEM scratch (no HBM traffic).
    row = pl.multiple_of(bi * block_b, block_b)
    h_sc[pl.ds(row, block_b), :] = h

    # One-pass full-batch statistics (sum, sum of squares), f32.
    sum_sc[...] += jnp.sum(h, axis=0, keepdims=True)
    sumsq_sc[...] += jnp.sum(h * h, axis=0, keepdims=True)

    @pl.when(bi == nb - 1)
    def _epilogue():
        # BN scale/shift computed exactly once (hoisted out of the tile loop).
        mean = sum_sc[...] * inv_batch
        var = sumsq_sc[...] * inv_batch - mean * mean
        var = jnp.maximum(var, 0.0)          # guard one-pass cancellation
        scale = gamma_ref[...] * jax.lax.rsqrt(var + BN_EPS)
        shift = beta_ref[...] - mean * scale

        # Folded BN (single FMA) + ReLU, then second linear with bias.
        a = jnp.maximum(h_sc[...] * scale + shift, 0.0).astype(jnp.bfloat16)
        o_ref[...] = (
            jnp.dot(a, w2_ref[...], preferred_element_type=jnp.float32)
            + b2_ref[...]
        ).astype(o_ref.dtype)


def mlp_forward(x, w1_bf16, gamma, beta, w2_bf16, b2, *, block_b=256):
    B, in_dim = x.shape
    hidden = w1_bf16.shape[1]
    out_dim = w2_bf16.shape[1]
    assert B % block_b == 0, "batch must be a multiple of block_b"
    assert w1_bf16.dtype == jnp.bfloat16 and w2_bf16.dtype == jnp.bfloat16, (
        "weights should be stored as bf16 (cast once, outside the forward)")
    nb = B // block_b

    cost = pl.CostEstimate(
        flops=2 * B * in_dim * hidden + 2 * B * hidden * out_dim
              + 6 * B * hidden,
        transcendentals=hidden,                       # rsqrt, once
        bytes_accessed=(x.size * 4 + w1_bf16.size * 2 + w2_bf16.size * 2
                        + (gamma.size + beta.size + b2.size) * 4
                        + B * out_dim * 4),
    )

    return pl.pallas_call(
        functools.partial(mlp_fused_kernel, inv_batch=1.0 / B),
        grid=(nb,),
        in_specs=[
            pl.BlockSpec((block_b, in_dim), lambda bi: (bi, 0)),   # x (f32 tile)
            pl.BlockSpec((in_dim, hidden), lambda bi: (0, 0)),     # w1 (bf16, resident)
            pl.BlockSpec((1, hidden), lambda bi: (0, 0)),          # gamma
            pl.BlockSpec((1, hidden), lambda bi: (0, 0)),          # beta
            pl.BlockSpec((hidden, out_dim), lambda bi: (0, 0)),    # w2 (bf16, resident)
            pl.BlockSpec((1, out_dim), lambda bi: (0, 0)),         # b2
        ],
        out_specs=pl.BlockSpec((B, out_dim), lambda bi: (0, 0)),   # resident output
        out_shape=jax.ShapeDtypeStruct((B, out_dim), jnp.float32),
        scratch_shapes=[
            pltpu.VMEM((B, hidden), jnp.float32),   # resident h
            pltpu.VMEM((1, hidden), jnp.float32),   # column sum
            pltpu.VMEM((1, hidden), jnp.float32),   # column sum of squares
        ],
        compiler_params=pltpu.CompilerParams(
            dimension_semantics=("arbitrary",),     # full-batch BN => sequential
            vmem_limit_bytes=32 * 1024 * 1024,
        ),
        cost_estimate=cost,
    )(x, w1_bf16, gamma, beta, w2_bf16, b2)


def make_params(key, input_dim, hidden, output_dim):
    k1, k2, k3, k4, k5 = jax.random.split(key, 5)
    bound1 = 1.0 / (input_dim ** 0.5)
    bound2 = 1.0 / (hidden ** 0.5)
    w1 = jax.random.uniform(k1, (input_dim, hidden), jnp.float32, -bound1, bound1)
    gamma = 1.0 + 0.1 * jax.random.normal(k2, (1, hidden), jnp.float32)
    beta = 0.1 * jax.random.normal(k3, (1, hidden), jnp.float32)
    w2 = jax.random.uniform(k4, (hidden, output_dim), jnp.float32, -bound2, bound2)
    b2 = jax.random.uniform(k5, (1, output_dim), jnp.float32, -bound2, bound2)
    # One-time bf16 cast of the matmul weights (outside the forward hot path).
    return w1.astype(jnp.bfloat16), gamma, beta, w2.astype(jnp.bfloat16), b2


def mlp_reference(x, w1_bf16, gamma, beta, w2_bf16, b2):
    # Mirrors the kernel numerics: bf16 matmul operands, f32 accumulation,
    # full-batch biased variance (BatchNorm1d training mode), folded affine.
    h = jnp.dot(x.astype(jnp.bfloat16), w1_bf16, preferred_element_type=jnp.float32)
    mean = jnp.mean(h, axis=0, keepdims=True)
    var = jnp.maximum(jnp.mean(h * h, axis=0, keepdims=True) - mean * mean, 0.0)
    scale = gamma * jax.lax.rsqrt(var + BN_EPS)
    shift = beta - mean * scale
    a = jnp.maximum(h * scale + shift, 0.0).astype(jnp.bfloat16)
    return jnp.dot(a, w2_bf16, preferred_element_type=jnp.float32) + b2


if __name__ == "__main__":
    # Small, lane-dense shapes (all dims multiples of 128); block_b=256 gives a
    # 2-step grid so the cross-tile statistics accumulation path is exercised.
    B, INPUT_DIM, HIDDEN, OUTPUT_DIM = 512, 256, 512, 128

    key = jax.random.PRNGKey(0)
    kx, kp = jax.random.split(key)
    x = jax.random.normal(kx, (B, INPUT_DIM), jnp.float32)
    w1, gamma, beta, w2, b2 = make_params(kp, INPUT_DIM, HIDDEN, OUTPUT_DIM)

    out = mlp_forward(x, w1, gamma, beta, w2, b2, block_b=256)
    out = jax.block_until_ready(out)

    ref = mlp_reference(x, w1, gamma, beta, w2, b2)
    assert out.shape == (B, OUTPUT_DIM)
    max_err = float(jnp.max(jnp.abs(out - ref)))
    assert jnp.allclose(out, ref, atol=2e-2, rtol=2e-2), f"max_err={max_err}"

    print("KERNEL_OK")
</pallas_src>

<mosaic_0001>
module attributes {stable_mosaic.version = 11 : i64} {
  func.func @mlp_fused_kernel(%arg0: i32, %arg1: memref<256x256xf32, #tpu.memory_space<vmem>>, %arg2: memref<256x512xbf16, #tpu.memory_space<vmem>>, %arg3: memref<1x512xf32, #tpu.memory_space<vmem>>, %arg4: memref<1x512xf32, #tpu.memory_space<vmem>>, %arg5: memref<512x128xbf16, #tpu.memory_space<vmem>>, %arg6: memref<1x128xf32, #tpu.memory_space<vmem>>, %arg7: memref<512x128xf32, #tpu.memory_space<vmem>>, %arg8: memref<512x512xf32, #tpu.memory_space<vmem>>, %arg9: memref<1x512xf32, #tpu.memory_space<vmem>>, %arg10: memref<1x512xf32, #tpu.memory_space<vmem>>) attributes {dimension_semantics = [#tpu.dimension_semantics<arbitrary>], iteration_bounds = array<i64: 2>, scalar_prefetch = 0 : i64, scratch_operands = 3 : i64, tpu.core_type = #tpu.core_type<tc>, window_params = [{transform_indices = @transform_0, window_bounds = array<i64: 256, 256>}, {pipeline_mode = #tpu.pipeline_mode<synchronous>, transform_indices = @transform_1, window_bounds = array<i64: 256, 512>}, {pipeline_mode = #tpu.pipeline_mode<synchronous>, transform_indices = @transform_2, window_bounds = array<i64: 1, 512>}, {pipeline_mode = #tpu.pipeline_mode<synchronous>, transform_indices = @transform_3, window_bounds = array<i64: 1, 512>}, {pipeline_mode = #tpu.pipeline_mode<synchronous>, transform_indices = @transform_4, window_bounds = array<i64: 512, 128>}, {pipeline_mode = #tpu.pipeline_mode<synchronous>, transform_indices = @transform_5, window_bounds = array<i64: 1, 128>}, {pipeline_mode = #tpu.pipeline_mode<synchronous>, transform_indices = @transform_6, window_bounds = array<i64: 512, 128>}]} {
    %c0_i32 = arith.constant 0 : i32
    %0 = arith.cmpi eq, %arg0, %c0_i32 : i32
    %1 = arith.extui %0 : i1 to i32
    %c0_i32_0 = arith.constant 0 : i32
    %2 = arith.cmpi ne, %1, %c0_i32_0 : i32
    scf.if %2 {
      %cst_16 = arith.constant 0.000000e+00 : f32
      %25 = vector.broadcast %cst_16 : f32 to vector<1x512xf32>
      %c0_17 = arith.constant 0 : index
      %c0_18 = arith.constant 0 : index
      %26 = vector.load %arg9[%c0_17, %c0_18] : memref<1x512xf32, #tpu.memory_space<vmem>>, vector<1x512xf32>
      tpu.vector_store %arg9[%c0_17, %c0_18], %25 {strides = array<i32>} : memref<1x512xf32, #tpu.memory_space<vmem>>, vector<1x512xf32>,
      %cst_19 = arith.constant 0.000000e+00 : f32
      %27 = vector.broadcast %cst_19 : f32 to vector<1x512xf32>
      %c0_20 = arith.constant 0 : index
      %c0_21 = arith.constant 0 : index
      %28 = vector.load %arg10[%c0_20, %c0_21] : memref<1x512xf32, #tpu.memory_space<vmem>>, vector<1x512xf32>
      tpu.vector_store %arg10[%c0_20, %c0_21], %27 {strides = array<i32>} : memref<1x512xf32, #tpu.memory_space<vmem>>, vector<1x512xf32>,
    } else {
    }
    %c0 = arith.constant 0 : index
    %c0_1 = arith.constant 0 : index
    %3 = vector.load %arg1[%c0, %c0_1] : memref<256x256xf32, #tpu.memory_space<vmem>>, vector<256x256xf32>
    %4 = arith.truncf %3 : vector<256x256xf32> to vector<256x256xbf16>
    %c0_2 = arith.constant 0 : index
    %c0_3 = arith.constant 0 : index
    %5 = vector.load %arg2[%c0_2, %c0_3] : memref<256x512xbf16, #tpu.memory_space<vmem>>, vector<256x512xbf16>
    %cst = arith.constant dense<0.000000e+00> : vector<256x512xf32>
    %6 = tpu.matmul %4, %5, %cst {dimension_numbers = #tpu.dot_dimension_numbers<[1], [0], [0], [1], [0, 0, 1, 1], [], []>} : vector<256x256xbf16>, vector<256x512xbf16>, vector<256x512xf32> -> vector<256x512xf32>
    %c256_i32 = arith.constant 256 : i32
    %7 = arith.muli %arg0, %c256_i32 : i32
    %8 = tpu.assume_multiple %7, 256 : i32
    %9 = arith.index_cast %8 : i32 to index
    %c0_4 = arith.constant 0 : index
    %10 = vector.load %arg8[%9, %c0_4] : memref<512x512xf32, #tpu.memory_space<vmem>>, vector<256x512xf32>
    tpu.vector_store %arg8[%9, %c0_4], %6 {strides = array<i32>} : memref<512x512xf32, #tpu.memory_space<vmem>>, vector<256x512xf32>,
    %c0_5 = arith.constant 0 : index
    %c0_6 = arith.constant 0 : index
    %11 = vector.load %arg9[%c0_5, %c0_6] : memref<1x512xf32, #tpu.memory_space<vmem>>, vector<1x512xf32>
    %cst_7 = arith.constant dense<0.000000e+00> : vector<512xf32>
    %12 = vector.multi_reduction <add>, %6, %cst_7 [0] : vector<256x512xf32> to vector<512xf32>
    %13 = vector.shape_cast %12 : vector<512xf32> to vector<1x512xf32>
    %14 = arith.addf %11, %13 : vector<1x512xf32>
    %c0_8 = arith.constant 0 : index
    %c0_9 = arith.constant 0 : index
    %15 = vector.load %arg9[%c0_8, %c0_9] : memref<1x512xf32, #tpu.memory_space<vmem>>, vector<1x512xf32>
    tpu.vector_store %arg9[%c0_8, %c0_9], %14 {strides = array<i32>} : memref<1x512xf32, #tpu.memory_space<vmem>>, vector<1x512xf32>,
    %c0_10 = arith.constant 0 : index
    %c0_11 = arith.constant 0 : index
    %16 = vector.load %arg10[%c0_10, %c0_11] : memref<1x512xf32, #tpu.memory_space<vmem>>, vector<1x512xf32>
    %17 = arith.mulf %6, %6 : vector<256x512xf32>
    %cst_12 = arith.constant dense<0.000000e+00> : vector<512xf32>
    %18 = vector.multi_reduction <add>, %17, %cst_12 [0] : vector<256x512xf32> to vector<512xf32>
    %19 = vector.shape_cast %18 : vector<512xf32> to vector<1x512xf32>
    %20 = arith.addf %16, %19 : vector<1x512xf32>
    %c0_13 = arith.constant 0 : index
    %c0_14 = arith.constant 0 : index
    %21 = vector.load %arg10[%c0_13, %c0_14] : memref<1x512xf32, #tpu.memory_space<vmem>>, vector<1x512xf32>
    tpu.vector_store %arg10[%c0_13, %c0_14], %20 {strides = array<i32>} : memref<1x512xf32, #tpu.memory_space<vmem>>, vector<1x512xf32>,
    %c1_i32 = arith.constant 1 : i32
    %22 = arith.cmpi eq, %arg0, %c1_i32 : i32
    %23 = arith.extui %22 : i1 to i32
    %c0_i32_15 = arith.constant 0 : i32
    %24 = arith.cmpi ne, %23, %c0_i32_15 : i32
    scf.if %24 {
      %c0_16 = arith.constant 0 : index
      %c0_17 = arith.constant 0 : index
      %25 = vector.load %arg9[%c0_16, %c0_17] : memref<1x512xf32, #tpu.memory_space<vmem>>, vector<1x512xf32>
      %cst_18 = arith.constant 0.001953125 : f32
      %26 = vector.broadcast %cst_18 : f32 to vector<1x512xf32>
      %27 = arith.mulf %25, %26 : vector<1x512xf32>
      %c0_19 = arith.constant 0 : index
      %c0_20 = arith.constant 0 : index
      %28 = vector.load %arg10[%c0_19, %c0_20] : memref<1x512xf32, #tpu.memory_space<vmem>>, vector<1x512xf32>
      %cst_21 = arith.constant 0.001953125 : f32
      %29 = vector.broadcast %cst_21 : f32 to vector<1x512xf32>
      %30 = arith.mulf %28, %29 : vector<1x512xf32>
      %31 = arith.mulf %27, %27 : vector<1x512xf32>
      %32 = arith.subf %30, %31 : vector<1x512xf32>
      %cst_22 = arith.constant 0.000000e+00 : f32
      %33 = vector.broadcast %cst_22 : f32 to vector<1x512xf32>
      %34 = arith.maximumf %32, %33 : vector<1x512xf32>
      %c0_23 = arith.constant 0 : index
      %c0_24 = arith.constant 0 : index
      %35 = vector.load %arg3[%c0_23, %c0_24] : memref<1x512xf32, #tpu.memory_space<vmem>>, vector<1x512xf32>
      %cst_25 = arith.constant 9.99999974E-6 : f32
      %36 = vector.broadcast %cst_25 : f32 to vector<1x512xf32>
      %37 = arith.addf %34, %36 : vector<1x512xf32>
      %38 = math.rsqrt %37 : vector<1x512xf32>
      %39 = arith.mulf %35, %38 : vector<1x512xf32>
      %c0_26 = arith.constant 0 : index
      %c0_27 = arith.constant 0 : index
      %40 = vector.load %arg4[%c0_26, %c0_27] : memref<1x512xf32, #tpu.memory_space<vmem>>, vector<1x512xf32>
      %41 = arith.mulf %27, %39 : vector<1x512xf32>
      %42 = arith.subf %40, %41 : vector<1x512xf32>
      %c0_28 = arith.constant 0 : index
      %c0_29 = arith.constant 0 : index
      %43 = vector.load %arg8[%c0_28, %c0_29] : memref<512x512xf32, #tpu.memory_space<vmem>>, vector<512x512xf32>
      %44 = vector.broadcast %39 : vector<1x512xf32> to vector<512x512xf32>
      %45 = arith.mulf %43, %44 : vector<512x512xf32>
      %46 = vector.broadcast %42 : vector<1x512xf32> to vector<512x512xf32>
      %47 = arith.addf %45, %46 : vector<512x512xf32>
      %cst_30 = arith.constant 0.000000e+00 : f32
      %48 = vector.broadcast %cst_30 : f32 to vector<512x512xf32>
      %49 = arith.maximumf %47, %48 : vector<512x512xf32>
      %50 = arith.truncf %49 : vector<512x512xf32> to vector<512x512xbf16>
      %c0_31 = arith.constant 0 : index
      %c0_32 = arith.constant 0 : index
      %51 = vector.load %arg5[%c0_31, %c0_32] : memref<512x128xbf16, #tpu.memory_space<vmem>>, vector<512x128xbf16>
      %cst_33 = arith.constant dense<0.000000e+00> : vector<512x128xf32>
      %52 = tpu.matmul %50, %51, %cst_33 {dimension_numbers = #tpu.dot_dimension_numbers<[1], [0], [0], [1], [0, 0, 1, 1], [], []>} : vector<512x512xbf16>, vector<512x128xbf16>, vector<512x128xf32> -> vector<512x128xf32>
      %c0_34 = arith.constant 0 : index
      %c0_35 = arith.constant 0 : index
      %53 = vector.load %arg6[%c0_34, %c0_35] : memref<1x128xf32, #tpu.memory_space<vmem>>, vector<1x128xf32>
      %54 = vector.broadcast %53 : vector<1x128xf32> to vector<512x128xf32>
      %55 = arith.addf %52, %54 : vector<512x128xf32>
      %c0_36 = arith.constant 0 : index
      %c0_37 = arith.constant 0 : index
      %56 = vector.load %arg7[%c0_36, %c0_37] : memref<512x128xf32, #tpu.memory_space<vmem>>, vector<512x128xf32>
      tpu.vector_store %arg7[%c0_36, %c0_37], %55 {strides = array<i32>} : memref<512x128xf32, #tpu.memory_space<vmem>>, vector<512x128xf32>,
    } else {
    }
    return
  }
  func.func @transform_0(%arg0: i32) -> (i32, i32) {
    %c0_i32 = arith.constant 0 : i32
    %c0_i32_0 = arith.constant 0 : i32
    return %arg0, %c0_i32 : i32, i32
  }
  func.func @transform_1(%arg0: i32) -> (i32, i32) {
    %c0_i32 = arith.constant 0 : i32
    %c0_i32_0 = arith.constant 0 : i32
    %c0_i32_1 = arith.constant 0 : i32
    return %c0_i32, %c0_i32_0 : i32, i32
  }
  func.func @transform_2(%arg0: i32) -> (i32, i32) {
    %c0_i32 = arith.constant 0 : i32
    %c0_i32_0 = arith.constant 0 : i32
    %c0_i32_1 = arith.constant 0 : i32
    return %c0_i32, %c0_i32_0 : i32, i32
  }
  func.func @transform_3(%arg0: i32) -> (i32, i32) {
    %c0_i32 = arith.constant 0 : i32
    %c0_i32_0 = arith.constant 0 : i32
    %c0_i32_1 = arith.constant 0 : i32
    return %c0_i32, %c0_i32_0 : i32, i32
  }
  func.func @transform_4(%arg0: i32) -> (i32, i32) {
    %c0_i32 = arith.constant 0 : i32
    %c0_i32_0 = arith.constant 0 : i32
    %c0_i32_1 = arith.constant 0 : i32
    return %c0_i32, %c0_i32_0 : i32, i32
  }
  func.func @transform_5(%arg0: i32) -> (i32, i32) {
    %c0_i32 = arith.constant 0 : i32
    %c0_i32_0 = arith.constant 0 : i32
    %c0_i32_1 = arith.constant 0 : i32
    return %c0_i32, %c0_i32_0 : i32, i32
  }
  func.func @transform_6(%arg0: i32) -> (i32, i32) {
    %c0_i32 = arith.constant 0 : i32
    %c0_i32_0 = arith.constant 0 : i32
    %c0_i32_1 = arith.constant 0 : i32
    return %c0_i32, %c0_i32_0 : i32, i32
  }
}

</mosaic_0001>

<llo_original>
// kernel: tpu_custom_call.1
$region0: #{tpu_custom_call.1}
  #allocation0 [shape = 'u32[]', space=smem, size = 0x4, offset = 0x4, fixed_abs, tag = 'smem constant byte address 0x4 - core index']
  #allocation1 [shape = 'u32[144,128]{1,0:T(1,128)}', space=vmem, size = 0x12000, scoped, tag = 'internal scratch']
  #allocation2 [shape = 'f32[512,512]{1,0:T(8,128)}', space=vmem, size = 0x100000, scoped, tag = 'scratch operand']
  #allocation3 [shape = 'f32[1,512]{1,0:T(1,128)}', space=vmem, size = 0x800, scoped, tag = 'scratch operand']
  #allocation4 [shape = 'f32[1,512]{1,0:T(1,128)}', space=vmem, size = 0x800, scoped, tag = 'scratch operand']
  %s0 = inlined_call_operand.hbm [shape: f32[512,256], index: 0, kind: input, shape index: {}]
  %s1 = inlined_call_operand.hbm [shape: bf16[256,512], index: 1, kind: input, shape index: {}]
  %s2 = inlined_call_operand.vmem [shape: f32[1,512], index: 2, kind: input, shape index: {}]
  %s3 = inlined_call_operand.vmem [shape: f32[1,512], index: 3, kind: input, shape index: {}]
  %s4 = inlined_call_operand.hbm [shape: bf16[512,128], index: 4, kind: input, shape index: {}]
  %s5 = inlined_call_operand.vmem [shape: f32[1,128], index: 5, kind: input, shape index: {}]
  %s6 = inlined_call_operand.hbm [shape: f32[512,128], index: 6, kind: output, shape index: {}]
  %s7 = sld [smem:[#allocation0]]
  $region77: #{tpu_custom_call.1} parent=0
    _
  %s9 = ssub.s32 1, %s7
  %s10 = scalar_select 0, %s9, %s7
  $region1: #{tpu_custom_call.1} parent=0
    #allocation5 [shape = 'u8[524288]{0}', space=vmem, size = 0x80000, scoped, tag = 'input window, operand 0']
    #allocation6 [shape = 's32[2]{0}', space=sflag, size = 0x8, scoped, tag = 'scoped memory for tpu_custom_call.1']
    #allocation7 [shape = 's32[2]{0}', space=sflag, size = 0x8, scoped, tag = 'scoped memory for tpu_custom_call.1']
    #allocation8 [shape = 'u8[262144]{0}', space=vmem, size = 0x40000, scoped, tag = 'input window, operand 1, single buffered']
    #allocation9 [shape = 's32[1]{0}', space=sflag, size = 0x4, scoped, tag = 'scoped memory for tpu_custom_call.1']
    #allocation10 [shape = 'u8[131072]{0}', space=vmem, size = 0x20000, scoped, tag = 'input window, operand 4, single buffered']
    #allocation11 [shape = 'u8[262144]{0}', space=vmem, size = 0x40000, scoped, tag = 'output window, operand 0, single buffered']
    %11 = vsyncpa [#allocation6], 0
    %s12 = scalar_lea.sflag [#allocation6], 1
    %13 = vsyncpa %s12, 0
    %14 = vsyncpa [#allocation9], 0
    %15 = vsyncpa [#allocation7], 0
    loop: start=0, step=1, limit=4
    $region2: #{tpu_custom_call.1} parent=1 // loop_pre_header
      _
    $region3: #{tpu_custom_call.1} parent=1 // loop_header
      %s17 = sphi 0, %s21
      %p18 = scmp.ge.s32.totalorder %s17, 4
      %s27 = sphi 0, %s29
      %s30 = sphi 0, %s27
      %s31 = sphi 0, %s30
      %s47 = sphi 0, %s31
      %s51 = sphi 0, %s51
      %s53 = sphi 0, %s51
      %s54 = sphi 0, %s53
      %s68 = sphi 0, %s54
      %s72 = sphi 0, %s72
      %s74 = sphi 0, %s72
      %s75 = sphi 0, %s74
      %s89 = sphi 0, %s75
      %s93 = sphi 0, %s93
      %s95 = sphi 0, %s93
      %s96 = sphi 0, %s95
      %s110 = sphi 0, %s96
      %s114 = sphi 0, %s114
      %s116 = sphi 0, %s114
      %s117 = sphi 0, %s116
      %s131 = sphi 0, %s117
      %s135 = sphi 0, %s135
      %s137 = sphi 0, %s135
      %s138 = sphi 0, %s137
      %s152 = sphi 0, %s138
      %s156 = sphi 0, %s156
      %s158 = sphi 0, %s156
      %s159 = sphi 0, %s158
      %s173 = sphi 0, %s159
    $region4: #{tpu_custom_call.1} parent=1 // loop_header_branch
      %20 = sbr.rel (%p18) target = $region8
    $region5: #{tpu_custom_call.1} parent=1 // loop_body
      %s22 = ssub.s32 %s17, 1
      %s23 = ssub.s32 %s17, 2
      %s24 = sadd.s32 %s17, 1
      %s25 = ssub.s32 %s17, %s24
      %p26 = scmp.eq.s32.totalorder %s25, 0
      %s28 = sadd.s32 %s27, 1
      %s29 = scalar_select %p26, %s27, %s28
      %p32 = pneg %p26
      %p33 = scmp.eq.s32.totalorder %s17, 1
      %p34 = por %p32, %p33
      %p35 = scmp.ne.s32.totalorder %s27, %s30
      %p36 = scmp.eq.s32.totalorder %s17, 0
      %p37 = por %p35, %p36
      %p38 = scmp.ne.s32.totalorder %s27, %s30
      %p39 = scmp.eq.s32.totalorder %s22, 1
      %p40 = por %p38, %p39
      %p41 = scmp.ne.s32.totalorder %s30, %s31
      %p42 = scmp.eq.s32.totalorder %s22, 0
      %p43 = por %p41, %p42
      %p44 = scmp.ne.s32.totalorder %s30, %s31
      %p45 = scmp.eq.s32.totalorder %s23, 1
      %p46 = por %p44, %p45
      %p48 = scmp.ne.s32.totalorder %s31, %s47
      %p49 = scmp.eq.s32.totalorder %s23, 0
      %p50 = por %p48, %p49
      %s52 = sadd.s32 %s51, 1
      %p55 = scmp.eq.s32.totalorder %s17, 1
      %p56 = scmp.ne.s32.totalorder %s51, %s53
      %p57 = scmp.eq.s32.totalorder %s17, 0
      %p58 = por %p56, %p57
      %p59 = scmp.ne.s32.totalorder %s51, %s53
      %p60 = scmp.eq.s32.totalorder %s22, 1
      %p61 = por %p59, %p60
      %p62 = scmp.ne.s32.totalorder %s53, %s54
      %p63 = scmp.eq.s32.totalorder %s22, 0
      %p64 = por %p62, %p63
      %p65 = scmp.ne.s32.totalorder %s53, %s54
      %p66 = scmp.eq.s32.totalorder %s23, 1
      %p67 = por %p65, %p66
      %p69 = scmp.ne.s32.totalorder %s54, %s68
      %p70 = scmp.eq.s32.totalorder %s23, 0
      %p71 = por %p69, %p70
      %s73 = sadd.s32 %s72, 1
      %p76 = scmp.eq.s32.totalorder %s17, 1
      %p77 = scmp.ne.s32.totalorder %s72, %s74
      %p78 = scmp.eq.s32.totalorder %s17, 0
      %p79 = por %p77, %p78
      %p80 = scmp.ne.s32.totalorder %s72, %s74
      %p81 = scmp.eq.s32.totalorder %s22, 1
      %p82 = por %p80, %p81
      %p83 = scmp.ne.s32.totalorder %s74, %s75
      %p84 = scmp.eq.s32.totalorder %s22, 0
      %p85 = por %p83, %p84
      %p86 = scmp.ne.s32.totalorder %s74, %s75
      %p87 = scmp.eq.s32.totalorder %s23, 1
      %p88 = por %p86, %p87
      %p90 = scmp.ne.s32.totalorder %s75, %s89
      %p91 = scmp.eq.s32.totalorder %s23, 0
      %p92 = por %p90, %p91
      %s94 = sadd.s32 %s93, 1
      %p97 = scmp.eq.s32.totalorder %s17, 1
      %p98 = scmp.ne.s32.totalorder %s93, %s95
      %p99 = scmp.eq.s32.totalorder %s17, 0
      %p100 = por %p98, %p99
      %p101 = scmp.ne.s32.totalorder %s93, %s95
      %p102 = scmp.eq.s32.totalorder %s22, 1
      %p103 = por %p101, %p102
      %p104 = scmp.ne.s32.totalorder %s95, %s96
      %p105 = scmp.eq.s32.totalorder %s22, 0
      %p106 = por %p104, %p105
      %p107 = scmp.ne.s32.totalorder %s95, %s96
      %p108 = scmp.eq.s32.totalorder %s23, 1
      %p109 = por %p107, %p108
      %p111 = scmp.ne.s32.totalorder %s96, %s110
      %p112 = scmp.eq.s32.totalorder %s23, 0
      %p113 = por %p111, %p112
      %s115 = sadd.s32 %s114, 1
      %p118 = scmp.eq.s32.totalorder %s17, 1
      %p119 = scmp.ne.s32.totalorder %s114, %s116
      %p120 = scmp.eq.s32.totalorder %s17, 0
      %p121 = por %p119, %p120
      %p122 = scmp.ne.s32.totalorder %s114, %s116
      %p123 = scmp.eq.s32.totalorder %s22, 1
      %p124 = por %p122, %p123
      %p125 = scmp.ne.s32.totalorder %s116, %s117
      %p126 = scmp.eq.s32.totalorder %s22, 0
      %p127 = por %p125, %p126
      %p128 = scmp.ne.s32.totalorder %s116, %s117
      %p129 = scmp.eq.s32.totalorder %s23, 1
      %p130 = por %p128, %p129
      %p132 = scmp.ne.s32.totalorder %s117, %s131
      %p133 = scmp.eq.s32.totalorder %s23, 0
      %p134 = por %p132, %p133
      %s136 = sadd.s32 %s135, 1
      %p139 = scmp.eq.s32.totalorder %s17, 1
      %p140 = scmp.ne.s32.totalorder %s135, %s137
      %p141 = scmp.eq.s32.totalorder %s17, 0
      %p142 = por %p140, %p141
      %p143 = scmp.ne.s32.totalorder %s135, %s137
      %p144 = scmp.eq.s32.totalorder %s22, 1
      %p145 = por %p143, %p144
      %p146 = scmp.ne.s32.totalorder %s137, %s138
      %p147 = scmp.eq.s32.totalorder %s22, 0
      %p148 = por %p146, %p147
      %p149 = scmp.ne.s32.totalorder %s137, %s138
      %p150 = scmp.eq.s32.totalorder %s23, 1
      %p151 = por %p149, %p150
      %p153 = scmp.ne.s32.totalorder %s138, %s152
      %p154 = scmp.eq.s32.totalorder %s23, 0
      %p155 = por %p153, %p154
      %s157 = sadd.s32 %s156, 1
      %p160 = scmp.eq.s32.totalorder %s17, 1
      %p161 = scmp.ne.s32.totalorder %s156, %s158
      %p162 = scmp.eq.s32.totalorder %s17, 0
      %p163 = por %p161, %p162
      %p164 = scmp.ne.s32.totalorder %s156, %s158
      %p165 = scmp.eq.s32.totalorder %s22, 1
      %p166 = por %p164, %p165
      %p167 = scmp.ne.s32.totalorder %s158, %s159
      %p168 = scmp.eq.s32.totalorder %s22, 0
      %p169 = por %p167, %p168
      %p170 = scmp.ne.s32.totalorder %s158, %s159
      %p171 = scmp.eq.s32.totalorder %s23, 1
      %p172 = por %p170, %p171
      %p174 = scmp.ne.s32.totalorder %s159, %s173
      %p175 = scmp.eq.s32.totalorder %s23, 0
      %p176 = por %p174, %p175
      %p177 = scmp.le.s32.totalorder 1, %s17
      %p178 = scmp.lt.s32.totalorder %s17, 3
      %p179 = pnand %p177, %p178
      %p180 = pneg %p179
      // Predicated region
      $region9: #{tpu_custom_call.1} parent=5 // pred_check
        _
      $region10: #{tpu_custom_call.1} parent=5 // pred_check_branch
        %182 = sbr.rel (%p179) target = $region12
      $region11: #{tpu_custom_call.1} parent=5 // pred_region
        %s183 = ssub.s32 %s17, 1
        // Predicated region
        $region13: #{tpu_custom_call.1} parent=11 // pred_check
          %p184 = pneg %p64
        $region14: #{tpu_custom_call.1} parent=11 // pred_check_branch
          %186 = sbr.rel (%p184) target = $region16
        $region15: #{tpu_custom_call.1} parent=11 // pred_region
          %s188 = ssub.s32 8192, 8192
          %189 = vsyncadd [#allocation9], %s188
          %s190 = sshll.u32 [#allocation8], 4
          %s191 = int_to_ptr.vmem [resolvable:$true] %s190
          %196 = dma.hbm_to_vmem [thread:$0]  %s1, 8192, %s191, [#allocation9], 256, 256, 16
        $region16: #{tpu_custom_call.1} parent=11 // pred_fallthru
          _
        // Predicated region
        $region17: #{tpu_custom_call.1} parent=11 // pred_check
          %p197 = pneg %p85
        $region18: #{tpu_custom_call.1} parent=11 // pred_check_branch
          %199 = sbr.rel (%p197) target = $region20
        $region19: #{tpu_custom_call.1} parent=11 // pred_region
          _
        $region20: #{tpu_custom_call.1} parent=11 // pred_fallthru
          _
        // Predicated region
        $region21: #{tpu_custom_call.1} parent=11 // pred_check
          %p200 = pneg %p106
        $region22: #{tpu_custom_call.1} parent=11 // pred_check_branch
          %202 = sbr.rel (%p200) target = $region24
        $region23: #{tpu_custom_call.1} parent=11 // pred_region
          _
        $region24: #{tpu_custom_call.1} parent=11 // pred_fallthru
          _
        // Predicated region
        $region25: #{tpu_custom_call.1} parent=11 // pred_check
          %p203 = pneg %p127
        $region26: #{tpu_custom_call.1} parent=11 // pred_check_branch
          %205 = sbr.rel (%p203) target = $region28
        $region27: #{tpu_custom_call.1} parent=11 // pred_region
          %s207 = ssub.s32 4096, 4096
          %208 = vsyncadd [#allocation9], %s207
          %s209 = sshll.u32 [#allocation10], 4
          %s210 = int_to_ptr.vmem [resolvable:$true] %s209
          %215 = dma.hbm_to_vmem [thread:$0]  %s4, 4096, %s210, [#allocation9], 64, 64, 4
        $region28: #{tpu_custom_call.1} parent=11 // pred_fallthru
          _
        // Predicated region
        $region29: #{tpu_custom_call.1} parent=11 // pred_check
          %p216 = pneg %p148
        $region30: #{tpu_custom_call.1} parent=11 // pred_check_branch
          %218 = sbr.rel (%p216) target = $region32
        $region31: #{tpu_custom_call.1} parent=11 // pred_region
          _
        $region32: #{tpu_custom_call.1} parent=11 // pred_fallthru
          _
      $region12: #{tpu_custom_call.1} parent=5 // pred_fallthru
        _
      %p219 = scmp.lt.s32.totalorder %s17, 2
      // Predicated region
      $region33: #{tpu_custom_call.1} parent=5 // pred_check
        %p220 = pneg %p219
      $region34: #{tpu_custom_call.1} parent=5 // pred_check_branch
        %222 = sbr.rel (%p220) target = $region36
      $region35: #{tpu_custom_call.1} parent=5 // pred_region
        // Predicated region
        $region37: #{tpu_custom_call.1} parent=35 // pred_check
          %p223 = pneg %p37
        $region38: #{tpu_custom_call.1} parent=35 // pred_check_branch
          %225 = sbr.rel (%p223) target = $region40
        $region39: #{tpu_custom_call.1} parent=35 // pred_region
          %s226 = sand.u32 %s27, 1
          %s227 = scalar_lea.sflag [#allocation6], %s226
          %s228 = sand.u32 %s27, 1
          %s229 = smul.addr %s228, 512
          %s230 = scalar_lea.vmem [#allocation5], %s229
          %s231 = smul.u32 32, %s17
          %s233 = ssub.s32 8192, 8192
          %234 = vsyncadd %s227, %s233
          %s235 = smul.addr %s231, 2
          %s236 = smul.addr %s235, 128
          %s237 = scalar_lea.hbm %s0, %s236
          %s238 = sshll.u32 %s230, 4
          %s239 = int_to_ptr.vmem [resolvable:$true] %s238
          %244 = dma.hbm_to_vmem [thread:$0]  %s237, 8192, %s239, %s227, 256, 256, 16
        $region40: #{tpu_custom_call.1} parent=35 // pred_fallthru
          _
      $region36: #{tpu_custom_call.1} parent=5 // pred_fallthru
        _
      %p245 = scmp.le.s32.totalorder 1, %s17
      %p246 = scmp.lt.s32.totalorder %s17, 3
      %p247 = pnand %p245, %p246
      %p248 = pneg %p247
      // Predicated region
      $region41: #{tpu_custom_call.1} parent=5 // pred_check
        _
      $region42: #{tpu_custom_call.1} parent=5 // pred_check_branch
        %250 = sbr.rel (%p247) target = $region44
      $region43: #{tpu_custom_call.1} parent=5 // pred_region
        %s251 = ssub.s32 %s17, 1
        %s252 = sand.u32 %s30, 1
        %s253 = scalar_lea.sflag [#allocation6], %s252
        %s254 = sand.u32 %s30, 1
        %s255 = smul.addr %s254, 512
        %s256 = scalar_lea.vmem [#allocation5], %s255
        // Predicated region
        $region45: #{tpu_custom_call.1} parent=43 // pred_check
          %p257 = pneg %p43
        $region46: #{tpu_custom_call.1} parent=43 // pred_check_branch
          %259 = sbr.rel (%p257) target = $region48
        $region47: #{tpu_custom_call.1} parent=43 // pred_region
          %260 = dma.done %s253, 8192
        $region48: #{tpu_custom_call.1} parent=43 // pred_fallthru
          _
        // Predicated region
        $region49: #{tpu_custom_call.1} parent=43 // pred_check
          %p261 = pneg %p64
        $region50: #{tpu_custom_call.1} parent=43 // pred_check_branch
          %263 = sbr.rel (%p261) target = $region52
        $region51: #{tpu_custom_call.1} parent=43 // pred_region
          %264 = dma.done [#allocation9], 8192
        $region52: #{tpu_custom_call.1} parent=43 // pred_fallthru
          _
        // Predicated region
        $region53: #{tpu_custom_call.1} parent=43 // pred_check
          %p265 = pneg %p127
        $region54: #{tpu_custom_call.1} parent=43 // pred_check_branch
          %267 = sbr.rel (%p265) target = $region56
        $region55: #{tpu_custom_call.1} parent=43 // pred_region
          %268 = dma.done [#allocation9], 4096
        $region56: #{tpu_custom_call.1} parent=43 // pred_fallthru
          _
        %s269 = sand.u32 %s30, 1
        %s270 = scalar_lea.sflag [#allocation6], %s269
        %s271 = sand.u32 %s30, 1
        %s272 = smul.addr %s271, 512
        %s273 = scalar_lea.vmem [#allocation5], %s272
        %p274 = pneg %p43
        %p275 = pneg %p40
        %p276 = pneg %p64
        %p277 = pneg %p61
        %p278 = pneg %p85
        %p279 = pneg %p82
        %p280 = pneg %p106
        %p281 = pneg %p103
        %p282 = pneg %p127
        %p283 = pneg %p124
        %p284 = pneg %p148
        %p285 = pneg %p145
        %p286 = pneg %p169
        %p287 = pneg %p166
        %s288 = smul.u32 32, %s22
        %p290 = scmp.eq.s32.totalorder %s22, 0
        // Predicated region
        $region57: #{tpu_custom_call.1} parent=43 // pred_check
          %p291 = pneg %p290
        $region58: #{tpu_custom_call.1} parent=43 // pred_check_branch
          %293 = sbr.rel (%p291) target = $region60
        $region59: #{tpu_custom_call.1} parent=43 // pred_region
          %v294 = vlaneseq
          %vm295 = vcmp.ge.s32.totalorder %v294, 0
          %vm296 = vcmp.lt.s32.totalorder %v294, 512
          %vm297 = vmand %vm295, %vm296
          %298 = vst.msk [vmem:[#allocation3] sm:$0xf] %vm297, 0.0
          %299 = vst.msk [vmem:[#allocation4] sm:$0xf] %vm297, 0.0
        $region60: #{tpu_custom_call.1} parent=43 // pred_fallthru
          _
        %v300 = vld [vmem:[%s256] sm:$0xff]
        %v301 = vld [vmem:[%s256 + $0x8] sm:$0xff]
        %v302 = vld [vmem:[%s256 + $0x10] sm:$0xff]
        %v303 = vld [vmem:[%s256 + $0x18] sm:$0xff]
        %v304 = vld [vmem:[%s256 + $0x20] sm:$0xff]
        %v305 = vld [vmem:[%s256 + $0x28] sm:$0xff]
        %v306 = vld [vmem:[%s256 + $0x30] sm:$0xff]
        %v307 = vld [vmem:[%s256 + $0x38] sm:$0xff]
        %v308 = vld [vmem:[%s256 + $0x40] sm:$0xff]
        %v309 = vld [vmem:[%s256 + $0x48] sm:$0xff]
        %v310 = vld [vmem:[%s256 + $0x50] sm:$0xff]
        %v311 = vld [vmem:[%s256 + $0x58] sm:$0xff]
        %v312 = vld [vmem:[%s256 + $0x60] sm:$0xff]
        %v313 = vld [vmem:[%s256 + $0x68] sm:$0xff]
        %v314 = vld [vmem:[%s256 + $0x70] sm:$0xff]
        %v315 = vld [vmem:[%s256 + $0x78] sm:$0xff]
        %v316 = vld [vmem:[%s256 + $0x80] sm:$0xff]
        %v317 = vld [vmem:[%s256 + $0x88] sm:$0xff]
        %v318 = vld [vmem:[%s256 + $0x90] sm:$0xff]
        %v319 = vld [vmem:[%s256 + $0x98] sm:$0xff]
        %v320 = vld [vmem:[%s256 + $0xa0] sm:$0xff]
        %v321 = vld [vmem:[%s256 + $0xa8] sm:$0xff]
        %v322 = vld [vmem:[%s256 + $0xb0] sm:$0xff]
        %v323 = vld [vmem:[%s256 + $0xb8] sm:$0xff]
        %v324 = vld [vmem:[%s256 + $0xc0] sm:$0xff]
        %v325 = vld [vmem:[%s256 + $0xc8] sm:$0xff]
        %v326 = vld [vmem:[%s256 + $0xd0] sm:$0xff]
        %v327 = vld [vmem:[%s256 + $0xd8] sm:$0xff]
        %v328 = vld [vmem:[%s256 + $0xe0] sm:$0xff]
        %v329 = vld [vmem:[%s256 + $0xe8] sm:$0xff]
        %v330 = vld [vmem:[%s256 + $0xf0] sm:$0xff]
        %v331 = vld [vmem:[%s256 + $0xf8] sm:$0xff]
        %v332 = vld [vmem:[%s256 + $0x100] sm:$0xff]
        %v333 = vld [vmem:[%s256 + $0x108] sm:$0xff]
        %v334 = vld [vmem:[%s256 + $0x110] sm:$0xff]
        %v335 = vld [vmem:[%s256 + $0x118] sm:$0xff]
        %v336 = vld [vmem:[%s256 + $0x120] sm:$0xff]
        %v337 = vld [vmem:[%s256 + $0x128] sm:$0xff]
        %v338 = vld [vmem:[%s256 + $0x130] sm:$0xff]
        %v339 = vld [vmem:[%s256 + $0x138] sm:$0xff]
        %v340 = vld [vmem:[%s256 + $0x140] sm:$0xff]
        %v341 = vld [vmem:[%s256 + $0x148] sm:$0xff]
        %v342 = vld [vmem:[%s256 + $0x150] sm:$0xff]
        %v343 = vld [vmem:[%s256 + $0x158] sm:$0xff]
        %v344 = vld [vmem:[%s256 + $0x160] sm:$0xff]
        %v345 = vld [vmem:[%s256 + $0x168] sm:$0xff]
        %v346 = vld [vmem:[%s256 + $0x170] sm:$0xff]
        %v347 = vld [vmem:[%s256 + $0x178] sm:$0xff]
        %v348 = vld [vmem:[%s256 + $0x180] sm:$0xff]
        %v349 = vld [vmem:[%s256 + $0x188] sm:$0xff]
        %v350 = vld [vmem:[%s256 + $0x190] sm:$0xff]
        %v351 = vld [vmem:[%s256 + $0x198] sm:$0xff]
        %v352 = vld [vmem:[%s256 + $0x1a0] sm:$0xff]
        %v353 = vld [vmem:[%s256 + $0x1a8] sm:$0xff]
        %v354 = vld [vmem:[%s256 + $0x1b0] sm:$0xff]
        %v355 = vld [vmem:[%s256 + $0x1b8] sm:$0xff]
        %v356 = vld [vmem:[%s256 + $0x1c0] sm:$0xff]
        %v357 = vld [vmem:[%s256 + $0x1c8] sm:$0xff]
        %v358 = vld [vmem:[%s256 + $0x1d0] sm:$0xff]
        %v359 = vld [vmem:[%s256 + $0x1d8] sm:$0xff]
        %v360 = vld [vmem:[%s256 + $0x1e0] sm:$0xff]
        %v361 = vld [vmem:[%s256 + $0x1e8] sm:$0xff]
        %v362 = vld [vmem:[%s256 + $0x1f0] sm:$0xff]
        %v363 = vld [vmem:[%s256 + $0x1f8] sm:$0xff]
        %v364 = vpack.c.bf16 %v302, %v300
        %v365 = vpack.c.bf16 %v303, %v301
        %v366 = vpack.c.bf16 %v306, %v304
        %v367 = vpack.c.bf16 %v307, %v305
        %v368 = vpack.c.bf16 %v310, %v308
        %v369 = vpack.c.bf16 %v311, %v309
        %v370 = vpack.c.bf16 %v314, %v312
        %v371 = vpack.c.bf16 %v315, %v313
        %v372 = vpack.c.bf16 %v318, %v316
        %v373 = vpack.c.bf16 %v319, %v317
        %v374 = vpack.c.bf16 %v322, %v320
        %v375 = vpack.c.bf16 %v323, %v321
        %v376 = vpack.c.bf16 %v326, %v324
        %v377 = vpack.c.bf16 %v327, %v325
        %v378 = vpack.c.bf16 %v330, %v328
        %v379 = vpack.c.bf16 %v331, %v329
        %v380 = vpack.c.bf16 %v334, %v332
        %v381 = vpack.c.bf16 %v335, %v333
        %v382 = vpack.c.bf16 %v338, %v336
        %v383 = vpack.c.bf16 %v339, %v337
        %v384 = vpack.c.bf16 %v342, %v340
        %v385 = vpack.c.bf16 %v343, %v341
        %v386 = vpack.c.bf16 %v346, %v344
        %v387 = vpack.c.bf16 %v347, %v345
        %v388 = vpack.c.bf16 %v350, %v348
        %v389 = vpack.c.bf16 %v351, %v349
        %v390 = vpack.c.bf16 %v354, %v352
        %v391 = vpack.c.bf16 %v355, %v353
        %v392 = vpack.c.bf16 %v358, %v356
        %v393 = vpack.c.bf16 %v359, %v357
        %v394 = vpack.c.bf16 %v362, %v360
        %v395 = vpack.c.bf16 %v363, %v361
        %v396 = vld [vmem:[#allocation8] sm:$0xff]
        %v397 = vld [vmem:[#allocation8 + $0x8] sm:$0xff]
        %v398 = vld [vmem:[#allocation8 + $0x10] sm:$0xff]
        %v399 = vld [vmem:[#allocation8 + $0x18] sm:$0xff]
        %v400 = vld [vmem:[#allocation8 + $0x20] sm:$0xff]
        %v401 = vld [vmem:[#allocation8 + $0x28] sm:$0xff]
        %v402 = vld [vmem:[#allocation8 + $0x30] sm:$0xff]
        %v403 = vld [vmem:[#allocation8 + $0x38] sm:$0xff]
        %v404 = vld [vmem:[#allocation8 + $0x40] sm:$0xff]
        %v405 = vld [vmem:[#allocation8 + $0x48] sm:$0xff]
        %v406 = vld [vmem:[#allocation8 + $0x50] sm:$0xff]
        %v407 = vld [vmem:[#allocation8 + $0x58] sm:$0xff]
        %v408 = vld [vmem:[#allocation8 + $0x60] sm:$0xff]
        %v409 = vld [vmem:[#allocation8 + $0x68] sm:$0xff]
        %v410 = vld [vmem:[#allocation8 + $0x70] sm:$0xff]
        %v411 = vld [vmem:[#allocation8 + $0x78] sm:$0xff]
        %v412 = vld [vmem:[#allocation8 + $0x80] sm:$0xff]
        %v413 = vld [vmem:[#allocation8 + $0x88] sm:$0xff]
        %v414 = vld [vmem:[#allocation8 + $0x90] sm:$0xff]
        %v415 = vld [vmem:[#allocation8 + $0x98] sm:$0xff]
        %v416 = vld [vmem:[#allocation8 + $0xa0] sm:$0xff]
        %v417 = vld [vmem:[#allocation8 + $0xa8] sm:$0xff]
        %v418 = vld [vmem:[#allocation8 + $0xb0] sm:$0xff]
        %v419 = vld [vmem:[#allocation8 + $0xb8] sm:$0xff]
        %v420 = vld [vmem:[#allocation8 + $0xc0] sm:$0xff]
        %v421 = vld [vmem:[#allocation8 + $0xc8] sm:$0xff]
        %v422 = vld [vmem:[#allocation8 + $0xd0] sm:$0xff]
        %v423 = vld [vmem:[#allocation8 + $0xd8] sm:$0xff]
        %v424 = vld [vmem:[#allocation8 + $0xe0] sm:$0xff]
        %v425 = vld [vmem:[#allocation8 + $0xe8] sm:$0xff]
        %v426 = vld [vmem:[#allocation8 + $0xf0] sm:$0xff]
        %v427 = vld [vmem:[#allocation8 + $0xf8] sm:$0xff]
        %v428 = vld [vmem:[#allocation8 + $0x100] sm:$0xff]
        %v429 = vld [vmem:[#allocation8 + $0x108] sm:$0xff]
        %v430 = vld [vmem:[#allocation8 + $0x110] sm:$0xff]
        %v431 = vld [vmem:[#allocation8 + $0x118] sm:$0xff]
        %v432 = vld [vmem:[#allocation8 + $0x120] sm:$0xff]
        %v433 = vld [vmem:[#allocation8 + $0x128] sm:$0xff]
        %v434 = vld [vmem:[#allocation8 + $0x130] sm:$0xff]
        %v435 = vld [vmem:[#allocation8 + $0x138] sm:$0xff]
        %v436 = vld [vmem:[#allocation8 + $0x140] sm:$0xff]
        %v437 = vld [vmem:[#allocation8 + $0x148] sm:$0xff]
        %v438 = vld [vmem:[#allocation8 + $0x150] sm:$0xff]
        %v439 = vld [vmem:[#allocation8 + $0x158] sm:$0xff]
        %v440 = vld [vmem:[#allocation8 + $0x160] sm:$0xff]
        %v441 = vld [vmem:[#allocation8 + $0x168] sm:$0xff]
        %v442 = vld [vmem:[#allocation8 + $0x170] sm:$0xff]
        %v443 = vld [vmem:[#allocation8 + $0x178] sm:$0xff]
        %v444 = vld [vmem:[#allocation8 + $0x180] sm:$0xff]
        %v445 = vld [vmem:[#allocation8 + $0x188] sm:$0xff]
        %v446 = vld [vmem:[#allocation8 + $0x190] sm:$0xff]
        %v447 = vld [vmem:[#allocation8 + $0x198] sm:$0xff]
        %v448 = vld [vmem:[#allocation8 + $0x1a0] sm:$0xff]
        %v449 = vld [vmem:[#allocation8 + $0x1a8] sm:$0xff]
        %v450 = vld [vmem:[#allocation8 + $0x1b0] sm:$0xff]
        %v451 = vld [vmem:[#allocation8 + $0x1b8] sm:$0xff]
        %v452 = vld [vmem:[#allocation8 + $0x1c0] sm:$0xff]
        %v453 = vld [vmem:[#allocation8 + $0x1c8] sm:$0xff]
        %v454 = vld [vmem:[#allocation8 + $0x1d0] sm:$0xff]
        %v455 = vld [vmem:[#allocation8 + $0x1d8] sm:$0xff]
        %v456 = vld [vmem:[#allocation8 + $0x1e0] sm:$0xff]
        %v457 = vld [vmem:[#allocation8 + $0x1e8] sm:$0xff]
        %v458 = vld [vmem:[#allocation8 + $0x1f0] sm:$0xff]
        %v459 = vld [vmem:[#allocation8 + $0x1f8] sm:$0xff]
        %v524 = vunpack.c.l.b16 %v396
        %v525 = vunpack.c.h.b16 %v396
        %v526 = vunpack.c.l.b16 %v397
        %v527 = vunpack.c.h.b16 %v397
        %v528 = vunpack.c.l.b16 %v398
        %v529 = vunpack.c.h.b16 %v398
        %v530 = vunpack.c.l.b16 %v399
        %v531 = vunpack.c.h.b16 %v399
        %v532 = vunpack.c.l.b16 %v400
        %v533 = vunpack.c.h.b16 %v400
        %v534 = vunpack.c.l.b16 %v401
        %v535 = vunpack.c.h.b16 %v401
        %v536 = vunpack.c.l.b16 %v402
        %v537 = vunpack.c.h.b16 %v402
        %v538 = vunpack.c.l.b16 %v403
        %v539 = vunpack.c.h.b16 %v403
        %v540 = vunpack.c.l.b16 %v404
        %v541 = vunpack.c.h.b16 %v404
        %v542 = vunpack.c.l.b16 %v405
        %v543 = vunpack.c.h.b16 %v405
        %v544 = vunpack.c.l.b16 %v406
        %v545 = vunpack.c.h.b16 %v406
        %v546 = vunpack.c.l.b16 %v407
        %v547 = vunpack.c.h.b16 %v407
        %v548 = vunpack.c.l.b16 %v408
        %v549 = vunpack.c.h.b16 %v408
        %v550 = vunpack.c.l.b16 %v409
        %v551 = vunpack.c.h.b16 %v409
        %v552 = vunpack.c.l.b16 %v410
        %v553 = vunpack.c.h.b16 %v410
        %v554 = vunpack.c.l.b16 %v411
        %v555 = vunpack.c.h.b16 %v411
        %v556 = vunpack.c.l.b16 %v412
        %v557 = vunpack.c.h.b16 %v412
        %v558 = vunpack.c.l.b16 %v413
        %v559 = vunpack.c.h.b16 %v413
        %v560 = vunpack.c.l.b16 %v414
        %v561 = vunpack.c.h.b16 %v414
        %v562 = vunpack.c.l.b16 %v415
        %v563 = vunpack.c.h.b16 %v415
        %v564 = vunpack.c.l.b16 %v416
        %v565 = vunpack.c.h.b16 %v416
        %v566 = vunpack.c.l.b16 %v417
        %v567 = vunpack.c.h.b16 %v417
        %v568 = vunpack.c.l.b16 %v418
        %v569 = vunpack.c.h.b16 %v418
        %v570 = vunpack.c.l.b16 %v419
        %v571 = vunpack.c.h.b16 %v419
        %v572 = vunpack.c.l.b16 %v420
        %v573 = vunpack.c.h.b16 %v420
        %v574 = vunpack.c.l.b16 %v421
        %v575 = vunpack.c.h.b16 %v421
        %v576 = vunpack.c.l.b16 %v422
        %v577 = vunpack.c.h.b16 %v422
        %v578 = vunpack.c.l.b16 %v423
        %v579 = vunpack.c.h.b16 %v423
        %v580 = vunpack.c.l.b16 %v424
        %v581 = vunpack.c.h.b16 %v424
        %v582 = vunpack.c.l.b16 %v425
        %v583 = vunpack.c.h.b16 %v425
        %v584 = vunpack.c.l.b16 %v426
        %v585 = vunpack.c.h.b16 %v426
        %v586 = vunpack.c.l.b16 %v427
        %v587 = vunpack.c.h.b16 %v427
        %v588 = vunpack.c.l.b16 %v428
        %v589 = vunpack.c.h.b16 %v428
        %v590 = vunpack.c.l.b16 %v429
        %v591 = vunpack.c.h.b16 %v429
        %v592 = vunpack.c.l.b16 %v430
        %v593 = vunpack.c.h.b16 %v430
        %v594 = vunpack.c.l.b16 %v431
        %v595 = vunpack.c.h.b16 %v431
        %v596 = vunpack.c.l.b16 %v432
        %v597 = vunpack.c.h.b16 %v432
        %v598 = vunpack.c.l.b16 %v433
        %v599 = vunpack.c.h.b16 %v433
        %v600 = vunpack.c.l.b16 %v434
        %v601 = vunpack.c.h.b16 %v434
        %v602 = vunpack.c.l.b16 %v435
        %v603 = vunpack.c.h.b16 %v435
        %v604 = vunpack.c.l.b16 %v436
        %v605 = vunpack.c.h.b16 %v436
        %v606 = vunpack.c.l.b16 %v437
        %v607 = vunpack.c.h.b16 %v437
        %v608 = vunpack.c.l.b16 %v438
        %v609 = vunpack.c.h.b16 %v438
        %v610 = vunpack.c.l.b16 %v439
        %v611 = vunpack.c.h.b16 %v439
        %v612 = vunpack.c.l.b16 %v440
        %v613 = vunpack.c.h.b16 %v440
        %v614 = vunpack.c.l.b16 %v441
        %v615 = vunpack.c.h.b16 %v441
        %v616 = vunpack.c.l.b16 %v442
        %v617 = vunpack.c.h.b16 %v442
        %v618 = vunpack.c.l.b16 %v443
        %v619 = vunpack.c.h.b16 %v443
        %v620 = vunpack.c.l.b16 %v444
        %v621 = vunpack.c.h.b16 %v444
        %v622 = vunpack.c.l.b16 %v445
        %v623 = vunpack.c.h.b16 %v445
        %v624 = vunpack.c.l.b16 %v446
        %v625 = vunpack.c.h.b16 %v446
        %v626 = vunpack.c.l.b16 %v447
        %v627 = vunpack.c.h.b16 %v447
        %v628 = vunpack.c.l.b16 %v448
        %v629 = vunpack.c.h.b16 %v448
        %v630 = vunpack.c.l.b16 %v449
        %v631 = vunpack.c.h.b16 %v449
        %v632 = vunpack.c.l.b16 %v450
        %v633 = vunpack.c.h.b16 %v450
        %v634 = vunpack.c.l.b16 %v451
        %v635 = vunpack.c.h.b16 %v451
        %v636 = vunpack.c.l.b16 %v452
        %v637 = vunpack.c.h.b16 %v452
        %v638 = vunpack.c.l.b16 %v453
        %v639 = vunpack.c.h.b16 %v453
        %v640 = vunpack.c.l.b16 %v454
        %v641 = vunpack.c.h.b16 %v454
        %v642 = vunpack.c.l.b16 %v455
        %v643 = vunpack.c.h.b16 %v455
        %v644 = vunpack.c.l.b16 %v456
        %v645 = vunpack.c.h.b16 %v456
        %v646 = vunpack.c.l.b16 %v457
        %v647 = vunpack.c.h.b16 %v457
        %v648 = vunpack.c.l.b16 %v458
        %v649 = vunpack.c.h.b16 %v458
        %v650 = vunpack.c.l.b16 %v459
        %v651 = vunpack.c.h.b16 %v459
        %v652 = vpack.c.b16 %v528, %v524
        %v653 = vpack.c.b16 %v529, %v525
        %v654 = vpack.c.b16 %v530, %v526
        %v655 = vpack.c.b16 %v531, %v527
        %v656 = vpack.c.b16 %v536, %v532
        %v657 = vpack.c.b16 %v537, %v533
        %v658 = vpack.c.b16 %v538, %v534
        %v659 = vpack.c.b16 %v539, %v535
        %v660 = vpack.c.b16 %v544, %v540
        %v661 = vpack.c.b16 %v545, %v541
        %v662 = vpack.c.b16 %v546, %v542
        %v663 = vpack.c.b16 %v547, %v543
        %v664 = vpack.c.b16 %v552, %v548
        %v665 = vpack.c.b16 %v553, %v549
        %v666 = vpack.c.b16 %v554, %v550
        %v667 = vpack.c.b16 %v555, %v551
        %v668 = vpack.c.b16 %v560, %v556
        %v669 = vpack.c.b16 %v561, %v557
        %v670 = vpack.c.b16 %v562, %v558
        %v671 = vpack.c.b16 %v563, %v559
        %v672 = vpack.c.b16 %v568, %v564
        %v673 = vpack.c.b16 %v569, %v565
        %v674 = vpack.c.b16 %v570, %v566
        %v675 = vpack.c.b16 %v571, %v567
        %v676 = vpack.c.b16 %v576, %v572
        %v677 = vpack.c.b16 %v577, %v573
        %v678 = vpack.c.b16 %v578, %v574
        %v679 = vpack.c.b16 %v579, %v575
        %v680 = vpack.c.b16 %v584, %v580
        %v681 = vpack.c.b16 %v585, %v581
        %v682 = vpack.c.b16 %v586, %v582
        %v683 = vpack.c.b16 %v587, %v583
        %v684 = vpack.c.b16 %v592, %v588
        %v685 = vpack.c.b16 %v593, %v589
        %v686 = vpack.c.b16 %v594, %v590
        %v687 = vpack.c.b16 %v595, %v591
        %v688 = vpack.c.b16 %v600, %v596
        %v689 = vpack.c.b16 %v601, %v597
        %v690 = vpack.c.b16 %v602, %v598
        %v691 = vpack.c.b16 %v603, %v599
        %v692 = vpack.c.b16 %v608, %v604
        %v693 = vpack.c.b16 %v609, %v605
        %v694 = vpack.c.b16 %v610, %v606
        %v695 = vpack.c.b16 %v611, %v607
        %v696 = vpack.c.b16 %v616, %v612
        %v697 = vpack.c.b16 %v617, %v613
        %v698 = vpack.c.b16 %v618, %v614
        %v699 = vpack.c.b16 %v619, %v615
        %v700 = vpack.c.b16 %v624, %v620
        %v701 = vpack.c.b16 %v625, %v621
        %v702 = vpack.c.b16 %v626, %v622
        %v703 = vpack.c.b16 %v627, %v623
        %v704 = vpack.c.b16 %v632, %v628
        %v705 = vpack.c.b16 %v633, %v629
        %v706 = vpack.c.b16 %v634, %v630
        %v707 = vpack.c.b16 %v635, %v631
        %v708 = vpack.c.b16 %v640, %v636
        %v709 = vpack.c.b16 %v641, %v637
        %v710 = vpack.c.b16 %v642, %v638
        %v711 = vpack.c.b16 %v643, %v639
        %v712 = vpack.c.b16 %v648, %v644
        %v713 = vpack.c.b16 %v649, %v645
        %v714 = vpack.c.b16 %v650, %v646
        %v715 = vpack.c.b16 %v651, %v647
        %780 = vmatprep.subr.bf16.mxu0 %v653
        %781 = vmatpush1.bf16.msra.mxu0 %v652
        %782 = vmatprep.subr.bf16.mxu0 %v657
        %783 = vmatpush1.bf16.msra.mxu0 %v656
        %784 = vmatprep.subr.bf16.mxu0 %v661
        %785 = vmatpush1.bf16.msra.mxu0 %v660
        %786 = vmatprep.subr.bf16.mxu0 %v665
        %787 = vmatpush1.bf16.msra.mxu0 %v664
        %788 = vmatprep.subr.bf16.mxu0 %v669
        %789 = vmatpush1.bf16.msra.mxu0 %v668
        %790 = vmatprep.subr.bf16.mxu0 %v673
        %791 = vmatpush1.bf16.msra.mxu0 %v672
        %792 = vmatprep.subr.bf16.mxu0 %v677
        %793 = vmatpush1.bf16.msra.mxu0 %v676
        %794 = vmatprep.subr.bf16.mxu0 %v681
        %795 = vmatpush1.bf16.msra.mxu0 %v680
        %796 = vmatprep.subr.bf16.mxu0 %v685
        %797 = vmatpush1.bf16.msra.mxu0 %v684
        %798 = vmatprep.subr.bf16.mxu0 %v689
        %799 = vmatpush1.bf16.msra.mxu0 %v688
        %800 = vmatprep.subr.bf16.mxu0 %v693
        %801 = vmatpush1.bf16.msra.mxu0 %v692
        %802 = vmatprep.subr.bf16.mxu0 %v697
        %803 = vmatpush1.bf16.msra.mxu0 %v696
        %804 = vmatprep.subr.bf16.mxu0 %v701
        %805 = vmatpush1.bf16.msra.mxu0 %v700
        %806 = vmatprep.subr.bf16.mxu0 %v705
        %807 = vmatpush1.bf16.msra.mxu0 %v704
        %808 = vmatprep.subr.bf16.mxu0 %v709
        %809 = vmatpush1.bf16.msra.mxu0 %v708
        %810 = vmatprep.subr.bf16.mxu0 %v713
        %811 = vmatpush1.bf16.msra.mxu0 %v712
        %812 = vmatprep.mubr.bf16.mxu0 %v365
        %813 = vmatmul.mubr.bf16.gmra.mrb[0].mxu0 %v364
        %v814 = vpop.f32.mrb[0].mxu0
        %v815 = vadd.f32 0.0, %v814
        %v816 = vpop.f32.mrb[0].mxu0
        %v817 = vadd.f32 0.0, %v816
        %v818 = vpop.f32.mrb[0].mxu0
        %v819 = vadd.f32 0.0, %v818
        %v820 = vpop.f32.mrb[0].mxu0
        %v821 = vadd.f32 0.0, %v820
        %822 = vmatprep.mubr.bf16.mxu0 %v367
        %823 = vmatmul.mubr.bf16.gmra.mrb[0].mxu0 %v366
        %v824 = vpop.f32.mrb[0].mxu0
        %v825 = vadd.f32 0.0, %v824
        %v826 = vpop.f32.mrb[0].mxu0
        %v827 = vadd.f32 0.0, %v826
        %v828 = vpop.f32.mrb[0].mxu0
        %v829 = vadd.f32 0.0, %v828
        %v830 = vpop.f32.mrb[0].mxu0
        %v831 = vadd.f32 0.0, %v830
        %832 = vmatprep.mubr.bf16.mxu0 %v369
        %833 = vmatmul.mubr.bf16.gmra.mrb[0].mxu0 %v368
        %v834 = vpop.f32.mrb[0].mxu0
        %v835 = vadd.f32 0.0, %v834
        %v836 = vpop.f32.mrb[0].mxu0
        %v837 = vadd.f32 0.0, %v836
        %v838 = vpop.f32.mrb[0].mxu0
        %v839 = vadd.f32 0.0, %v838
        %v840 = vpop.f32.mrb[0].mxu0
        %v841 = vadd.f32 0.0, %v840
        %842 = vmatprep.mubr.bf16.mxu0 %v371
        %843 = vmatmul.mubr.bf16.gmra.mrb[0].mxu0 %v370
        %v844 = vpop.f32.mrb[0].mxu0
        %v845 = vadd.f32 0.0, %v844
        %v846 = vpop.f32.mrb[0].mxu0
        %v847 = vadd.f32 0.0, %v846
        %v848 = vpop.f32.mrb[0].mxu0
        %v849 = vadd.f32 0.0, %v848
        %v850 = vpop.f32.mrb[0].mxu0
        %v851 = vadd.f32 0.0, %v850
        %852 = vmatprep.mubr.bf16.mxu0 %v373
        %853 = vmatmul.mubr.bf16.gmra.mrb[0].mxu0 %v372
        %v854 = vpop.f32.mrb[0].mxu0
        %v855 = vadd.f32 0.0, %v854
        %v856 = vpop.f32.mrb[0].mxu0
        %v857 = vadd.f32 0.0, %v856
        %v858 = vpop.f32.mrb[0].mxu0
        %v859 = vadd.f32 0.0, %v858
        %v860 = vpop.f32.mrb[0].mxu0
        %v861 = vadd.f32 0.0, %v860
        %862 = vmatprep.mubr.bf16.mxu0 %v375
        %863 = vmatmul.mubr.bf16.gmra.mrb[0].mxu0 %v374
        %v864 = vpop.f32.mrb[0].mxu0
        %v865 = vadd.f32 0.0, %v864
        %v866 = vpop.f32.mrb[0].mxu0
        %v867 = vadd.f32 0.0, %v866
        %v868 = vpop.f32.mrb[0].mxu0
        %v869 = vadd.f32 0.0, %v868
        %v870 = vpop.f32.mrb[0].mxu0
        %v871 = vadd.f32 0.0, %v870
        %872 = vmatprep.mubr.bf16.mxu0 %v377
        %873 = vmatmul.mubr.bf16.gmra.mrb[0].mxu0 %v376
        %v874 = vpop.f32.mrb[0].mxu0
        %v875 = vadd.f32 0.0, %v874
        %v876 = vpop.f32.mrb[0].mxu0
        %v877 = vadd.f32 0.0, %v876
        %v878 = vpop.f32.mrb[0].mxu0
        %v879 = vadd.f32 0.0, %v878
        %v880 = vpop.f32.mrb[0].mxu0
        %v881 = vadd.f32 0.0, %v880
        %882 = vmatprep.mubr.bf16.mxu0 %v379
        %883 = vmatmul.mubr.bf16.gmra.mrb[0].mxu0 %v378
        %v884 = vpop.f32.mrb[0].mxu0
        %v885 = vadd.f32 0.0, %v884
        %v886 = vpop.f32.mrb[0].mxu0
        %v887 = vadd.f32 0.0, %v886
        %v888 = vpop.f32.mrb[0].mxu0
        %v889 = vadd.f32 0.0, %v888
        %v890 = vpop.f32.mrb[0].mxu0
        %v891 = vadd.f32 0.0, %v890
        %892 = vmatprep.mubr.bf16.mxu0 %v381
        %893 = vmatmul.mubr.bf16.gmra.mrb[0].mxu0 %v380
        %v894 = vpop.f32.mrb[0].mxu0
        %v895 = vadd.f32 0.0, %v894
        %v896 = vpop.f32.mrb[0].mxu0
        %v897 = vadd.f32 0.0, %v896
        %v898 = vpop.f32.mrb[0].mxu0
        %v899 = vadd.f32 0.0, %v898
        %v900 = vpop.f32.mrb[0].mxu0
        %v901 = vadd.f32 0.0, %v900
        %902 = vmatprep.mubr.bf16.mxu0 %v383
        %903 = vmatmul.mubr.bf16.gmra.mrb[0].mxu0 %v382
        %v904 = vpop.f32.mrb[0].mxu0
        %v905 = vadd.f32 0.0, %v904
        %v906 = vpop.f32.mrb[0].mxu0
        %v907 = vadd.f32 0.0, %v906
        %v908 = vpop.f32.mrb[0].mxu0
        %v909 = vadd.f32 0.0, %v908
        %v910 = vpop.f32.mrb[0].mxu0
        %v911 = vadd.f32 0.0, %v910
        %912 = vmatprep.mubr.bf16.mxu0 %v385
        %913 = vmatmul.mubr.bf16.gmra.mrb[0].mxu0 %v384
        %v914 = vpop.f32.mrb[0].mxu0
        %v915 = vadd.f32 0.0, %v914
        %v916 = vpop.f32.mrb[0].mxu0
        %v917 = vadd.f32 0.0, %v916
        %v918 = vpop.f32.mrb[0].mxu0
        %v919 = vadd.f32 0.0, %v918
        %v920 = vpop.f32.mrb[0].mxu0
        %v921 = vadd.f32 0.0, %v920
        %922 = vmatprep.mubr.bf16.mxu0 %v387
        %923 = vmatmul.mubr.bf16.gmra.mrb[0].mxu0 %v386
        %v924 = vpop.f32.mrb[0].mxu0
        %v925 = vadd.f32 0.0, %v924
        %v926 = vpop.f32.mrb[0].mxu0
        %v927 = vadd.f32 0.0, %v926
        %v928 = vpop.f32.mrb[0].mxu0
        %v929 = vadd.f32 0.0, %v928
        %v930 = vpop.f32.mrb[0].mxu0
        %v931 = vadd.f32 0.0, %v930
        %932 = vmatprep.mubr.bf16.mxu0 %v389
        %933 = vmatmul.mubr.bf16.gmra.mrb[0].mxu0 %v388
        %v934 = vpop.f32.mrb[0].mxu0
        %v935 = vadd.f32 0.0, %v934
        %v936 = vpop.f32.mrb[0].mxu0
        %v937 = vadd.f32 0.0, %v936
        %v938 = vpop.f32.mrb[0].mxu0
        %v939 = vadd.f32 0.0, %v938
        %v940 = vpop.f32.mrb[0].mxu0
        %v941 = vadd.f32 0.0, %v940
        %942 = vmatprep.mubr.bf16.mxu0 %v391
        %943 = vmatmul.mubr.bf16.gmra.mrb[0].mxu0 %v390
        %v944 = vpop.f32.mrb[0].mxu0
        %v945 = vadd.f32 0.0, %v944
        %v946 = vpop.f32.mrb[0].mxu0
        %v947 = vadd.f32 0.0, %v946
        %v948 = vpop.f32.mrb[0].mxu0
        %v949 = vadd.f32 0.0, %v948
        %v950 = vpop.f32.mrb[0].mxu0
        %v951 = vadd.f32 0.0, %v950
        %952 = vmatprep.mubr.bf16.mxu0 %v393
        %953 = vmatmul.mubr.bf16.gmra.mrb[0].mxu0 %v392
        %v954 = vpop.f32.mrb[0].mxu0
        %v955 = vadd.f32 0.0, %v954
        %v956 = vpop.f32.mrb[0].mxu0
        %v957 = vadd.f32 0.0, %v956
        %v958 = vpop.f32.mrb[0].mxu0
        %v959 = vadd.f32 0.0, %v958
        %v960 = vpop.f32.mrb[0].mxu0
        %v961 = vadd.f32 0.0, %v960
        %962 = vmatprep.mubr.bf16.mxu0 %v395
        %963 = vmatmul.mubr.bf16.gmra.mrb[0].mxu0 %v394
        %v964 = vpop.f32.mrb[0].mxu0
        %v965 = vadd.f32 0.0, %v964
        %v966 = vpop.f32.mrb[0].mxu0
        %v967 = vadd.f32 0.0, %v966
        %v968 = vpop.f32.mrb[0].mxu0
        %v969 = vadd.f32 0.0, %v968
        %v970 = vpop.f32.mrb[0].mxu0
        %v971 = vadd.f32 0.0, %v970
        %972 = vdwg.mxu0
        %973 = vmatprep.subr.bf16.mxu0 %v655
        %974 = vmatpush1.bf16.msra.mxu0 %v654
        %975 = vmatprep.subr.bf16.mxu0 %v659
        %976 = vmatpush1.bf16.msra.mxu0 %v658
        %977 = vmatprep.subr.bf16.mxu0 %v663
        %978 = vmatpush1.bf16.msra.mxu0 %v662
        %979 = vmatprep.subr.bf16.mxu0 %v667
        %980 = vmatpush1.bf16.msra.mxu0 %v666
        %981 = vmatprep.subr.bf16.mxu0 %v671
        %982 = vmatpush1.bf16.msra.mxu0 %v670
        %983 = vmatprep.subr.bf16.mxu0 %v675
        %984 = vmatpush1.bf16.msra.mxu0 %v674
        %985 = vmatprep.subr.bf16.mxu0 %v679
        %986 = vmatpush1.bf16.msra.mxu0 %v678
        %987 = vmatprep.subr.bf16.mxu0 %v683
        %988 = vmatpush1.bf16.msra.mxu0 %v682
        %989 = vmatprep.subr.bf16.mxu0 %v687
        %990 = vmatpush1.bf16.msra.mxu0 %v686
        %991 = vmatprep.subr.bf16.mxu0 %v691
        %992 = vmatpush1.bf16.msra.mxu0 %v690
        %993 = vmatprep.subr.bf16.mxu0 %v695
        %994 = vmatpush1.bf16.msra.mxu0 %v694
        %995 = vmatprep.subr.bf16.mxu0 %v699
        %996 = vmatpush1.bf16.msra.mxu0 %v698
        %997 = vmatprep.subr.bf16.mxu0 %v703
        %998 = vmatpush1.bf16.msra.mxu0 %v702
        %999 = vmatprep.subr.bf16.mxu0 %v707
        %1000 = vmatpush1.bf16.msra.mxu0 %v706
        %1001 = vmatprep.subr.bf16.mxu0 %v711
        %1002 = vmatpush1.bf16.msra.mxu0 %v710
        %1003 = vmatprep.subr.bf16.mxu0 %v715
        %1004 = vmatpush1.bf16.msra.mxu0 %v714
        %1005 = vmatprep.mubr.bf16.mxu0 %v365
        %1006 = vmatmul.mubr.bf16.gmra.mrb[0].mxu0 %v364
        %v1007 = vpop.f32.mrb[0].mxu0
        %v1008 = vadd.f32 0.0, %v1007
        %v1009 = vpop.f32.mrb[0].mxu0
        %v1010 = vadd.f32 0.0, %v1009
        %v1011 = vpop.f32.mrb[0].mxu0
        %v1012 = vadd.f32 0.0, %v1011
        %v1013 = vpop.f32.mrb[0].mxu0
        %v1014 = vadd.f32 0.0, %v1013
        %1015 = vmatprep.mubr.bf16.mxu0 %v367
        %1016 = vmatmul.mubr.bf16.gmra.mrb[0].mxu0 %v366
        %v1017 = vpop.f32.mrb[0].mxu0
        %v1018 = vadd.f32 0.0, %v1017
        %v1019 = vpop.f32.mrb[0].mxu0
        %v1020 = vadd.f32 0.0, %v1019
        %v1021 = vpop.f32.mrb[0].mxu0
        %v1022 = vadd.f32 0.0, %v1021
        %v1023 = vpop.f32.mrb[0].mxu0
        %v1024 = vadd.f32 0.0, %v1023
        %1025 = vmatprep.mubr.bf16.mxu0 %v369
        %1026 = vmatmul.mubr.bf16.gmra.mrb[0].mxu0 %v368
        %v1027 = vpop.f32.mrb[0].mxu0
        %v1028 = vadd.f32 0.0, %v1027
        %v1029 = vpop.f32.mrb[0].mxu0
        %v1030 = vadd.f32 0.0, %v1029
        %v1031 = vpop.f32.mrb[0].mxu0
        %v1032 = vadd.f32 0.0, %v1031
        %v1033 = vpop.f32.mrb[0].mxu0
        %v1034 = vadd.f32 0.0, %v1033
        %1035 = vmatprep.mubr.bf16.mxu0 %v371
        %1036 = vmatmul.mubr.bf16.gmra.mrb[0].mxu0 %v370
        %v1037 = vpop.f32.mrb[0].mxu0
        %v1038 = vadd.f32 0.0, %v1037
        %v1039 = vpop.f32.mrb[0].mxu0
        %v1040 = vadd.f32 0.0, %v1039
        %v1041 = vpop.f32.mrb[0].mxu0
        %v1042 = vadd.f32 0.0, %v1041
        %v1043 = vpop.f32.mrb[0].mxu0
        %v1044 = vadd.f32 0.0, %v1043
        %1045 = vmatprep.mubr.bf16.mxu0 %v373
        %1046 = vmatmul.mubr.bf16.gmra.mrb[0].mxu0 %v372
        %v1047 = vpop.f32.mrb[0].mxu0
        %v1048 = vadd.f32 0.0, %v1047
        %v1049 = vpop.f32.mrb[0].mxu0
        %v1050 = vadd.f32 0.0, %v1049
        %v1051 = vpop.f32.mrb[0].mxu0
        %v1052 = vadd.f32 0.0, %v1051
        %v1053 = vpop.f32.mrb[0].mxu0
        %v1054 = vadd.f32 0.0, %v1053
        %1055 = vmatprep.mubr.bf16.mxu0 %v375
        %1056 = vmatmul.mubr.bf16.gmra.mrb[0].mxu0 %v374
        %v1057 = vpop.f32.mrb[0].mxu0
        %v1058 = vadd.f32 0.0, %v1057
        %v1059 = vpop.f32.mrb[0].mxu0
        %v1060 = vadd.f32 0.0, %v1059
        %v1061 = vpop.f32.mrb[0].mxu0
        %v1062 = vadd.f32 0.0, %v1061
        %v1063 = vpop.f32.mrb[0].mxu0
        %v1064 = vadd.f32 0.0, %v1063
        %1065 = vmatprep.mubr.bf16.mxu0 %v377
        %1066 = vmatmul.mubr.bf16.gmra.mrb[0].mxu0 %v376
        %v1067 = vpop.f32.mrb[0].mxu0
        %v1068 = vadd.f32 0.0, %v1067
        %v1069 = vpop.f32.mrb[0].mxu0
        %v1070 = vadd.f32 0.0, %v1069
        %v1071 = vpop.f32.mrb[0].mxu0
        %v1072 = vadd.f32 0.0, %v1071
        %v1073 = vpop.f32.mrb[0].mxu0
        %v1074 = vadd.f32 0.0, %v1073
        %1075 = vmatprep.mubr.bf16.mxu0 %v379
        %1076 = vmatmul.mubr.bf16.gmra.mrb[0].mxu0 %v378
        %v1077 = vpop.f32.mrb[0].mxu0
        %v1078 = vadd.f32 0.0, %v1077
        %v1079 = vpop.f32.mrb[0].mxu0
        %v1080 = vadd.f32 0.0, %v1079
        %v1081 = vpop.f32.mrb[0].mxu0
        %v1082 = vadd.f32 0.0, %v1081
        %v1083 = vpop.f32.mrb[0].mxu0
        %v1084 = vadd.f32 0.0, %v1083
        %1085 = vmatprep.mubr.bf16.mxu0 %v381
        %1086 = vmatmul.mubr.bf16.gmra.mrb[0].mxu0 %v380
        %v1087 = vpop.f32.mrb[0].mxu0
        %v1088 = vadd.f32 0.0, %v1087
        %v1089 = vpop.f32.mrb[0].mxu0
        %v1090 = vadd.f32 0.0, %v1089
        %v1091 = vpop.f32.mrb[0].mxu0
        %v1092 = vadd.f32 0.0, %v1091
        %v1093 = vpop.f32.mrb[0].mxu0
        %v1094 = vadd.f32 0.0, %v1093
        %1095 = vmatprep.mubr.bf16.mxu0 %v383
        %1096 = vmatmul.mubr.bf16.gmra.mrb[0].mxu0 %v382
        %v1097 = vpop.f32.mrb[0].mxu0
        %v1098 = vadd.f32 0.0, %v1097
        %v1099 = vpop.f32.mrb[0].mxu0
        %v1100 = vadd.f32 0.0, %v1099
        %v1101 = vpop.f32.mrb[0].mxu0
        %v1102 = vadd.f32 0.0, %v1101
        %v1103 = vpop.f32.mrb[0].mxu0
        %v1104 = vadd.f32 0.0, %v1103
        %1105 = vmatprep.mubr.bf16.mxu0 %v385
        %1106 = vmatmul.mubr.bf16.gmra.mrb[0].mxu0 %v384
        %v1107 = vpop.f32.mrb[0].mxu0
        %v1108 = vadd.f32 0.0, %v1107
        %v1109 = vpop.f32.mrb[0].mxu0
        %v1110 = vadd.f32 0.0, %v1109
        %v1111 = vpop.f32.mrb[0].mxu0
        %v1112 = vadd.f32 0.0, %v1111
        %v1113 = vpop.f32.mrb[0].mxu0
        %v1114 = vadd.f32 0.0, %v1113
        %1115 = vmatprep.mubr.bf16.mxu0 %v387
        %1116 = vmatmul.mubr.bf16.gmra.mrb[0].mxu0 %v386
        %v1117 = vpop.f32.mrb[0].mxu0
        %v1118 = vadd.f32 0.0, %v1117
        %v1119 = vpop.f32.mrb[0].mxu0
        %v1120 = vadd.f32 0.0, %v1119
        %v1121 = vpop.f32.mrb[0].mxu0
        %v1122 = vadd.f32 0.0, %v1121
        %v1123 = vpop.f32.mrb[0].mxu0
        %v1124 = vadd.f32 0.0, %v1123
        %1125 = vmatprep.mubr.bf16.mxu0 %v389
        %1126 = vmatmul.mubr.bf16.gmra.mrb[0].mxu0 %v388
        %v1127 = vpop.f32.mrb[0].mxu0
        %v1128 = vadd.f32 0.0, %v1127
        %v1129 = vpop.f32.mrb[0].mxu0
        %v1130 = vadd.f32 0.0, %v1129
        %v1131 = vpop.f32.mrb[0].mxu0
        %v1132 = vadd.f32 0.0, %v1131
        %v1133 = vpop.f32.mrb[0].mxu0
        %v1134 = vadd.f32 0.0, %v1133
        %1135 = vmatprep.mubr.bf16.mxu0 %v391
        %1136 = vmatmul.mubr.bf16.gmra.mrb[0].mxu0 %v390
        %v1137 = vpop.f32.mrb[0].mxu0
        %v1138 = vadd.f32 0.0, %v1137
        %v1139 = vpop.f32.mrb[0].mxu0
        %v1140 = vadd.f32 0.0, %v1139
        %v1141 = vpop.f32.mrb[0].mxu0
        %v1142 = vadd.f32 0.0, %v1141
        %v1143 = vpop.f32.mrb[0].mxu0
        %v1144 = vadd.f32 0.0, %v1143
        %1145 = vmatprep.mubr.bf16.mxu0 %v393
        %1146 = vmatmul.mubr.bf16.gmra.mrb[0].mxu0 %v392
        %v1147 = vpop.f32.mrb[0].mxu0
        %v1148 = vadd.f32 0.0, %v1147
        %v1149 = vpop.f32.mrb[0].mxu0
        %v1150 = vadd.f32 0.0, %v1149
        %v1151 = vpop.f32.mrb[0].mxu0
        %v1152 = vadd.f32 0.0, %v1151
        %v1153 = vpop.f32.mrb[0].mxu0
        %v1154 = vadd.f32 0.0, %v1153
        %1155 = vmatprep.mubr.bf16.mxu0 %v395
        %1156 = vmatmul.mubr.bf16.gmra.mrb[0].mxu0 %v394
        %v1157 = vpop.f32.mrb[0].mxu0
        %v1158 = vadd.f32 0.0, %v1157
        %v1159 = vpop.f32.mrb[0].mxu0
        %v1160 = vadd.f32 0.0, %v1159
        %v1161 = vpop.f32.mrb[0].mxu0
        %v1162 = vadd.f32 0.0, %v1161
        %v1163 = vpop.f32.mrb[0].mxu0
        %v1164 = vadd.f32 0.0, %v1163
        %1165 = vdwg.mxu0
        %s1166 = smul.u32 %s22, 256
        %s1167 = sshra.s32 %s1166, 3
        %s1168 = sand.u32 %s1166, 7
        %s1169 = smul.u32 %s1167, 4
        %s1170 = smul.addr %s1169, 8
        %s1171 = scalar_lea.vmem [#allocation2], %s1170
        %1172 = vst [vmem:[%s1171] sm:$0xff] %v815
        %1173 = vst [vmem:[%s1171 + $0x8] sm:$0xff] %v817
        %1174 = vst [vmem:[%s1171 + $0x10] sm:$0xff] %v1008
        %1175 = vst [vmem:[%s1171 + $0x18] sm:$0xff] %v1010
        %1176 = vst [vmem:[%s1171 + $0x20] sm:$0xff] %v819
        %1177 = vst [vmem:[%s1171 + $0x28] sm:$0xff] %v821
        %1178 = vst [vmem:[%s1171 + $0x30] sm:$0xff] %v1012
        %1179 = vst [vmem:[%s1171 + $0x38] sm:$0xff] %v1014
        %1180 = vst [vmem:[%s1171 + $0x40] sm:$0xff] %v825
        %1181 = vst [vmem:[%s1171 + $0x48] sm:$0xff] %v827
        %1182 = vst [vmem:[%s1171 + $0x50] sm:$0xff] %v1018
        %1183 = vst [vmem:[%s1171 + $0x58] sm:$0xff] %v1020
        %1184 = vst [vmem:[%s1171 + $0x60] sm:$0xff] %v829
        %1185 = vst [vmem:[%s1171 + $0x68] sm:$0xff] %v831
        %1186 = vst [vmem:[%s1171 + $0x70] sm:$0xff] %v1022
        %1187 = vst [vmem:[%s1171 + $0x78] sm:$0xff] %v1024
        %1188 = vst [vmem:[%s1171 + $0x80] sm:$0xff] %v835
        %1189 = vst [vmem:[%s1171 + $0x88] sm:$0xff] %v837
        %1190 = vst [vmem:[%s1171 + $0x90] sm:$0xff] %v1028
        %1191 = vst [vmem:[%s1171 + $0x98] sm:$0xff] %v1030
        %1192 = vst [vmem:[%s1171 + $0xa0] sm:$0xff] %v839
        %1193 = vst [vmem:[%s1171 + $0xa8] sm:$0xff] %v841
        %1194 = vst [vmem:[%s1171 + $0xb0] sm:$0xff] %v1032
        %1195 = vst [vmem:[%s1171 + $0xb8] sm:$0xff] %v1034
        %1196 = vst [vmem:[%s1171 + $0xc0] sm:$0xff] %v845
        %1197 = vst [vmem:[%s1171 + $0xc8] sm:$0xff] %v847
        %1198 = vst [vmem:[%s1171 + $0xd0] sm:$0xff] %v1038
        %1199 = vst [vmem:[%s1171 + $0xd8] sm:$0xff] %v1040
        %1200 = vst [vmem:[%s1171 + $0xe0] sm:$0xff] %v849
        %1201 = vst [vmem:[%s1171 + $0xe8] sm:$0xff] %v851
        %1202 = vst [vmem:[%s1171 + $0xf0] sm:$0xff] %v1042
        %1203 = vst [vmem:[%s1171 + $0xf8] sm:$0xff] %v1044
        %1204 = vst [vmem:[%s1171 + $0x100] sm:$0xff] %v855
        %1205 = vst [vmem:[%s1171 + $0x108] sm:$0xff] %v857
        %1206 = vst [vmem:[%s1171 + $0x110] sm:$0xff] %v1048
        %1207 = vst [vmem:[%s1171 + $0x118] sm:$0xff] %v1050
        %1208 = vst [vmem:[%s1171 + $0x120] sm:$0xff] %v859
        %1209 = vst [vmem:[%s1171 + $0x128] sm:$0xff] %v861
        %1210 = vst [vmem:[%s1171 + $0x130] sm:$0xff] %v1052
        %1211 = vst [vmem:[%s1171 + $0x138] sm:$0xff] %v1054
        %1212 = vst [vmem:[%s1171 + $0x140] sm:$0xff] %v865
        %1213 = vst [vmem:[%s1171 + $0x148] sm:$0xff] %v867
        %1214 = vst [vmem:[%s1171 + $0x150] sm:$0xff] %v1058
        %1215 = vst [vmem:[%s1171 + $0x158] sm:$0xff] %v1060
        %1216 = vst [vmem:[%s1171 + $0x160] sm:$0xff] %v869
        %1217 = vst [vmem:[%s1171 + $0x168] sm:$0xff] %v871
        %1218 = vst [vmem:[%s1171 + $0x170] sm:$0xff] %v1062
        %1219 = vst [vmem:[%s1171 + $0x178] sm:$0xff] %v1064
        %1220 = vst [vmem:[%s1171 + $0x180] sm:$0xff] %v875
        %1221 = vst [vmem:[%s1171 + $0x188] sm:$0xff] %v877
        %1222 = vst [vmem:[%s1171 + $0x190] sm:$0xff] %v1068
        %1223 = vst [vmem:[%s1171 + $0x198] sm:$0xff] %v1070
        %1224 = vst [vmem:[%s1171 + $0x1a0] sm:$0xff] %v879
        %1225 = vst [vmem:[%s1171 + $0x1a8] sm:$0xff] %v881
        %1226 = vst [vmem:[%s1171 + $0x1b0] sm:$0xff] %v1072
        %1227 = vst [vmem:[%s1171 + $0x1b8] sm:$0xff] %v1074
        %1228 = vst [vmem:[%s1171 + $0x1c0] sm:$0xff] %v885
        %1229 = vst [vmem:[%s1171 + $0x1c8] sm:$0xff] %v887
        %1230 = vst [vmem:[%s1171 + $0x1d0] sm:$0xff] %v1078
        %1231 = vst [vmem:[%s1171 + $0x1d8] sm:$0xff] %v1080
        %1232 = vst [vmem:[%s1171 + $0x1e0] sm:$0xff] %v889
        %1233 = vst [vmem:[%s1171 + $0x1e8] sm:$0xff] %v891
        %1234 = vst [vmem:[%s1171 + $0x1f0] sm:$0xff] %v1082
        %1235 = vst [vmem:[%s1171 + $0x1f8] sm:$0xff] %v1084
        %1236 = vst [vmem:[%s1171 + $0x200] sm:$0xff] %v895
        %1237 = vst [vmem:[%s1171 + $0x208] sm:$0xff] %v897
        %1238 = vst [vmem:[%s1171 + $0x210] sm:$0xff] %v1088
        %1239 = vst [vmem:[%s1171 + $0x218] sm:$0xff] %v1090
        %1240 = vst [vmem:[%s1171 + $0x220] sm:$0xff] %v899
        %1241 = vst [vmem:[%s1171 + $0x228] sm:$0xff] %v901
        %1242 = vst [vmem:[%s1171 + $0x230] sm:$0xff] %v1092
        %1243 = vst [vmem:[%s1171 + $0x238] sm:$0xff] %v1094
        %1244 = vst [vmem:[%s1171 + $0x240] sm:$0xff] %v905
        %1245 = vst [vmem:[%s1171 + $0x248] sm:$0xff] %v907
        %1246 = vst [vmem:[%s1171 + $0x250] sm:$0xff] %v1098
        %1247 = vst [vmem:[%s1171 + $0x258] sm:$0xff] %v1100
        %1248 = vst [vmem:[%s1171 + $0x260] sm:$0xff] %v909
        %1249 = vst [vmem:[%s1171 + $0x268] sm:$0xff] %v911
        %1250 = vst [vmem:[%s1171 + $0x270] sm:$0xff] %v1102
        %1251 = vst [vmem:[%s1171 + $0x278] sm:$0xff] %v1104
        %1252 = vst [vmem:[%s1171 + $0x280] sm:$0xff] %v915
        %1253 = vst [vmem:[%s1171 + $0x288] sm:$0xff] %v917
        %1254 = vst [vmem:[%s1171 + $0x290] sm:$0xff] %v1108
        %1255 = vst [vmem:[%s1171 + $0x298] sm:$0xff] %v1110
        %1256 = vst [vmem:[%s1171 + $0x2a0] sm:$0xff] %v919
        %1257 = vst [vmem:[%s1171 + $0x2a8] sm:$0xff] %v921
        %1258 = vst [vmem:[%s1171 + $0x2b0] sm:$0xff] %v1112
        %1259 = vst [vmem:[%s1171 + $0x2b8] sm:$0xff] %v1114
        %1260 = vst [vmem:[%s1171 + $0x2c0] sm:$0xff] %v925
        %1261 = vst [vmem:[%s1171 + $0x2c8] sm:$0xff] %v927
        %1262 = vst [vmem:[%s1171 + $0x2d0] sm:$0xff] %v1118
        %1263 = vst [vmem:[%s1171 + $0x2d8] sm:$0xff] %v1120
        %1264 = vst [vmem:[%s1171 + $0x2e0] sm:$0xff] %v929
        %1265 = vst [vmem:[%s1171 + $0x2e8] sm:$0xff] %v931
        %1266 = vst [vmem:[%s1171 + $0x2f0] sm:$0xff] %v1122
        %1267 = vst [vmem:[%s1171 + $0x2f8] sm:$0xff] %v1124
        %1268 = vst [vmem:[%s1171 + $0x300] sm:$0xff] %v935
        %1269 = vst [vmem:[%s1171 + $0x308] sm:$0xff] %v937
        %1270 = vst [vmem:[%s1171 + $0x310] sm:$0xff] %v1128
        %1271 = vst [vmem:[%s1171 + $0x318] sm:$0xff] %v1130
        %1272 = vst [vmem:[%s1171 + $0x320] sm:$0xff] %v939
        %1273 = vst [vmem:[%s1171 + $0x328] sm:$0xff] %v941
        %1274 = vst [vmem:[%s1171 + $0x330] sm:$0xff] %v1132
        %1275 = vst [vmem:[%s1171 + $0x338] sm:$0xff] %v1134
        %1276 = vst [vmem:[%s1171 + $0x340] sm:$0xff] %v945
        %1277 = vst [vmem:[%s1171 + $0x348] sm:$0xff] %v947
        %1278 = vst [vmem:[%s1171 + $0x350] sm:$0xff] %v1138
        %1279 = vst [vmem:[%s1171 + $0x358] sm:$0xff] %v1140
        %1280 = vst [vmem:[%s1171 + $0x360] sm:$0xff] %v949
        %1281 = vst [vmem:[%s1171 + $0x368] sm:$0xff] %v951
        %1282 = vst [vmem:[%s1171 + $0x370] sm:$0xff] %v1142
        %1283 = vst [vmem:[%s1171 + $0x378] sm:$0xff] %v1144
        %1284 = vst [vmem:[%s1171 + $0x380] sm:$0xff] %v955
        %1285 = vst [vmem:[%s1171 + $0x388] sm:$0xff] %v957
        %1286 = vst [vmem:[%s1171 + $0x390] sm:$0xff] %v1148
        %1287 = vst [vmem:[%s1171 + $0x398] sm:$0xff] %v1150
        %1288 = vst [vmem:[%s1171 + $0x3a0] sm:$0xff] %v959
        %1289 = vst [vmem:[%s1171 + $0x3a8] sm:$0xff] %v961
        %1290 = vst [vmem:[%s1171 + $0x3b0] sm:$0xff] %v1152
        %1291 = vst [vmem:[%s1171 + $0x3b8] sm:$0xff] %v1154
        %1292 = vst [vmem:[%s1171 + $0x3c0] sm:$0xff] %v965
        %1293 = vst [vmem:[%s1171 + $0x3c8] sm:$0xff] %v967
        %1294 = vst [vmem:[%s1171 + $0x3d0] sm:$0xff] %v1158
        %1295 = vst [vmem:[%s1171 + $0x3d8] sm:$0xff] %v1160
        %1296 = vst [vmem:[%s1171 + $0x3e0] sm:$0xff] %v969
        %1297 = vst [vmem:[%s1171 + $0x3e8] sm:$0xff] %v971
        %1298 = vst [vmem:[%s1171 + $0x3f0] sm:$0xff] %v1162
        %1299 = vst [vmem:[%s1171 + $0x3f8] sm:$0xff] %v1164
        %v1300 = vld [vmem:[#allocation3] sm:$0xf]
        %v1301 = vadd.f32 %v815, %v819
        %v1302 = vadd.f32 %v1301, %v825
        %v1303 = vadd.f32 %v1302, %v829
        %v1304 = vadd.f32 %v1303, %v835
        %v1305 = vadd.f32 %v1304, %v839
        %v1306 = vadd.f32 %v1305, %v845
        %v1307 = vadd.f32 %v1306, %v849
        %v1308 = vadd.f32 %v1307, %v855
        %v1309 = vadd.f32 %v1308, %v859
        %v1310 = vadd.f32 %v1309, %v865
        %v1311 = vadd.f32 %v1310, %v869
        %v1312 = vadd.f32 %v1311, %v875
        %v1313 = vadd.f32 %v1312, %v879
        %v1314 = vadd.f32 %v1313, %v885
        %v1315 = vadd.f32 %v1314, %v889
        %v1316 = vadd.f32 %v1315, %v895
        %v1317 = vadd.f32 %v1316, %v899
        %v1318 = vadd.f32 %v1317, %v905
        %v1319 = vadd.f32 %v1318, %v909
        %v1320 = vadd.f32 %v1319, %v915
        %v1321 = vadd.f32 %v1320, %v919
        %v1322 = vadd.f32 %v1321, %v925
        %v1323 = vadd.f32 %v1322, %v929
        %v1324 = vadd.f32 %v1323, %v935
        %v1325 = vadd.f32 %v1324, %v939
        %v1326 = vadd.f32 %v1325, %v945
        %v1327 = vadd.f32 %v1326, %v949
        %v1328 = vadd.f32 %v1327, %v955
        %v1329 = vadd.f32 %v1328, %v959
        %v1330 = vadd.f32 %v1329, %v965
        %v1331 = vadd.f32 %v1330, %v969
        %v1332 = vrot.slane %v1331, 4
        %v1333 = vadd.f32 %v1331, %v1332
        %v1334 = vrot.slane %v1333, 2
        %v1335 = vadd.f32 %v1333, %v1334
        %v1336 = vrot.slane %v1335, 1
        %v1337 = vadd.f32 %v1335, %v1336
        %v1338 = vadd.f32 %v817, %v821
        %v1339 = vadd.f32 %v1338, %v827
        %v1340 = vadd.f32 %v1339, %v831
        %v1341 = vadd.f32 %v1340, %v837
        %v1342 = vadd.f32 %v1341, %v841
        %v1343 = vadd.f32 %v1342, %v847
        %v1344 = vadd.f32 %v1343, %v851
        %v1345 = vadd.f32 %v1344, %v857
        %v1346 = vadd.f32 %v1345, %v861
        %v1347 = vadd.f32 %v1346, %v867
        %v1348 = vadd.f32 %v1347, %v871
        %v1349 = vadd.f32 %v1348, %v877
        %v1350 = vadd.f32 %v1349, %v881
        %v1351 = vadd.f32 %v1350, %v887
        %v1352 = vadd.f32 %v1351, %v891
        %v1353 = vadd.f32 %v1352, %v897
        %v1354 = vadd.f32 %v1353, %v901
        %v1355 = vadd.f32 %v1354, %v907
        %v1356 = vadd.f32 %v1355, %v911
        %v1357 = vadd.f32 %v1356, %v917
        %v1358 = vadd.f32 %v1357, %v921
        %v1359 = vadd.f32 %v1358, %v927
        %v1360 = vadd.f32 %v1359, %v931
        %v1361 = vadd.f32 %v1360, %v937
        %v1362 = vadd.f32 %v1361, %v941
        %v1363 = vadd.f32 %v1362, %v947
        %v1364 = vadd.f32 %v1363, %v951
        %v1365 = vadd.f32 %v1364, %v957
        %v1366 = vadd.f32 %v1365, %v961
        %v1367 = vadd.f32 %v1366, %v967
        %v1368 = vadd.f32 %v1367, %v971
        %v1369 = vrot.slane %v1368, 4
        %v1370 = vadd.f32 %v1368, %v1369
        %v1371 = vrot.slane %v1370, 2
        %v1372 = vadd.f32 %v1370, %v1371
        %v1373 = vrot.slane %v1372, 1
        %v1374 = vadd.f32 %v1372, %v1373
        %v1375 = vadd.f32 %v1008, %v1012
        %v1376 = vadd.f32 %v1375, %v1018
        %v1377 = vadd.f32 %v1376, %v1022
        %v1378 = vadd.f32 %v1377, %v1028
        %v1379 = vadd.f32 %v1378, %v1032
        %v1380 = vadd.f32 %v1379, %v1038
        %v1381 = vadd.f32 %v1380, %v1042
        %v1382 = vadd.f32 %v1381, %v1048
        %v1383 = vadd.f32 %v1382, %v1052
        %v1384 = vadd.f32 %v1383, %v1058
        %v1385 = vadd.f32 %v1384, %v1062
        %v1386 = vadd.f32 %v1385, %v1068
        %v1387 = vadd.f32 %v1386, %v1072
        %v1388 = vadd.f32 %v1387, %v1078
        %v1389 = vadd.f32 %v1388, %v1082
        %v1390 = vadd.f32 %v1389, %v1088
        %v1391 = vadd.f32 %v1390, %v1092
        %v1392 = vadd.f32 %v1391, %v1098
        %v1393 = vadd.f32 %v1392, %v1102
        %v1394 = vadd.f32 %v1393, %v1108
        %v1395 = vadd.f32 %v1394, %v1112
        %v1396 = vadd.f32 %v1395, %v1118
        %v1397 = vadd.f32 %v1396, %v1122
        %v1398 = vadd.f32 %v1397, %v1128
        %v1399 = vadd.f32 %v1398, %v1132
        %v1400 = vadd.f32 %v1399, %v1138
        %v1401 = vadd.f32 %v1400, %v1142
        %v1402 = vadd.f32 %v1401, %v1148
        %v1403 = vadd.f32 %v1402, %v1152
        %v1404 = vadd.f32 %v1403, %v1158
        %v1405 = vadd.f32 %v1404, %v1162
        %v1406 = vrot.slane %v1405, 4
        %v1407 = vadd.f32 %v1405, %v1406
        %v1408 = vrot.slane %v1407, 2
        %v1409 = vadd.f32 %v1407, %v1408
        %v1410 = vrot.slane %v1409, 1
        %v1411 = vadd.f32 %v1409, %v1410
        %v1412 = vadd.f32 %v1010, %v1014
        %v1413 = vadd.f32 %v1412, %v1020
        %v1414 = vadd.f32 %v1413, %v1024
        %v1415 = vadd.f32 %v1414, %v1030
        %v1416 = vadd.f32 %v1415, %v1034
        %v1417 = vadd.f32 %v1416, %v1040
        %v1418 = vadd.f32 %v1417, %v1044
        %v1419 = vadd.f32 %v1418, %v1050
        %v1420 = vadd.f32 %v1419, %v1054
        %v1421 = vadd.f32 %v1420, %v1060
        %v1422 = vadd.f32 %v1421, %v1064
        %v1423 = vadd.f32 %v1422, %v1070
        %v1424 = vadd.f32 %v1423, %v1074
        %v1425 = vadd.f32 %v1424, %v1080
        %v1426 = vadd.f32 %v1425, %v1084
        %v1427 = vadd.f32 %v1426, %v1090
        %v1428 = vadd.f32 %v1427, %v1094
        %v1429 = vadd.f32 %v1428, %v1100
        %v1430 = vadd.f32 %v1429, %v1104
        %v1431 = vadd.f32 %v1430, %v1110
        %v1432 = vadd.f32 %v1431, %v1114
        %v1433 = vadd.f32 %v1432, %v1120
        %v1434 = vadd.f32 %v1433, %v1124
        %v1435 = vadd.f32 %v1434, %v1130
        %v1436 = vadd.f32 %v1435, %v1134
        %v1437 = vadd.f32 %v1436, %v1140
        %v1438 = vadd.f32 %v1437, %v1144
        %v1439 = vadd.f32 %v1438, %v1150
        %v1440 = vadd.f32 %v1439, %v1154
        %v1441 = vadd.f32 %v1440, %v1160
        %v1442 = vadd.f32 %v1441, %v1164
        %v1443 = vrot.slane %v1442, 4
        %v1444 = vadd.f32 %v1442, %v1443
        %v1445 = vrot.slane %v1444, 2
        %v1446 = vadd.f32 %v1444, %v1445
        %v1447 = vrot.slane %v1446, 1
        %v1448 = vadd.f32 %v1446, %v1447
        %v1453 = vcombine.low %v1337, %v1374
        %v1454 = vcombine.low %v1411, %v1448
        %v1456 = vunpack.c.l.s4 1966171168
        %v1457 = vunpack.c.0.s8 %v1456
        %v1458 = vlaneseq
        %v1459 = vshrl.u32 %v1458, 7
        %v1460 = vsub.s32 %v1457, %v1459
        %v1461 = vrot.slane %v1453, %v1460
        %v1463 = vunpack.c.l.s4 1966171168
        %v1464 = vunpack.c.0.s8 %v1463
        %v1465 = vlaneseq
        %v1466 = vshrl.u32 %v1465, 7
        %v1467 = vsub.s32 %v1464, %v1466
        %v1468 = vrot.slane %v1454, %v1467
        %v1469 = vcombine.low %v1461, %v1468
        %v1471 = vunpack.c.l.s4 1966171168
        %v1472 = vunpack.c.0.s8 %v1471
        %v1473 = vlaneseq
        %v1474 = vshrl.u32 %v1473, 7
        %v1475 = vsub.s32 %v1472, %v1474
        %v1476 = vrot.slane %v1469, %v1475
        %v1478 = vadd.f32 %v1300, %v1476
        %v1479 = vlaneseq
        %vm1480 = vcmp.ge.s32.totalorder %v1479, 0
        %vm1481 = vcmp.lt.s32.totalorder %v1479, 512
        %vm1482 = vmand %vm1480, %vm1481
        %1483 = vst.msk [vmem:[#allocation3] sm:$0xf] %vm1482, %v1478
        %v1484 = vld [vmem:[#allocation4] sm:$0xf]
        %v1485 = vmul.f32 %v815, %v815
        %v1486 = vmul.f32 %v817, %v817
        %v1487 = vmul.f32 %v1008, %v1008
        %v1488 = vmul.f32 %v1010, %v1010
        %v1489 = vmul.f32 %v819, %v819
        %v1490 = vmul.f32 %v821, %v821
        %v1491 = vmul.f32 %v1012, %v1012
        %v1492 = vmul.f32 %v1014, %v1014
        %v1493 = vmul.f32 %v825, %v825
        %v1494 = vmul.f32 %v827, %v827
        %v1495 = vmul.f32 %v1018, %v1018
        %v1496 = vmul.f32 %v1020, %v1020
        %v1497 = vmul.f32 %v829, %v829
        %v1498 = vmul.f32 %v831, %v831
        %v1499 = vmul.f32 %v1022, %v1022
        %v1500 = vmul.f32 %v1024, %v1024
        %v1501 = vmul.f32 %v835, %v835
        %v1502 = vmul.f32 %v837, %v837
        %v1503 = vmul.f32 %v1028, %v1028
        %v1504 = vmul.f32 %v1030, %v1030
        %v1505 = vmul.f32 %v839, %v839
        %v1506 = vmul.f32 %v841, %v841
        %v1507 = vmul.f32 %v1032, %v1032
        %v1508 = vmul.f32 %v1034, %v1034
        %v1509 = vmul.f32 %v845, %v845
        %v1510 = vmul.f32 %v847, %v847
        %v1511 = vmul.f32 %v1038, %v1038
        %v1512 = vmul.f32 %v1040, %v1040
        %v1513 = vmul.f32 %v849, %v849
        %v1514 = vmul.f32 %v851, %v851
        %v1515 = vmul.f32 %v1042, %v1042
        %v1516 = vmul.f32 %v1044, %v1044
        %v1517 = vmul.f32 %v855, %v855
        %v1518 = vmul.f32 %v857, %v857
        %v1519 = vmul.f32 %v1048, %v1048
        %v1520 = vmul.f32 %v1050, %v1050
        %v1521 = vmul.f32 %v859, %v859
        %v1522 = vmul.f32 %v861, %v861
        %v1523 = vmul.f32 %v1052, %v1052
        %v1524 = vmul.f32 %v1054, %v1054
        %v1525 = vmul.f32 %v865, %v865
        %v1526 = vmul.f32 %v867, %v867
        %v1527 = vmul.f32 %v1058, %v1058
        %v1528 = vmul.f32 %v1060, %v1060
        %v1529 = vmul.f32 %v869, %v869
        %v1530 = vmul.f32 %v871, %v871
        %v1531 = vmul.f32 %v1062, %v1062
        %v1532 = vmul.f32 %v1064, %v1064
        %v1533 = vmul.f32 %v875, %v875
        %v1534 = vmul.f32 %v877, %v877
        %v1535 = vmul.f32 %v1068, %v1068
        %v1536 = vmul.f32 %v1070, %v1070
        %v1537 = vmul.f32 %v879, %v879
        %v1538 = vmul.f32 %v881, %v881
        %v1539 = vmul.f32 %v1072, %v1072
        %v1540 = vmul.f32 %v1074, %v1074
        %v1541 = vmul.f32 %v885, %v885
        %v1542 = vmul.f32 %v887, %v887
        %v1543 = vmul.f32 %v1078, %v1078
        %v1544 = vmul.f32 %v1080, %v1080
        %v1545 = vmul.f32 %v889, %v889
        %v1546 = vmul.f32 %v891, %v891
        %v1547 = vmul.f32 %v1082, %v1082
        %v1548 = vmul.f32 %v1084, %v1084
        %v1549 = vmul.f32 %v895, %v895
        %v1550 = vmul.f32 %v897, %v897
        %v1551 = vmul.f32 %v1088, %v1088
        %v1552 = vmul.f32 %v1090, %v1090
        %v1553 = vmul.f32 %v899, %v899
        %v1554 = vmul.f32 %v901, %v901
        %v1555 = vmul.f32 %v1092, %v1092
        %v1556 = vmul.f32 %v1094, %v1094
        %v1557 = vmul.f32 %v905, %v905
        %v1558 = vmul.f32 %v907, %v907
        %v1559 = vmul.f32 %v1098, %v1098
        %v1560 = vmul.f32 %v1100, %v1100
        %v1561 = vmul.f32 %v909, %v909
        %v1562 = vmul.f32 %v911, %v911
        %v1563 = vmul.f32 %v1102, %v1102
        %v1564 = vmul.f32 %v1104, %v1104
        %v1565 = vmul.f32 %v915, %v915
        %v1566 = vmul.f32 %v917, %v917
        %v1567 = vmul.f32 %v1108, %v1108
        %v1568 = vmul.f32 %v1110, %v1110
        %v1569 = vmul.f32 %v919, %v919
        %v1570 = vmul.f32 %v921, %v921
        %v1571 = vmul.f32 %v1112, %v1112
        %v1572 = vmul.f32 %v1114, %v1114
        %v1573 = vmul.f32 %v925, %v925
        %v1574 = vmul.f32 %v927, %v927
        %v1575 = vmul.f32 %v1118, %v1118
        %v1576 = vmul.f32 %v1120, %v1120
        %v1577 = vmul.f32 %v929, %v929
        %v1578 = vmul.f32 %v931, %v931
        %v1579 = vmul.f32 %v1122, %v1122
        %v1580 = vmul.f32 %v1124, %v1124
        %v1581 = vmul.f32 %v935, %v935
        %v1582 = vmul.f32 %v937, %v937
        %v1583 = vmul.f32 %v1128, %v1128
        %v1584 = vmul.f32 %v1130, %v1130
        %v1585 = vmul.f32 %v939, %v939
        %v1586 = vmul.f32 %v941, %v941
        %v1587 = vmul.f32 %v1132, %v1132
        %v1588 = vmul.f32 %v1134, %v1134
        %v1589 = vmul.f32 %v945, %v945
        %v1590 = vmul.f32 %v947, %v947
        %v1591 = vmul.f32 %v1138, %v1138
        %v1592 = vmul.f32 %v1140, %v1140
        %v1593 = vmul.f32 %v949, %v949
        %v1594 = vmul.f32 %v951, %v951
        %v1595 = vmul.f32 %v1142, %v1142
        %v1596 = vmul.f32 %v1144, %v1144
        %v1597 = vmul.f32 %v955, %v955
        %v1598 = vmul.f32 %v957, %v957
        %v1599 = vmul.f32 %v1148, %v1148
        %v1600 = vmul.f32 %v1150, %v1150
        %v1601 = vmul.f32 %v959, %v959
        %v1602 = vmul.f32 %v961, %v961
        %v1603 = vmul.f32 %v1152, %v1152
        %v1604 = vmul.f32 %v1154, %v1154
        %v1605 = vmul.f32 %v965, %v965
        %v1606 = vmul.f32 %v967, %v967
        %v1607 = vmul.f32 %v1158, %v1158
        %v1608 = vmul.f32 %v1160, %v1160
        %v1609 = vmul.f32 %v969, %v969
        %v1610 = vmul.f32 %v971, %v971
        %v1611 = vmul.f32 %v1162, %v1162
        %v1612 = vmul.f32 %v1164, %v1164
        %v1613 = vadd.f32 %v1485, %v1489
        %v1614 = vadd.f32 %v1613, %v1493
        %v1615 = vadd.f32 %v1614, %v1497
        %v1616 = vadd.f32 %v1615, %v1501
        %v1617 = vadd.f32 %v1616, %v1505
        %v1618 = vadd.f32 %v1617, %v1509
        %v1619 = vadd.f32 %v1618, %v1513
        %v1620 = vadd.f32 %v1619, %v1517
        %v1621 = vadd.f32 %v1620, %v1521
        %v1622 = vadd.f32 %v1621, %v1525
        %v1623 = vadd.f32 %v1622, %v1529
        %v1624 = vadd.f32 %v1623, %v1533
        %v1625 = vadd.f32 %v1624, %v1537
        %v1626 = vadd.f32 %v1625, %v1541
        %v1627 = vadd.f32 %v1626, %v1545
        %v1628 = vadd.f32 %v1627, %v1549
        %v1629 = vadd.f32 %v1628, %v1553
        %v1630 = vadd.f32 %v1629, %v1557
        %v1631 = vadd.f32 %v1630, %v1561
        %v1632 = vadd.f32 %v1631, %v1565
        %v1633 = vadd.f32 %v1632, %v1569
        %v1634 = vadd.f32 %v1633, %v1573
        %v1635 = vadd.f32 %v1634, %v1577
        %v1636 = vadd.f32 %v1635, %v1581
        %v1637 = vadd.f32 %v1636, %v1585
        %v1638 = vadd.f32 %v1637, %v1589
        %v1639 = vadd.f32 %v1638, %v1593
        %v1640 = vadd.f32 %v1639, %v1597
        %v1641 = vadd.f32 %v1640, %v1601
        %v1642 = vadd.f32 %v1641, %v1605
        %v1643 = vadd.f32 %v1642, %v1609
        %v1644 = vrot.slane %v1643, 4
        %v1645 = vadd.f32 %v1643, %v1644
        %v1646 = vrot.slane %v1645, 2
        %v1647 = vadd.f32 %v1645, %v1646
        %v1648 = vrot.slane %v1647, 1
        %v1649 = vadd.f32 %v1647, %v1648
        %v1650 = vadd.f32 %v1486, %v1490
        %v1651 = vadd.f32 %v1650, %v1494
        %v1652 = vadd.f32 %v1651, %v1498
        %v1653 = vadd.f32 %v1652, %v1502
        %v1654 = vadd.f32 %v1653, %v1506
        %v1655 = vadd.f32 %v1654, %v1510
        %v1656 = vadd.f32 %v1655, %v1514
        %v1657 = vadd.f32 %v1656, %v1518
        %v1658 = vadd.f32 %v1657, %v1522
        %v1659 = vadd.f32 %v1658, %v1526
        %v1660 = vadd.f32 %v1659, %v1530
        %v1661 = vadd.f32 %v1660, %v1534
        %v1662 = vadd.f32 %v1661, %v1538
        %v1663 = vadd.f32 %v1662, %v1542
        %v1664 = vadd.f32 %v1663, %v1546
        %v1665 = vadd.f32 %v1664, %v1550
        %v1666 = vadd.f32 %v1665, %v1554
        %v1667 = vadd.f32 %v1666, %v1558
        %v1668 = vadd.f32 %v1667, %v1562
        %v1669 = vadd.f32 %v1668, %v1566
        %v1670 = vadd.f32 %v1669, %v1570
        %v1671 = vadd.f32 %v1670, %v1574
        %v1672 = vadd.f32 %v1671, %v1578
        %v1673 = vadd.f32 %v1672, %v1582
        %v1674 = vadd.f32 %v1673, %v1586
        %v1675 = vadd.f32 %v1674, %v1590
        %v1676 = vadd.f32 %v1675, %v1594
        %v1677 = vadd.f32 %v1676, %v1598
        %v1678 = vadd.f32 %v1677, %v1602
        %v1679 = vadd.f32 %v1678, %v1606
        %v1680 = vadd.f32 %v1679, %v1610
        %v1681 = vrot.slane %v1680, 4
        %v1682 = vadd.f32 %v1680, %v1681
        %v1683 = vrot.slane %v1682, 2
        %v1684 = vadd.f32 %v1682, %v1683
        %v1685 = vrot.slane %v1684, 1
        %v1686 = vadd.f32 %v1684, %v1685
        %v1687 = vadd.f32 %v1487, %v1491
        %v1688 = vadd.f32 %v1687, %v1495
        %v1689 = vadd.f32 %v1688, %v1499
        %v1690 = vadd.f32 %v1689, %v1503
        %v1691 = vadd.f32 %v1690, %v1507
        %v1692 = vadd.f32 %v1691, %v1511
        %v1693 = vadd.f32 %v1692, %v1515
        %v1694 = vadd.f32 %v1693, %v1519
        %v1695 = vadd.f32 %v1694, %v1523
        %v1696 = vadd.f32 %v1695, %v1527
        %v1697 = vadd.f32 %v1696, %v1531
        %v1698 = vadd.f32 %v1697, %v1535
        %v1699 = vadd.f32 %v1698, %v1539
        %v1700 = vadd.f32 %v1699, %v1543
        %v1701 = vadd.f32 %v1700, %v1547
        %v1702 = vadd.f32 %v1701, %v1551
        %v1703 = vadd.f32 %v1702, %v1555
        %v1704 = vadd.f32 %v1703, %v1559
        %v1705 = vadd.f32 %v1704, %v1563
        %v1706 = vadd.f32 %v1705, %v1567
        %v1707 = vadd.f32 %v1706, %v1571
        %v1708 = vadd.f32 %v1707, %v1575
        %v1709 = vadd.f32 %v1708, %v1579
        %v1710 = vadd.f32 %v1709, %v1583
        %v1711 = vadd.f32 %v1710, %v1587
        %v1712 = vadd.f32 %v1711, %v1591
        %v1713 = vadd.f32 %v1712, %v1595
        %v1714 = vadd.f32 %v1713, %v1599
        %v1715 = vadd.f32 %v1714, %v1603
        %v1716 = vadd.f32 %v1715, %v1607
        %v1717 = vadd.f32 %v1716, %v1611
        %v1718 = vrot.slane %v1717, 4
        %v1719 = vadd.f32 %v1717, %v1718
        %v1720 = vrot.slane %v1719, 2
        %v1721 = vadd.f32 %v1719, %v1720
        %v1722 = vrot.slane %v1721, 1
        %v1723 = vadd.f32 %v1721, %v1722
        %v1724 = vadd.f32 %v1488, %v1492
        %v1725 = vadd.f32 %v1724, %v1496
        %v1726 = vadd.f32 %v1725, %v1500
        %v1727 = vadd.f32 %v1726, %v1504
        %v1728 = vadd.f32 %v1727, %v1508
        %v1729 = vadd.f32 %v1728, %v1512
        %v1730 = vadd.f32 %v1729, %v1516
        %v1731 = vadd.f32 %v1730, %v1520
        %v1732 = vadd.f32 %v1731, %v1524
        %v1733 = vadd.f32 %v1732, %v1528
        %v1734 = vadd.f32 %v1733, %v1532
        %v1735 = vadd.f32 %v1734, %v1536
        %v1736 = vadd.f32 %v1735, %v1540
        %v1737 = vadd.f32 %v1736, %v1544
        %v1738 = vadd.f32 %v1737, %v1548
        %v1739 = vadd.f32 %v1738, %v1552
        %v1740 = vadd.f32 %v1739, %v1556
        %v1741 = vadd.f32 %v1740, %v1560
        %v1742 = vadd.f32 %v1741, %v1564
        %v1743 = vadd.f32 %v1742, %v1568
        %v1744 = vadd.f32 %v1743, %v1572
        %v1745 = vadd.f32 %v1744, %v1576
        %v1746 = vadd.f32 %v1745, %v1580
        %v1747 = vadd.f32 %v1746, %v1584
        %v1748 = vadd.f32 %v1747, %v1588
        %v1749 = vadd.f32 %v1748, %v1592
        %v1750 = vadd.f32 %v1749, %v1596
        %v1751 = vadd.f32 %v1750, %v1600
        %v1752 = vadd.f32 %v1751, %v1604
        %v1753 = vadd.f32 %v1752, %v1608
        %v1754 = vadd.f32 %v1753, %v1612
        %v1755 = vrot.slane %v1754, 4
        %v1756 = vadd.f32 %v1754, %v1755
        %v1757 = vrot.slane %v1756, 2
        %v1758 = vadd.f32 %v1756, %v1757
        %v1759 = vrot.slane %v1758, 1
        %v1760 = vadd.f32 %v1758, %v1759
        %v1765 = vcombine.low %v1649, %v1686
        %v1766 = vcombine.low %v1723, %v1760
        %v1768 = vunpack.c.l.s4 1966171168
        %v1769 = vunpack.c.0.s8 %v1768
        %v1770 = vlaneseq
        %v1771 = vshrl.u32 %v1770, 7
        %v1772 = vsub.s32 %v1769, %v1771
        %v1773 = vrot.slane %v1765, %v1772
        %v1775 = vunpack.c.l.s4 1966171168
        %v1776 = vunpack.c.0.s8 %v1775
        %v1777 = vlaneseq
        %v1778 = vshrl.u32 %v1777, 7
        %v1779 = vsub.s32 %v1776, %v1778
        %v1780 = vrot.slane %v1766, %v1779
        %v1781 = vcombine.low %v1773, %v1780
        %v1783 = vunpack.c.l.s4 1966171168
        %v1784 = vunpack.c.0.s8 %v1783
        %v1785 = vlaneseq
        %v1786 = vshrl.u32 %v1785, 7
        %v1787 = vsub.s32 %v1784, %v1786
        %v1788 = vrot.slane %v1781, %v1787
        %v1790 = vadd.f32 %v1484, %v1788
        %1791 = vst.msk [vmem:[#allocation4] sm:$0xf] %vm1482, %v1790
        %p1792 = scmp.eq.s32.totalorder %s22, 1
        // Predicated region
        $region61: #{tpu_custom_call.1} parent=43 // pred_check
          %p1793 = pneg %p1792
        $region62: #{tpu_custom_call.1} parent=43 // pred_check_branch
          %1795 = sbr.rel (%p1793) target = $region64
        $region63: #{tpu_custom_call.1} parent=43 // pred_region
          %v1796 = vld [vmem:[#allocation3] sm:$0xf]
          %v1797 = vmul.f32 %v1796, 0.001953125
          %v1798 = vld [vmem:[#allocation4] sm:$0xf]
          %v1799 = vmul.f32 %v1798, 0.001953125
          %v1800 = vmul.f32 %v1797, %v1797
          %v1801 = vsub.f32 %v1799, %v1800
          %v1802 = vmax.f32 %v1801, 0.0
          %v1803 = vld [vmem:[%s2] sm:$0xf]
          %v1804 = vadd.f32 %v1802, 1e-05
          %v1805 = vrsqrt.pop %v1804
          %v1806 = vmul.f32 %v1803, %v1805
          %v1807 = vld [vmem:[%s3] sm:$0xf]
          %v1808 = vmul.f32 %v1797, %v1806
          %v1809 = vsub.f32 %v1807, %v1808
          %v1810 = vld [vmem:[#allocation2] sm:$0xff]
          %v1811 = vld [vmem:[#allocation2 + $0x8] sm:$0xff]
          %v1812 = vld [vmem:[#allocation2 + $0x10] sm:$0xff]
          %v1813 = vld [vmem:[#allocation2 + $0x18] sm:$0xff]
          %v1814 = vld [vmem:[#allocation2 + $0x20] sm:$0xff]
          %v1815 = vld [vmem:[#allocation2 + $0x28] sm:$0xff]
          %v1816 = vld [vmem:[#allocation2 + $0x30] sm:$0xff]
          %v1817 = vld [vmem:[#allocation2 + $0x38] sm:$0xff]
          %v1818 = vld [vmem:[#allocation2 + $0x40] sm:$0xff]
          %v1819 = vld [vmem:[#allocation2 + $0x48] sm:$0xff]
          %v1820 = vld [vmem:[#allocation2 + $0x50] sm:$0xff]
          %v1821 = vld [vmem:[#allocation2 + $0x58] sm:$0xff]
          %v1822 = vld [vmem:[#allocation2 + $0x60] sm:$0xff]
          %v1823 = vld [vmem:[#allocation2 + $0x68] sm:$0xff]
          %v1824 = vld [vmem:[#allocation2 + $0x70] sm:$0xff]
          %v1825 = vld [vmem:[#allocation2 + $0x78] sm:$0xff]
          %v1826 = vld [vmem:[#allocation2 + $0x80] sm:$0xff]
          %v1827 = vld [vmem:[#allocation2 + $0x88] sm:$0xff]
          %v1828 = vld [vmem:[#allocation2 + $0x90] sm:$0xff]
          %v1829 = vld [vmem:[#allocation2 + $0x98] sm:$0xff]
          %v1830 = vld [vmem:[#allocation2 + $0xa0] sm:$0xff]
          %v1831 = vld [vmem:[#allocation2 + $0xa8] sm:$0xff]
          %v1832 = vld [vmem:[#allocation2 + $0xb0] sm:$0xff]
          %v1833 = vld [vmem:[#allocation2 + $0xb8] sm:$0xff]
          %v1834 = vld [vmem:[#allocation2 + $0xc0] sm:$0xff]
          %v1835 = vld [vmem:[#allocation2 + $0xc8] sm:$0xff]
          %v1836 = vld [vmem:[#allocation2 + $0xd0] sm:$0xff]
          %v1837 = vld [vmem:[#allocation2 + $0xd8] sm:$0xff]
          %v1838 = vld [vmem:[#allocation2 + $0xe0] sm:$0xff]
          %v1839 = vld [vmem:[#allocation2 + $0xe8] sm:$0xff]
          %v1840 = vld [vmem:[#allocation2 + $0xf0] sm:$0xff]
          %v1841 = vld [vmem:[#allocation2 + $0xf8] sm:$0xff]
          %v1842 = vld [vmem:[#allocation2 + $0x100] sm:$0xff]
          %v1843 = vld [vmem:[#allocation2 + $0x108] sm:$0xff]
          %v1844 = vld [vmem:[#allocation2 + $0x110] sm:$0xff]
          %v1845 = vld [vmem:[#allocation2 + $0x118] sm:$0xff]
          %v1846 = vld [vmem:[#allocation2 + $0x120] sm:$0xff]
          %v1847 = vld [vmem:[#allocation2 + $0x128] sm:$0xff]
          %v1848 = vld [vmem:[#allocation2 + $0x130] sm:$0xff]
          %v1849 = vld [vmem:[#allocation2 + $0x138] sm:$0xff]
          %v1850 = vld [vmem:[#allocation2 + $0x140] sm:$0xff]
          %v1851 = vld [vmem:[#allocation2 + $0x148] sm:$0xff]
          %v1852 = vld [vmem:[#allocation2 + $0x150] sm:$0xff]
          %v1853 = vld [vmem:[#allocation2 + $0x158] sm:$0xff]
          %v1854 = vld [vmem:[#allocation2 + $0x160] sm:$0xff]
          %v1855 = vld [vmem:[#allocation2 + $0x168] sm:$0xff]
          %v1856 = vld [vmem:[#allocation2 + $0x170] sm:$0xff]
          %v1857 = vld [vmem:[#allocation2 + $0x178] sm:$0xff]
          %v1858 = vld [vmem:[#allocation2 + $0x180] sm:$0xff]
          %v1859 = vld [vmem:[#allocation2 + $0x188] sm:$0xff]
          %v1860 = vld [vmem:[#allocation2 + $0x190] sm:$0xff]
          %v1861 = vld [vmem:[#allocation2 + $0x198] sm:$0xff]
          %v1862 = vld [vmem:[#allocation2 + $0x1a0] sm:$0xff]
          %v1863 = vld [vmem:[#allocation2 + $0x1a8] sm:$0xff]
          %v1864 = vld [vmem:[#allocation2 + $0x1b0] sm:$0xff]
          %v1865 = vld [vmem:[#allocation2 + $0x1b8] sm:$0xff]
          %v1866 = vld [vmem:[#allocation2 + $0x1c0] sm:$0xff]
          %v1867 = vld [vmem:[#allocation2 + $0x1c8] sm:$0xff]
          %v1868 = vld [vmem:[#allocation2 + $0x1d0] sm:$0xff]
          %v1869 = vld [vmem:[#allocation2 + $0x1d8] sm:$0xff]
          %v1870 = vld [vmem:[#allocation2 + $0x1e0] sm:$0xff]
          %v1871 = vld [vmem:[#allocation2 + $0x1e8] sm:$0xff]
          %v1872 = vld [vmem:[#allocation2 + $0x1f0] sm:$0xff]
          %v1873 = vld [vmem:[#allocation2 + $0x1f8] sm:$0xff]
          %v1874 = vld [vmem:[#allocation2 + $0x200] sm:$0xff]
          %v1875 = vld [vmem:[#allocation2 + $0x208] sm:$0xff]
          %v1876 = vld [vmem:[#allocation2 + $0x210] sm:$0xff]
          %v1877 = vld [vmem:[#allocation2 + $0x218] sm:$0xff]
          %v1878 = vld [vmem:[#allocation2 + $0x220] sm:$0xff]
          %v1879 = vld [vmem:[#allocation2 + $0x228] sm:$0xff]
          %v1880 = vld [vmem:[#allocation2 + $0x230] sm:$0xff]
          %v1881 = vld [vmem:[#allocation2 + $0x238] sm:$0xff]
          %v1882 = vld [vmem:[#allocation2 + $0x240] sm:$0xff]
          %v1883 = vld [vmem:[#allocation2 + $0x248] sm:$0xff]
          %v1884 = vld [vmem:[#allocation2 + $0x250] sm:$0xff]
          %v1885 = vld [vmem:[#allocation2 + $0x258] sm:$0xff]
          %v1886 = vld [vmem:[#allocation2 + $0x260] sm:$0xff]
          %v1887 = vld [vmem:[#allocation2 + $0x268] sm:$0xff]
          %v1888 = vld [vmem:[#allocation2 + $0x270] sm:$0xff]
          %v1889 = vld [vmem:[#allocation2 + $0x278] sm:$0xff]
          %v1890 = vld [vmem:[#allocation2 + $0x280] sm:$0xff]
          %v1891 = vld [vmem:[#allocation2 + $0x288] sm:$0xff]
          %v1892 = vld [vmem:[#allocation2 + $0x290] sm:$0xff]
          %v1893 = vld [vmem:[#allocation2 + $0x298] sm:$0xff]
          %v1894 = vld [vmem:[#allocation2 + $0x2a0] sm:$0xff]
          %v1895 = vld [vmem:[#allocation2 + $0x2a8] sm:$0xff]
          %v1896 = vld [vmem:[#allocation2 + $0x2b0] sm:$0xff]
          %v1897 = vld [vmem:[#allocation2 + $0x2b8] sm:$0xff]
          %v1898 = vld [vmem:[#allocation2 + $0x2c0] sm:$0xff]
          %v1899 = vld [vmem:[#allocation2 + $0x2c8] sm:$0xff]
          %v1900 = vld [vmem:[#allocation2 + $0x2d0] sm:$0xff]
          %v1901 = vld [vmem:[#allocation2 + $0x2d8] sm:$0xff]
          %v1902 = vld [vmem:[#allocation2 + $0x2e0] sm:$0xff]
          %v1903 = vld [vmem:[#allocation2 + $0x2e8] sm:$0xff]
          %v1904 = vld [vmem:[#allocation2 + $0x2f0] sm:$0xff]
          %v1905 = vld [vmem:[#allocation2 + $0x2f8] sm:$0xff]
          %v1906 = vld [vmem:[#allocation2 + $0x300] sm:$0xff]
          %v1907 = vld [vmem:[#allocation2 + $0x308] sm:$0xff]
          %v1908 = vld [vmem:[#allocation2 + $0x310] sm:$0xff]
          %v1909 = vld [vmem:[#allocation2 + $0x318] sm:$0xff]
          %v1910 = vld [vmem:[#allocation2 + $0x320] sm:$0xff]
          %v1911 = vld [vmem:[#allocation2 + $0x328] sm:$0xff]
          %v1912 = vld [vmem:[#allocation2 + $0x330] sm:$0xff]
          %v1913 = vld [vmem:[#allocation2 + $0x338] sm:$0xff]
          %v1914 = vld [vmem:[#allocation2 + $0x340] sm:$0xff]
          %v1915 = vld [vmem:[#allocation2 + $0x348] sm:$0xff]
          %v1916 = vld [vmem:[#allocation2 + $0x350] sm:$0xff]
          %v1917 = vld [vmem:[#allocation2 + $0x358] sm:$0xff]
          %v1918 = vld [vmem:[#allocation2 + $0x360] sm:$0xff]
          %v1919 = vld [vmem:[#allocation2 + $0x368] sm:$0xff]
          %v1920 = vld [vmem:[#allocation2 + $0x370] sm:$0xff]
          %v1921 = vld [vmem:[#allocation2 + $0x378] sm:$0xff]
          %v1922 = vld [vmem:[#allocation2 + $0x380] sm:$0xff]
          %v1923 = vld [vmem:[#allocation2 + $0x388] sm:$0xff]
          %v1924 = vld [vmem:[#allocation2 + $0x390] sm:$0xff]
          %v1925 = vld [vmem:[#allocation2 + $0x398] sm:$0xff]
          %v1926 = vld [vmem:[#allocation2 + $0x3a0] sm:$0xff]
          %v1927 = vld [vmem:[#allocation2 + $0x3a8] sm:$0xff]
          %v1928 = vld [vmem:[#allocation2 + $0x3b0] sm:$0xff]
          %v1929 = vld [vmem:[#allocation2 + $0x3b8] sm:$0xff]
          %v1930 = vld [vmem:[#allocation2 + $0x3c0] sm:$0xff]
          %v1931 = vld [vmem:[#allocation2 + $0x3c8] sm:$0xff]
          %v1932 = vld [vmem:[#allocation2 + $0x3d0] sm:$0xff]
          %v1933 = vld [vmem:[#allocation2 + $0x3d8] sm:$0xff]
          %v1934 = vld [vmem:[#allocation2 + $0x3e0] sm:$0xff]
          %v1935 = vld [vmem:[#allocation2 + $0x3e8] sm:$0xff]
          %v1936 = vld [vmem:[#allocation2 + $0x3f0] sm:$0xff]
          %v1937 = vld [vmem:[#allocation2 + $0x3f8] sm:$0xff]
          %v1938 = vld [vmem:[#allocation2 + $0x400] sm:$0xff]
          %v1939 = vld [vmem:[#allocation2 + $0x408] sm:$0xff]
          %v1940 = vld [vmem:[#allocation2 + $0x410] sm:$0xff]
          %v1941 = vld [vmem:[#allocation2 + $0x418] sm:$0xff]
          %v1942 = vld [vmem:[#allocation2 + $0x420] sm:$0xff]
          %v1943 = vld [vmem:[#allocation2 + $0x428] sm:$0xff]
          %v1944 = vld [vmem:[#allocation2 + $0x430] sm:$0xff]
          %v1945 = vld [vmem:[#allocation2 + $0x438] sm:$0xff]
          %v1946 = vld [vmem:[#allocation2 + $0x440] sm:$0xff]
          %v1947 = vld [vmem:[#allocation2 + $0x448] sm:$0xff]
          %v1948 = vld [vmem:[#allocation2 + $0x450] sm:$0xff]
          %v1949 = vld [vmem:[#allocation2 + $0x458] sm:$0xff]
          %v1950 = vld [vmem:[#allocation2 + $0x460] sm:$0xff]
          %v1951 = vld [vmem:[#allocation2 + $0x468] sm:$0xff]
          %v1952 = vld [vmem:[#allocation2 + $0x470] sm:$0xff]
          %v1953 = vld [vmem:[#allocation2 + $0x478] sm:$0xff]
          %v1954 = vld [vmem:[#allocation2 + $0x480] sm:$0xff]
          %v1955 = vld [vmem:[#allocation2 + $0x488] sm:$0xff]
          %v1956 = vld [vmem:[#allocation2 + $0x490] sm:$0xff]
          %v1957 = vld [vmem:[#allocation2 + $0x498] sm:$0xff]
          %v1958 = vld [vmem:[#allocation2 + $0x4a0] sm:$0xff]
          %v1959 = vld [vmem:[#allocation2 + $0x4a8] sm:$0xff]
          %v1960 = vld [vmem:[#allocation2 + $0x4b0] sm:$0xff]
          %v1961 = vld [vmem:[#allocation2 + $0x4b8] sm:$0xff]
          %v1962 = vld [vmem:[#allocation2 + $0x4c0] sm:$0xff]
          %v1963 = vld [vmem:[#allocation2 + $0x4c8] sm:$0xff]
          %v1964 = vld [vmem:[#allocation2 + $0x4d0] sm:$0xff]
          %v1965 = vld [vmem:[#allocation2 + $0x4d8] sm:$0xff]
          %v1966 = vld [vmem:[#allocation2 + $0x4e0] sm:$0xff]
          %v1967 = vld [vmem:[#allocation2 + $0x4e8] sm:$0xff]
          %v1968 = vld [vmem:[#allocation2 + $0x4f0] sm:$0xff]
          %v1969 = vld [vmem:[#allocation2 + $0x4f8] sm:$0xff]
          %v1970 = vld [vmem:[#allocation2 + $0x500] sm:$0xff]
          %v1971 = vld [vmem:[#allocation2 + $0x508] sm:$0xff]
          %v1972 = vld [vmem:[#allocation2 + $0x510] sm:$0xff]
          %v1973 = vld [vmem:[#allocation2 + $0x518] sm:$0xff]
          %v1974 = vld [vmem:[#allocation2 + $0x520] sm:$0xff]
          %v1975 = vld [vmem:[#allocation2 + $0x528] sm:$0xff]
          %v1976 = vld [vmem:[#allocation2 + $0x530] sm:$0xff]
          %v1977 = vld [vmem:[#allocation2 + $0x538] sm:$0xff]
          %v1978 = vld [vmem:[#allocation2 + $0x540] sm:$0xff]
          %v1979 = vld [vmem:[#allocation2 + $0x548] sm:$0xff]
          %v1980 = vld [vmem:[#allocation2 + $0x550] sm:$0xff]
          %v1981 = vld [vmem:[#allocation2 + $0x558] sm:$0xff]
          %v1982 = vld [vmem:[#allocation2 + $0x560] sm:$0xff]
          %v1983 = vld [vmem:[#allocation2 + $0x568] sm:$0xff]
          %v1984 = vld [vmem:[#allocation2 + $0x570] sm:$0xff]
          %v1985 = vld [vmem:[#allocation2 + $0x578] sm:$0xff]
          %v1986 = vld [vmem:[#allocation2 + $0x580] sm:$0xff]
          %v1987 = vld [vmem:[#allocation2 + $0x588] sm:$0xff]
          %v1988 = vld [vmem:[#allocation2 + $0x590] sm:$0xff]
          %v1989 = vld [vmem:[#allocation2 + $0x598] sm:$0xff]
          %v1990 = vld [vmem:[#allocation2 + $0x5a0] sm:$0xff]
          %v1991 = vld [vmem:[#allocation2 + $0x5a8] sm:$0xff]
          %v1992 = vld [vmem:[#allocation2 + $0x5b0] sm:$0xff]
          %v1993 = vld [vmem:[#allocation2 + $0x5b8] sm:$0xff]
          %v1994 = vld [vmem:[#allocation2 + $0x5c0] sm:$0xff]
          %v1995 = vld [vmem:[#allocation2 + $0x5c8] sm:$0xff]
          %v1996 = vld [vmem:[#allocation2 + $0x5d0] sm:$0xff]
          %v1997 = vld [vmem:[#allocation2 + $0x5d8] sm:$0xff]
          %v1998 = vld [vmem:[#allocation2 + $0x5e0] sm:$0xff]
          %v1999 = vld [vmem:[#allocation2 + $0x5e8] sm:$0xff]
          %v2000 = vld [vmem:[#allocation2 + $0x5f0] sm:$0xff]
          %v2001 = vld [vmem:[#allocation2 + $0x5f8] sm:$0xff]
          %v2002 = vld [vmem:[#allocation2 + $0x600] sm:$0xff]
          %v2003 = vld [vmem:[#allocation2 + $0x608] sm:$0xff]
          %v2004 = vld [vmem:[#allocation2 + $0x610] sm:$0xff]
          %v2005 = vld [vmem:[#allocation2 + $0x618] sm:$0xff]
          %v2006 = vld [vmem:[#allocation2 + $0x620] sm:$0xff]
          %v2007 = vld [vmem:[#allocation2 + $0x628] sm:$0xff]
          %v2008 = vld [vmem:[#allocation2 + $0x630] sm:$0xff]
          %v2009 = vld [vmem:[#allocation2 + $0x638] sm:$0xff]
          %v2010 = vld [vmem:[#allocation2 + $0x640] sm:$0xff]
          %v2011 = vld [vmem:[#allocation2 + $0x648] sm:$0xff]
          %v2012 = vld [vmem:[#allocation2 + $0x650] sm:$0xff]
          %v2013 = vld [vmem:[#allocation2 + $0x658] sm:$0xff]
          %v2014 = vld [vmem:[#allocation2 + $0x660] sm:$0xff]
          %v2015 = vld [vmem:[#allocation2 + $0x668] sm:$0xff]
          %v2016 = vld [vmem:[#allocation2 + $0x670] sm:$0xff]
          %v2017 = vld [vmem:[#allocation2 + $0x678] sm:$0xff]
          %v2018 = vld [vmem:[#allocation2 + $0x680] sm:$0xff]
          %v2019 = vld [vmem:[#allocation2 + $0x688] sm:$0xff]
          %v2020 = vld [vmem:[#allocation2 + $0x690] sm:$0xff]
          %v2021 = vld [vmem:[#allocation2 + $0x698] sm:$0xff]
          %v2022 = vld [vmem:[#allocation2 + $0x6a0] sm:$0xff]
          %v2023 = vld [vmem:[#allocation2 + $0x6a8] sm:$0xff]
          %v2024 = vld [vmem:[#allocation2 + $0x6b0] sm:$0xff]
          %v2025 = vld [vmem:[#allocation2 + $0x6b8] sm:$0xff]
          %v2026 = vld [vmem:[#allocation2 + $0x6c0] sm:$0xff]
          %v2027 = vld [vmem:[#allocation2 + $0x6c8] sm:$0xff]
          %v2028 = vld [vmem:[#allocation2 + $0x6d0] sm:$0xff]
          %v2029 = vld [vmem:[#allocation2 + $0x6d8] sm:$0xff]
          %v2030 = vld [vmem:[#allocation2 + $0x6e0] sm:$0xff]
          %v2031 = vld [vmem:[#allocation2 + $0x6e8] sm:$0xff]
          %v2032 = vld [vmem:[#allocation2 + $0x6f0] sm:$0xff]
          %v2033 = vld [vmem:[#allocation2 + $0x6f8] sm:$0xff]
          %v2034 = vld [vmem:[#allocation2 + $0x700] sm:$0xff]
          %v2035 = vld [vmem:[#allocation2 + $0x708] sm:$0xff]
          %v2036 = vld [vmem:[#allocation2 + $0x710] sm:$0xff]
          %v2037 = vld [vmem:[#allocation2 + $0x718] sm:$0xff]
          %v2038 = vld [vmem:[#allocation2 + $0x720] sm:$0xff]
          %v2039 = vld [vmem:[#allocation2 + $0x728] sm:$0xff]
          %v2040 = vld [vmem:[#allocation2 + $0x730] sm:$0xff]
          %v2041 = vld [vmem:[#allocation2 + $0x738] sm:$0xff]
          %v2042 = vld [vmem:[#allocation2 + $0x740] sm:$0xff]
          %v2043 = vld [vmem:[#allocation2 + $0x748] sm:$0xff]
          %v2044 = vld [vmem:[#allocation2 + $0x750] sm:$0xff]
          %v2045 = vld [vmem:[#allocation2 + $0x758] sm:$0xff]
          %v2046 = vld [vmem:[#allocation2 + $0x760] sm:$0xff]
          %v2047 = vld [vmem:[#allocation2 + $0x768] sm:$0xff]
          %v2048 = vld [vmem:[#allocation2 + $0x770] sm:$0xff]
          %v2049 = vld [vmem:[#allocation2 + $0x778] sm:$0xff]
          %v2050 = vld [vmem:[#allocation2 + $0x780] sm:$0xff]
          %v2051 = vld [vmem:[#allocation2 + $0x788] sm:$0xff]
          %v2052 = vld [vmem:[#allocation2 + $0x790] sm:$0xff]
          %v2053 = vld [vmem:[#allocation2 + $0x798] sm:$0xff]
          %v2054 = vld [vmem:[#allocation2 + $0x7a0] sm:$0xff]
          %v2055 = vld [vmem:[#allocation2 + $0x7a8] sm:$0xff]
          %v2056 = vld [vmem:[#allocation2 + $0x7b0] sm:$0xff]
          %v2057 = vld [vmem:[#allocation2 + $0x7b8] sm:$0xff]
          %v2058 = vld [vmem:[#allocation2 + $0x7c0] sm:$0xff]
          %v2059 = vld [vmem:[#allocation2 + $0x7c8] sm:$0xff]
          %v2060 = vld [vmem:[#allocation2 + $0x7d0] sm:$0xff]
          %v2061 = vld [vmem:[#allocation2 + $0x7d8] sm:$0xff]
          %v2062 = vld [vmem:[#allocation2 + $0x7e0] sm:$0xff]
          %v2063 = vld [vmem:[#allocation2 + $0x7e8] sm:$0xff]
          %v2064 = vld [vmem:[#allocation2 + $0x7f0] sm:$0xff]
          %v2065 = vld [vmem:[#allocation2 + $0x7f8] sm:$0xff]
          %v2067 = vlaneseq
          %v2068 = vshrl.u32 %v2067, 7
          %v2069 = vsub.s32 0, %v2068
          %v2070 = vrot.slane %v1806, %v2069
          %v2071 = vlaneseq
          %v2072 = vshrl.u32 %v2071, 7
          %v2073 = vsub.s32 1, %v2072
          %v2074 = vrot.slane %v1806, %v2073
          %v2075 = vlaneseq
          %v2076 = vshrl.u32 %v2075, 7
          %v2077 = vsub.s32 2, %v2076
          %v2078 = vrot.slane %v1806, %v2077
          %v2079 = vlaneseq
          %v2080 = vshrl.u32 %v2079, 7
          %v2081 = vsub.s32 3, %v2080
          %v2082 = vrot.slane %v1806, %v2081
          %v2087 = vmul.f32 %v1810, %v2070
          %v2088 = vmul.f32 %v1811, %v2074
          %v2089 = vmul.f32 %v1812, %v2078
          %v2090 = vmul.f32 %v1813, %v2082
          %v2091 = vmul.f32 %v1814, %v2070
          %v2092 = vmul.f32 %v1815, %v2074
          %v2093 = vmul.f32 %v1816, %v2078
          %v2094 = vmul.f32 %v1817, %v2082
          %v2095 = vmul.f32 %v1818, %v2070
          %v2096 = vmul.f32 %v1819, %v2074
          %v2097 = vmul.f32 %v1820, %v2078
          %v2098 = vmul.f32 %v1821, %v2082
          %v2099 = vmul.f32 %v1822, %v2070
          %v2100 = vmul.f32 %v1823, %v2074
          %v2101 = vmul.f32 %v1824, %v2078
          %v2102 = vmul.f32 %v1825, %v2082
          %v2103 = vmul.f32 %v1826, %v2070
          %v2104 = vmul.f32 %v1827, %v2074
          %v2105 = vmul.f32 %v1828, %v2078
          %v2106 = vmul.f32 %v1829, %v2082
          %v2107 = vmul.f32 %v1830, %v2070
          %v2108 = vmul.f32 %v1831, %v2074
          %v2109 = vmul.f32 %v1832, %v2078
          %v2110 = vmul.f32 %v1833, %v2082
          %v2111 = vmul.f32 %v1834, %v2070
          %v2112 = vmul.f32 %v1835, %v2074
          %v2113 = vmul.f32 %v1836, %v2078
          %v2114 = vmul.f32 %v1837, %v2082
          %v2115 = vmul.f32 %v1838, %v2070
          %v2116 = vmul.f32 %v1839, %v2074
          %v2117 = vmul.f32 %v1840, %v2078
          %v2118 = vmul.f32 %v1841, %v2082
          %v2119 = vmul.f32 %v1842, %v2070
          %v2120 = vmul.f32 %v1843, %v2074
          %v2121 = vmul.f32 %v1844, %v2078
          %v2122 = vmul.f32 %v1845, %v2082
          %v2123 = vmul.f32 %v1846, %v2070
          %v2124 = vmul.f32 %v1847, %v2074
          %v2125 = vmul.f32 %v1848, %v2078
          %v2126 = vmul.f32 %v1849, %v2082
          %v2127 = vmul.f32 %v1850, %v2070
          %v2128 = vmul.f32 %v1851, %v2074
          %v2129 = vmul.f32 %v1852, %v2078
          %v2130 = vmul.f32 %v1853, %v2082
          %v2131 = vmul.f32 %v1854, %v2070
          %v2132 = vmul.f32 %v1855, %v2074
          %v2133 = vmul.f32 %v1856, %v2078
          %v2134 = vmul.f32 %v1857, %v2082
          %v2135 = vmul.f32 %v1858, %v2070
          %v2136 = vmul.f32 %v1859, %v2074
          %v2137 = vmul.f32 %v1860, %v2078
          %v2138 = vmul.f32 %v1861, %v2082
          %v2139 = vmul.f32 %v1862, %v2070
          %v2140 = vmul.f32 %v1863, %v2074
          %v2141 = vmul.f32 %v1864, %v2078
          %v2142 = vmul.f32 %v1865, %v2082
          %v2143 = vmul.f32 %v1866, %v2070
          %v2144 = vmul.f32 %v1867, %v2074
          %v2145 = vmul.f32 %v1868, %v2078
          %v2146 = vmul.f32 %v1869, %v2082
          %v2147 = vmul.f32 %v1870, %v2070
          %v2148 = vmul.f32 %v1871, %v2074
          %v2149 = vmul.f32 %v1872, %v2078
          %v2150 = vmul.f32 %v1873, %v2082
          %v2151 = vmul.f32 %v1874, %v2070
          %v2152 = vmul.f32 %v1875, %v2074
          %v2153 = vmul.f32 %v1876, %v2078
          %v2154 = vmul.f32 %v1877, %v2082
          %v2155 = vmul.f32 %v1878, %v2070
          %v2156 = vmul.f32 %v1879, %v2074
          %v2157 = vmul.f32 %v1880, %v2078
          %v2158 = vmul.f32 %v1881, %v2082
          %v2159 = vmul.f32 %v1882, %v2070
          %v2160 = vmul.f32 %v1883, %v2074
          %v2161 = vmul.f32 %v1884, %v2078
          %v2162 = vmul.f32 %v1885, %v2082
          %v2163 = vmul.f32 %v1886, %v2070
          %v2164 = vmul.f32 %v1887, %v2074
          %v2165 = vmul.f32 %v1888, %v2078
          %v2166 = vmul.f32 %v1889, %v2082
          %v2167 = vmul.f32 %v1890, %v2070
          %v2168 = vmul.f32 %v1891, %v2074
          %v2169 = vmul.f32 %v1892, %v2078
          %v2170 = vmul.f32 %v1893, %v2082
          %v2171 = vmul.f32 %v1894, %v2070
          %v2172 = vmul.f32 %v1895, %v2074
          %v2173 = vmul.f32 %v1896, %v2078
          %v2174 = vmul.f32 %v1897, %v2082
          %v2175 = vmul.f32 %v1898, %v2070
          %v2176 = vmul.f32 %v1899, %v2074
          %v2177 = vmul.f32 %v1900, %v2078
          %v2178 = vmul.f32 %v1901, %v2082
          %v2179 = vmul.f32 %v1902, %v2070
          %v2180 = vmul.f32 %v1903, %v2074
          %v2181 = vmul.f32 %v1904, %v2078
          %v2182 = vmul.f32 %v1905, %v2082
          %v2183 = vmul.f32 %v1906, %v2070
          %v2184 = vmul.f32 %v1907, %v2074
          %v2185 = vmul.f32 %v1908, %v2078
          %v2186 = vmul.f32 %v1909, %v2082
          %v2187 = vmul.f32 %v1910, %v2070
          %v2188 = vmul.f32 %v1911, %v2074
          %v2189 = vmul.f32 %v1912, %v2078
          %v2190 = vmul.f32 %v1913, %v2082
          %v2191 = vmul.f32 %v1914, %v2070
          %v2192 = vmul.f32 %v1915, %v2074
          %v2193 = vmul.f32 %v1916, %v2078
          %v2194 = vmul.f32 %v1917, %v2082
          %v2195 = vmul.f32 %v1918, %v2070
          %v2196 = vmul.f32 %v1919, %v2074
          %v2197 = vmul.f32 %v1920, %v2078
          %v2198 = vmul.f32 %v1921, %v2082
          %v2199 = vmul.f32 %v1922, %v2070
          %v2200 = vmul.f32 %v1923, %v2074
          %v2201 = vmul.f32 %v1924, %v2078
          %v2202 = vmul.f32 %v1925, %v2082
          %v2203 = vmul.f32 %v1926, %v2070
          %v2204 = vmul.f32 %v1927, %v2074
          %v2205 = vmul.f32 %v1928, %v2078
          %v2206 = vmul.f32 %v1929, %v2082
          %v2207 = vmul.f32 %v1930, %v2070
          %v2208 = vmul.f32 %v1931, %v2074
          %v2209 = vmul.f32 %v1932, %v2078
          %v2210 = vmul.f32 %v1933, %v2082
          %v2211 = vmul.f32 %v1934, %v2070
          %v2212 = vmul.f32 %v1935, %v2074
          %v2213 = vmul.f32 %v1936, %v2078
          %v2214 = vmul.f32 %v1937, %v2082
          %v2215 = vmul.f32 %v1938, %v2070
          %v2216 = vmul.f32 %v1939, %v2074
          %v2217 = vmul.f32 %v1940, %v2078
          %v2218 = vmul.f32 %v1941, %v2082
          %v2219 = vmul.f32 %v1942, %v2070
          %v2220 = vmul.f32 %v1943, %v2074
          %v2221 = vmul.f32 %v1944, %v2078
          %v2222 = vmul.f32 %v1945, %v2082
          %v2223 = vmul.f32 %v1946, %v2070
          %v2224 = vmul.f32 %v1947, %v2074
          %v2225 = vmul.f32 %v1948, %v2078
          %v2226 = vmul.f32 %v1949, %v2082
          %v2227 = vmul.f32 %v1950, %v2070
          %v2228 = vmul.f32 %v1951, %v2074
          %v2229 = vmul.f32 %v1952, %v2078
          %v2230 = vmul.f32 %v1953, %v2082
          %v2231 = vmul.f32 %v1954, %v2070
          %v2232 = vmul.f32 %v1955, %v2074
          %v2233 = vmul.f32 %v1956, %v2078
          %v2234 = vmul.f32 %v1957, %v2082
          %v2235 = vmul.f32 %v1958, %v2070
          %v2236 = vmul.f32 %v1959, %v2074
          %v2237 = vmul.f32 %v1960, %v2078
          %v2238 = vmul.f32 %v1961, %v2082
          %v2239 = vmul.f32 %v1962, %v2070
          %v2240 = vmul.f32 %v1963, %v2074
          %v2241 = vmul.f32 %v1964, %v2078
          %v2242 = vmul.f32 %v1965, %v2082
          %v2243 = vmul.f32 %v1966, %v2070
          %v2244 = vmul.f32 %v1967, %v2074
          %v2245 = vmul.f32 %v1968, %v2078
          %v2246 = vmul.f32 %v1969, %v2082
          %v2247 = vmul.f32 %v1970, %v2070
          %v2248 = vmul.f32 %v1971, %v2074
          %v2249 = vmul.f32 %v1972, %v2078
          %v2250 = vmul.f32 %v1973, %v2082
          %v2251 = vmul.f32 %v1974, %v2070
          %v2252 = vmul.f32 %v1975, %v2074
          %v2253 = vmul.f32 %v1976, %v2078
          %v2254 = vmul.f32 %v1977, %v2082
          %v2255 = vmul.f32 %v1978, %v2070
          %v2256 = vmul.f32 %v1979, %v2074
          %v2257 = vmul.f32 %v1980, %v2078
          %v2258 = vmul.f32 %v1981, %v2082
          %v2259 = vmul.f32 %v1982, %v2070
          %v2260 = vmul.f32 %v1983, %v2074
          %v2261 = vmul.f32 %v1984, %v2078
          %v2262 = vmul.f32 %v1985, %v2082
          %v2263 = vmul.f32 %v1986, %v2070
          %v2264 = vmul.f32 %v1987, %v2074
          %v2265 = vmul.f32 %v1988, %v2078
          %v2266 = vmul.f32 %v1989, %v2082
          %v2267 = vmul.f32 %v1990, %v2070
          %v2268 = vmul.f32 %v1991, %v2074
          %v2269 = vmul.f32 %v1992, %v2078
          %v2270 = vmul.f32 %v1993, %v2082
          %v2271 = vmul.f32 %v1994, %v2070
          %v2272 = vmul.f32 %v1995, %v2074
          %v2273 = vmul.f32 %v1996, %v2078
          %v2274 = vmul.f32 %v1997, %v2082
          %v2275 = vmul.f32 %v1998, %v2070
          %v2276 = vmul.f32 %v1999, %v2074
          %v2277 = vmul.f32 %v2000, %v2078
          %v2278 = vmul.f32 %v2001, %v2082
          %v2279 = vmul.f32 %v2002, %v2070
          %v2280 = vmul.f32 %v2003, %v2074
          %v2281 = vmul.f32 %v2004, %v2078
          %v2282 = vmul.f32 %v2005, %v2082
          %v2283 = vmul.f32 %v2006, %v2070
          %v2284 = vmul.f32 %v2007, %v2074
          %v2285 = vmul.f32 %v2008, %v2078
          %v2286 = vmul.f32 %v2009, %v2082
          %v2287 = vmul.f32 %v2010, %v2070
          %v2288 = vmul.f32 %v2011, %v2074
          %v2289 = vmul.f32 %v2012, %v2078
          %v2290 = vmul.f32 %v2013, %v2082
          %v2291 = vmul.f32 %v2014, %v2070
          %v2292 = vmul.f32 %v2015, %v2074
          %v2293 = vmul.f32 %v2016, %v2078
          %v2294 = vmul.f32 %v2017, %v2082
          %v2295 = vmul.f32 %v2018, %v2070
          %v2296 = vmul.f32 %v2019, %v2074
          %v2297 = vmul.f32 %v2020, %v2078
          %v2298 = vmul.f32 %v2021, %v2082
          %v2299 = vmul.f32 %v2022, %v2070
          %v2300 = vmul.f32 %v2023, %v2074
          %v2301 = vmul.f32 %v2024, %v2078
          %v2302 = vmul.f32 %v2025, %v2082
          %v2303 = vmul.f32 %v2026, %v2070
          %v2304 = vmul.f32 %v2027, %v2074
          %v2305 = vmul.f32 %v2028, %v2078
          %v2306 = vmul.f32 %v2029, %v2082
          %v2307 = vmul.f32 %v2030, %v2070
          %v2308 = vmul.f32 %v2031, %v2074
          %v2309 = vmul.f32 %v2032, %v2078
          %v2310 = vmul.f32 %v2033, %v2082
          %v2311 = vmul.f32 %v2034, %v2070
          %v2312 = vmul.f32 %v2035, %v2074
          %v2313 = vmul.f32 %v2036, %v2078
          %v2314 = vmul.f32 %v2037, %v2082
          %v2315 = vmul.f32 %v2038, %v2070
          %v2316 = vmul.f32 %v2039, %v2074
          %v2317 = vmul.f32 %v2040, %v2078
          %v2318 = vmul.f32 %v2041, %v2082
          %v2319 = vmul.f32 %v2042, %v2070
          %v2320 = vmul.f32 %v2043, %v2074
          %v2321 = vmul.f32 %v2044, %v2078
          %v2322 = vmul.f32 %v2045, %v2082
          %v2323 = vmul.f32 %v2046, %v2070
          %v2324 = vmul.f32 %v2047, %v2074
          %v2325 = vmul.f32 %v2048, %v2078
          %v2326 = vmul.f32 %v2049, %v2082
          %v2327 = vmul.f32 %v2050, %v2070
          %v2328 = vmul.f32 %v2051, %v2074
          %v2329 = vmul.f32 %v2052, %v2078
          %v2330 = vmul.f32 %v2053, %v2082
          %v2331 = vmul.f32 %v2054, %v2070
          %v2332 = vmul.f32 %v2055, %v2074
          %v2333 = vmul.f32 %v2056, %v2078
          %v2334 = vmul.f32 %v2057, %v2082
          %v2335 = vmul.f32 %v2058, %v2070
          %v2336 = vmul.f32 %v2059, %v2074
          %v2337 = vmul.f32 %v2060, %v2078
          %v2338 = vmul.f32 %v2061, %v2082
          %v2339 = vmul.f32 %v2062, %v2070
          %v2340 = vmul.f32 %v2063, %v2074
          %v2341 = vmul.f32 %v2064, %v2078
          %v2342 = vmul.f32 %v2065, %v2082
          %v2344 = vlaneseq
          %v2345 = vshrl.u32 %v2344, 7
          %v2346 = vsub.s32 0, %v2345
          %v2347 = vrot.slane %v1809, %v2346
          %v2348 = vlaneseq
          %v2349 = vshrl.u32 %v2348, 7
          %v2350 = vsub.s32 1, %v2349
          %v2351 = vrot.slane %v1809, %v2350
          %v2352 = vlaneseq
          %v2353 = vshrl.u32 %v2352, 7
          %v2354 = vsub.s32 2, %v2353
          %v2355 = vrot.slane %v1809, %v2354
          %v2356 = vlaneseq
          %v2357 = vshrl.u32 %v2356, 7
          %v2358 = vsub.s32 3, %v2357
          %v2359 = vrot.slane %v1809, %v2358
          %v2364 = vadd.f32 %v2087, %v2347
          %v2365 = vadd.f32 %v2088, %v2351
          %v2366 = vadd.f32 %v2089, %v2355
          %v2367 = vadd.f32 %v2090, %v2359
          %v2368 = vadd.f32 %v2091, %v2347
          %v2369 = vadd.f32 %v2092, %v2351
          %v2370 = vadd.f32 %v2093, %v2355
          %v2371 = vadd.f32 %v2094, %v2359
          %v2372 = vadd.f32 %v2095, %v2347
          %v2373 = vadd.f32 %v2096, %v2351
          %v2374 = vadd.f32 %v2097, %v2355
          %v2375 = vadd.f32 %v2098, %v2359
          %v2376 = vadd.f32 %v2099, %v2347
          %v2377 = vadd.f32 %v2100, %v2351
          %v2378 = vadd.f32 %v2101, %v2355
          %v2379 = vadd.f32 %v2102, %v2359
          %v2380 = vadd.f32 %v2103, %v2347
          %v2381 = vadd.f32 %v2104, %v2351
          %v2382 = vadd.f32 %v2105, %v2355
          %v2383 = vadd.f32 %v2106, %v2359
          %v2384 = vadd.f32 %v2107, %v2347
          %v2385 = vadd.f32 %v2108, %v2351
          %v2386 = vadd.f32 %v2109, %v2355
          %v2387 = vadd.f32 %v2110, %v2359
          %v2388 = vadd.f32 %v2111, %v2347
          %v2389 = vadd.f32 %v2112, %v2351
          %v2390 = vadd.f32 %v2113, %v2355
          %v2391 = vadd.f32 %v2114, %v2359
          %v2392 = vadd.f32 %v2115, %v2347
          %v2393 = vadd.f32 %v2116, %v2351
          %v2394 = vadd.f32 %v2117, %v2355
          %v2395 = vadd.f32 %v2118, %v2359
          %v2396 = vadd.f32 %v2119, %v2347
          %v2397 = vadd.f32 %v2120, %v2351
          %v2398 = vadd.f32 %v2121, %v2355
          %v2399 = vadd.f32 %v2122, %v2359
          %v2400 = vadd.f32 %v2123, %v2347
          %v2401 = vadd.f32 %v2124, %v2351
          %v2402 = vadd.f32 %v2125, %v2355
          %v2403 = vadd.f32 %v2126, %v2359
          %v2404 = vadd.f32 %v2127, %v2347
          %v2405 = vadd.f32 %v2128, %v2351
          %v2406 = vadd.f32 %v2129, %v2355
          %v2407 = vadd.f32 %v2130, %v2359
          %v2408 = vadd.f32 %v2131, %v2347
          %v2409 = vadd.f32 %v2132, %v2351
          %v2410 = vadd.f32 %v2133, %v2355
          %v2411 = vadd.f32 %v2134, %v2359
          %v2412 = vadd.f32 %v2135, %v2347
          %v2413 = vadd.f32 %v2136, %v2351
          %v2414 = vadd.f32 %v2137, %v2355
          %v2415 = vadd.f32 %v2138, %v2359
          %v2416 = vadd.f32 %v2139, %v2347
          %v2417 = vadd.f32 %v2140, %v2351
          %v2418 = vadd.f32 %v2141, %v2355
          %v2419 = vadd.f32 %v2142, %v2359
          %v2420 = vadd.f32 %v2143, %v2347
          %v2421 = vadd.f32 %v2144, %v2351
          %v2422 = vadd.f32 %v2145, %v2355
          %v2423 = vadd.f32 %v2146, %v2359
          %v2424 = vadd.f32 %v2147, %v2347
          %v2425 = vadd.f32 %v2148, %v2351
          %v2426 = vadd.f32 %v2149, %v2355
          %v2427 = vadd.f32 %v2150, %v2359
          %v2428 = vadd.f32 %v2151, %v2347
          %v2429 = vadd.f32 %v2152, %v2351
          %v2430 = vadd.f32 %v2153, %v2355
          %v2431 = vadd.f32 %v2154, %v2359
          %v2432 = vadd.f32 %v2155, %v2347
          %v2433 = vadd.f32 %v2156, %v2351
          %v2434 = vadd.f32 %v2157, %v2355
          %v2435 = vadd.f32 %v2158, %v2359
          %v2436 = vadd.f32 %v2159, %v2347
          %v2437 = vadd.f32 %v2160, %v2351
          %v2438 = vadd.f32 %v2161, %v2355
          %v2439 = vadd.f32 %v2162, %v2359
          %v2440 = vadd.f32 %v2163, %v2347
          %v2441 = vadd.f32 %v2164, %v2351
          %v2442 = vadd.f32 %v2165, %v2355
          %v2443 = vadd.f32 %v2166, %v2359
          %v2444 = vadd.f32 %v2167, %v2347
          %v2445 = vadd.f32 %v2168, %v2351
          %v2446 = vadd.f32 %v2169, %v2355
          %v2447 = vadd.f32 %v2170, %v2359
          %v2448 = vadd.f32 %v2171, %v2347
          %v2449 = vadd.f32 %v2172, %v2351
          %v2450 = vadd.f32 %v2173, %v2355
          %v2451 = vadd.f32 %v2174, %v2359
          %v2452 = vadd.f32 %v2175, %v2347
          %v2453 = vadd.f32 %v2176, %v2351
          %v2454 = vadd.f32 %v2177, %v2355
          %v2455 = vadd.f32 %v2178, %v2359
          %v2456 = vadd.f32 %v2179, %v2347
          %v2457 = vadd.f32 %v2180, %v2351
          %v2458 = vadd.f32 %v2181, %v2355
          %v2459 = vadd.f32 %v2182, %v2359
          %v2460 = vadd.f32 %v2183, %v2347
          %v2461 = vadd.f32 %v2184, %v2351
          %v2462 = vadd.f32 %v2185, %v2355
          %v2463 = vadd.f32 %v2186, %v2359
          %v2464 = vadd.f32 %v2187, %v2347
          %v2465 = vadd.f32 %v2188, %v2351
          %v2466 = vadd.f32 %v2189, %v2355
          %v2467 = vadd.f32 %v2190, %v2359
          %v2468 = vadd.f32 %v2191, %v2347
          %v2469 = vadd.f32 %v2192, %v2351
          %v2470 = vadd.f32 %v2193, %v2355
          %v2471 = vadd.f32 %v2194, %v2359
          %v2472 = vadd.f32 %v2195, %v2347
          %v2473 = vadd.f32 %v2196, %v2351
          %v2474 = vadd.f32 %v2197, %v2355
          %v2475 = vadd.f32 %v2198, %v2359
          %v2476 = vadd.f32 %v2199, %v2347
          %v2477 = vadd.f32 %v2200, %v2351
          %v2478 = vadd.f32 %v2201, %v2355
          %v2479 = vadd.f32 %v2202, %v2359
          %v2480 = vadd.f32 %v2203, %v2347
          %v2481 = vadd.f32 %v2204, %v2351
          %v2482 = vadd.f32 %v2205, %v2355
          %v2483 = vadd.f32 %v2206, %v2359
          %v2484 = vadd.f32 %v2207, %v2347
          %v2485 = vadd.f32 %v2208, %v2351
          %v2486 = vadd.f32 %v2209, %v2355
          %v2487 = vadd.f32 %v2210, %v2359
          %v2488 = vadd.f32 %v2211, %v2347
          %v2489 = vadd.f32 %v2212, %v2351
          %v2490 = vadd.f32 %v2213, %v2355
          %v2491 = vadd.f32 %v2214, %v2359
          %v2492 = vadd.f32 %v2215, %v2347
          %v2493 = vadd.f32 %v2216, %v2351
          %v2494 = vadd.f32 %v2217, %v2355
          %v2495 = vadd.f32 %v2218, %v2359
          %v2496 = vadd.f32 %v2219, %v2347
          %v2497 = vadd.f32 %v2220, %v2351
          %v2498 = vadd.f32 %v2221, %v2355
          %v2499 = vadd.f32 %v2222, %v2359
          %v2500 = vadd.f32 %v2223, %v2347
          %v2501 = vadd.f32 %v2224, %v2351
          %v2502 = vadd.f32 %v2225, %v2355
          %v2503 = vadd.f32 %v2226, %v2359
          %v2504 = vadd.f32 %v2227, %v2347
          %v2505 = vadd.f32 %v2228, %v2351
          %v2506 = vadd.f32 %v2229, %v2355
          %v2507 = vadd.f32 %v2230, %v2359
          %v2508 = vadd.f32 %v2231, %v2347
          %v2509 = vadd.f32 %v2232, %v2351
          %v2510 = vadd.f32 %v2233, %v2355
          %v2511 = vadd.f32 %v2234, %v2359
          %v2512 = vadd.f32 %v2235, %v2347
          %v2513 = vadd.f32 %v2236, %v2351
          %v2514 = vadd.f32 %v2237, %v2355
          %v2515 = vadd.f32 %v2238, %v2359
          %v2516 = vadd.f32 %v2239, %v2347
          %v2517 = vadd.f32 %v2240, %v2351
          %v2518 = vadd.f32 %v2241, %v2355
          %v2519 = vadd.f32 %v2242, %v2359
          %v2520 = vadd.f32 %v2243, %v2347
          %v2521 = vadd.f32 %v2244, %v2351
          %v2522 = vadd.f32 %v2245, %v2355
          %v2523 = vadd.f32 %v2246, %v2359
          %v2524 = vadd.f32 %v2247, %v2347
          %v2525 = vadd.f32 %v2248, %v2351
          %v2526 = vadd.f32 %v2249, %v2355
          %v2527 = vadd.f32 %v2250, %v2359
          %v2528 = vadd.f32 %v2251, %v2347
          %v2529 = vadd.f32 %v2252, %v2351
          %v2530 = vadd.f32 %v2253, %v2355
          %v2531 = vadd.f32 %v2254, %v2359
          %v2532 = vadd.f32 %v2255, %v2347
          %v2533 = vadd.f32 %v2256, %v2351
          %v2534 = vadd.f32 %v2257, %v2355
          %v2535 = vadd.f32 %v2258, %v2359
          %v2536 = vadd.f32 %v2259, %v2347
          %v2537 = vadd.f32 %v2260, %v2351
          %v2538 = vadd.f32 %v2261, %v2355
          %v2539 = vadd.f32 %v2262, %v2359
          %v2540 = vadd.f32 %v2263, %v2347
          %v2541 = vadd.f32 %v2264, %v2351
          %v2542 = vadd.f32 %v2265, %v2355
          %v2543 = vadd.f32 %v2266, %v2359
          %v2544 = vadd.f32 %v2267, %v2347
          %v2545 = vadd.f32 %v2268, %v2351
          %v2546 = vadd.f32 %v2269, %v2355
          %v2547 = vadd.f32 %v2270, %v2359
          %v2548 = vadd.f32 %v2271, %v2347
          %v2549 = vadd.f32 %v2272, %v2351
          %v2550 = vadd.f32 %v2273, %v2355
          %v2551 = vadd.f32 %v2274, %v2359
          %v2552 = vadd.f32 %v2275, %v2347
          %v2553 = vadd.f32 %v2276, %v2351
          %v2554 = vadd.f32 %v2277, %v2355
          %v2555 = vadd.f32 %v2278, %v2359
          %v2556 = vadd.f32 %v2279, %v2347
          %v2557 = vadd.f32 %v2280, %v2351
          %v2558 = vadd.f32 %v2281, %v2355
          %v2559 = vadd.f32 %v2282, %v2359
          %v2560 = vadd.f32 %v2283, %v2347
          %v2561 = vadd.f32 %v2284, %v2351
          %v2562 = vadd.f32 %v2285, %v2355
          %v2563 = vadd.f32 %v2286, %v2359
          %v2564 = vadd.f32 %v2287, %v2347
          %v2565 = vadd.f32 %v2288, %v2351
          %v2566 = vadd.f32 %v2289, %v2355
          %v2567 = vadd.f32 %v2290, %v2359
          %v2568 = vadd.f32 %v2291, %v2347
          %v2569 = vadd.f32 %v2292, %v2351
          %v2570 = vadd.f32 %v2293, %v2355
          %v2571 = vadd.f32 %v2294, %v2359
          %v2572 = vadd.f32 %v2295, %v2347
          %v2573 = vadd.f32 %v2296, %v2351
          %v2574 = vadd.f32 %v2297, %v2355
          %v2575 = vadd.f32 %v2298, %v2359
          %v2576 = vadd.f32 %v2299, %v2347
          %v2577 = vadd.f32 %v2300, %v2351
          %v2578 = vadd.f32 %v2301, %v2355
          %v2579 = vadd.f32 %v2302, %v2359
          %v2580 = vadd.f32 %v2303, %v2347
          %v2581 = vadd.f32 %v2304, %v2351
          %v2582 = vadd.f32 %v2305, %v2355
          %v2583 = vadd.f32 %v2306, %v2359
          %v2584 = vadd.f32 %v2307, %v2347
          %v2585 = vadd.f32 %v2308, %v2351
          %v2586 = vadd.f32 %v2309, %v2355
          %v2587 = vadd.f32 %v2310, %v2359
          %v2588 = vadd.f32 %v2311, %v2347
          %v2589 = vadd.f32 %v2312, %v2351
          %v2590 = vadd.f32 %v2313, %v2355
          %v2591 = vadd.f32 %v2314, %v2359
          %v2592 = vadd.f32 %v2315, %v2347
          %v2593 = vadd.f32 %v2316, %v2351
          %v2594 = vadd.f32 %v2317, %v2355
          %v2595 = vadd.f32 %v2318, %v2359
          %v2596 = vadd.f32 %v2319, %v2347
          %v2597 = vadd.f32 %v2320, %v2351
          %v2598 = vadd.f32 %v2321, %v2355
          %v2599 = vadd.f32 %v2322, %v2359
          %v2600 = vadd.f32 %v2323, %v2347
          %v2601 = vadd.f32 %v2324, %v2351
          %v2602 = vadd.f32 %v2325, %v2355
          %v2603 = vadd.f32 %v2326, %v2359
          %v2604 = vadd.f32 %v2327, %v2347
          %v2605 = vadd.f32 %v2328, %v2351
          %v2606 = vadd.f32 %v2329, %v2355
          %v2607 = vadd.f32 %v2330, %v2359
          %v2608 = vadd.f32 %v2331, %v2347
          %v2609 = vadd.f32 %v2332, %v2351
          %v2610 = vadd.f32 %v2333, %v2355
          %v2611 = vadd.f32 %v2334, %v2359
          %v2612 = vadd.f32 %v2335, %v2347
          %v2613 = vadd.f32 %v2336, %v2351
          %v2614 = vadd.f32 %v2337, %v2355
          %v2615 = vadd.f32 %v2338, %v2359
          %v2616 = vadd.f32 %v2339, %v2347
          %v2617 = vadd.f32 %v2340, %v2351
          %v2618 = vadd.f32 %v2341, %v2355
          %v2619 = vadd.f32 %v2342, %v2359
          %v2620 = vmax.f32 %v2364, 0.0
          %v2621 = vmax.f32 %v2365, 0.0
          %v2622 = vmax.f32 %v2366, 0.0
          %v2623 = vmax.f32 %v2367, 0.0
          %v2624 = vmax.f32 %v2368, 0.0
          %v2625 = vmax.f32 %v2369, 0.0
          %v2626 = vmax.f32 %v2370, 0.0
          %v2627 = vmax.f32 %v2371, 0.0
          %v2628 = vmax.f32 %v2372, 0.0
          %v2629 = vmax.f32 %v2373, 0.0
          %v2630 = vmax.f32 %v2374, 0.0
          %v2631 = vmax.f32 %v2375, 0.0
          %v2632 = vmax.f32 %v2376, 0.0
          %v2633 = vmax.f32 %v2377, 0.0
          %v2634 = vmax.f32 %v2378, 0.0
          %v2635 = vmax.f32 %v2379, 0.0
          %v2636 = vmax.f32 %v2380, 0.0
          %v2637 = vmax.f32 %v2381, 0.0
          %v2638 = vmax.f32 %v2382, 0.0
          %v2639 = vmax.f32 %v2383, 0.0
          %v2640 = vmax.f32 %v2384, 0.0
          %v2641 = vmax.f32 %v2385, 0.0
          %v2642 = vmax.f32 %v2386, 0.0
          %v2643 = vmax.f32 %v2387, 0.0
          %v2644 = vmax.f32 %v2388, 0.0
          %v2645 = vmax.f32 %v2389, 0.0
          %v2646 = vmax.f32 %v2390, 0.0
          %v2647 = vmax.f32 %v2391, 0.0
          %v2648 = vmax.f32 %v2392, 0.0
          %v2649 = vmax.f32 %v2393, 0.0
          %v2650 = vmax.f32 %v2394, 0.0
          %v2651 = vmax.f32 %v2395, 0.0
          %v2652 = vmax.f32 %v2396, 0.0
          %v2653 = vmax.f32 %v2397, 0.0
          %v2654 = vmax.f32 %v2398, 0.0
          %v2655 = vmax.f32 %v2399, 0.0
          %v2656 = vmax.f32 %v2400, 0.0
          %v2657 = vmax.f32 %v2401, 0.0
          %v2658 = vmax.f32 %v2402, 0.0
          %v2659 = vmax.f32 %v2403, 0.0
          %v2660 = vmax.f32 %v2404, 0.0
          %v2661 = vmax.f32 %v2405, 0.0
          %v2662 = vmax.f32 %v2406, 0.0
          %v2663 = vmax.f32 %v2407, 0.0
          %v2664 = vmax.f32 %v2408, 0.0
          %v2665 = vmax.f32 %v2409, 0.0
          %v2666 = vmax.f32 %v2410, 0.0
          %v2667 = vmax.f32 %v2411, 0.0
          %v2668 = vmax.f32 %v2412, 0.0
          %v2669 = vmax.f32 %v2413, 0.0
          %v2670 = vmax.f32 %v2414, 0.0
          %v2671 = vmax.f32 %v2415, 0.0
          %v2672 = vmax.f32 %v2416, 0.0
          %v2673 = vmax.f32 %v2417, 0.0
          %v2674 = vmax.f32 %v2418, 0.0
          %v2675 = vmax.f32 %v2419, 0.0
          %v2676 = vmax.f32 %v2420, 0.0
          %v2677 = vmax.f32 %v2421, 0.0
          %v2678 = vmax.f32 %v2422, 0.0
          %v2679 = vmax.f32 %v2423, 0.0
          %v2680 = vmax.f32 %v2424, 0.0
          %v2681 = vmax.f32 %v2425, 0.0
          %v2682 = vmax.f32 %v2426, 0.0
          %v2683 = vmax.f32 %v2427, 0.0
          %v2684 = vmax.f32 %v2428, 0.0
          %v2685 = vmax.f32 %v2429, 0.0
          %v2686 = vmax.f32 %v2430, 0.0
          %v2687 = vmax.f32 %v2431, 0.0
          %v2688 = vmax.f32 %v2432, 0.0
          %v2689 = vmax.f32 %v2433, 0.0
          %v2690 = vmax.f32 %v2434, 0.0
          %v2691 = vmax.f32 %v2435, 0.0
          %v2692 = vmax.f32 %v2436, 0.0
          %v2693 = vmax.f32 %v2437, 0.0
          %v2694 = vmax.f32 %v2438, 0.0
          %v2695 = vmax.f32 %v2439, 0.0
          %v2696 = vmax.f32 %v2440, 0.0
          %v2697 = vmax.f32 %v2441, 0.0
          %v2698 = vmax.f32 %v2442, 0.0
          %v2699 = vmax.f32 %v2443, 0.0
          %v2700 = vmax.f32 %v2444, 0.0
          %v2701 = vmax.f32 %v2445, 0.0
          %v2702 = vmax.f32 %v2446, 0.0
          %v2703 = vmax.f32 %v2447, 0.0
          %v2704 = vmax.f32 %v2448, 0.0
          %v2705 = vmax.f32 %v2449, 0.0
          %v2706 = vmax.f32 %v2450, 0.0
          %v2707 = vmax.f32 %v2451, 0.0
          %v2708 = vmax.f32 %v2452, 0.0
          %v2709 = vmax.f32 %v2453, 0.0
          %v2710 = vmax.f32 %v2454, 0.0
          %v2711 = vmax.f32 %v2455, 0.0
          %v2712 = vmax.f32 %v2456, 0.0
          %v2713 = vmax.f32 %v2457, 0.0
          %v2714 = vmax.f32 %v2458, 0.0
          %v2715 = vmax.f32 %v2459, 0.0
          %v2716 = vmax.f32 %v2460, 0.0
          %v2717 = vmax.f32 %v2461, 0.0
          %v2718 = vmax.f32 %v2462, 0.0
          %v2719 = vmax.f32 %v2463, 0.0
          %v2720 = vmax.f32 %v2464, 0.0
          %v2721 = vmax.f32 %v2465, 0.0
          %v2722 = vmax.f32 %v2466, 0.0
          %v2723 = vmax.f32 %v2467, 0.0
          %v2724 = vmax.f32 %v2468, 0.0
          %v2725 = vmax.f32 %v2469, 0.0
          %v2726 = vmax.f32 %v2470, 0.0
          %v2727 = vmax.f32 %v2471, 0.0
          %v2728 = vmax.f32 %v2472, 0.0
          %v2729 = vmax.f32 %v2473, 0.0
          %v2730 = vmax.f32 %v2474, 0.0
          %v2731 = vmax.f32 %v2475, 0.0
          %v2732 = vmax.f32 %v2476, 0.0
          %v2733 = vmax.f32 %v2477, 0.0
          %v2734 = vmax.f32 %v2478, 0.0
          %v2735 = vmax.f32 %v2479, 0.0
          %v2736 = vmax.f32 %v2480, 0.0
          %v2737 = vmax.f32 %v2481, 0.0
          %v2738 = vmax.f32 %v2482, 0.0
          %v2739 = vmax.f32 %v2483, 0.0
          %v2740 = vmax.f32 %v2484, 0.0
          %v2741 = vmax.f32 %v2485, 0.0
          %v2742 = vmax.f32 %v2486, 0.0
          %v2743 = vmax.f32 %v2487, 0.0
          %v2744 = vmax.f32 %v2488, 0.0
          %v2745 = vmax.f32 %v2489, 0.0
          %v2746 = vmax.f32 %v2490, 0.0
          %v2747 = vmax.f32 %v2491, 0.0
          %v2748 = vmax.f32 %v2492, 0.0
          %v2749 = vmax.f32 %v2493, 0.0
          %v2750 = vmax.f32 %v2494, 0.0
          %v2751 = vmax.f32 %v2495, 0.0
          %v2752 = vmax.f32 %v2496, 0.0
          %v2753 = vmax.f32 %v2497, 0.0
          %v2754 = vmax.f32 %v2498, 0.0
          %v2755 = vmax.f32 %v2499, 0.0
          %v2756 = vmax.f32 %v2500, 0.0
          %v2757 = vmax.f32 %v2501, 0.0
          %v2758 = vmax.f32 %v2502, 0.0
          %v2759 = vmax.f32 %v2503, 0.0
          %v2760 = vmax.f32 %v2504, 0.0
          %v2761 = vmax.f32 %v2505, 0.0
          %v2762 = vmax.f32 %v2506, 0.0
          %v2763 = vmax.f32 %v2507, 0.0
          %v2764 = vmax.f32 %v2508, 0.0
          %v2765 = vmax.f32 %v2509, 0.0
          %v2766 = vmax.f32 %v2510, 0.0
          %v2767 = vmax.f32 %v2511, 0.0
          %v2768 = vmax.f32 %v2512, 0.0
          %v2769 = vmax.f32 %v2513, 0.0
          %v2770 = vmax.f32 %v2514, 0.0
          %v2771 = vmax.f32 %v2515, 0.0
          %v2772 = vmax.f32 %v2516, 0.0
          %v2773 = vmax.f32 %v2517, 0.0
          %v2774 = vmax.f32 %v2518, 0.0
          %v2775 = vmax.f32 %v2519, 0.0
          %v2776 = vmax.f32 %v2520, 0.0
          %v2777 = vmax.f32 %v2521, 0.0
          %v2778 = vmax.f32 %v2522, 0.0
          %v2779 = vmax.f32 %v2523, 0.0
          %v2780 = vmax.f32 %v2524, 0.0
          %v2781 = vmax.f32 %v2525, 0.0
          %v2782 = vmax.f32 %v2526, 0.0
          %v2783 = vmax.f32 %v2527, 0.0
          %v2784 = vmax.f32 %v2528, 0.0
          %v2785 = vmax.f32 %v2529, 0.0
          %v2786 = vmax.f32 %v2530, 0.0
          %v2787 = vmax.f32 %v2531, 0.0
          %v2788 = vmax.f32 %v2532, 0.0
          %v2789 = vmax.f32 %v2533, 0.0
          %v2790 = vmax.f32 %v2534, 0.0
          %v2791 = vmax.f32 %v2535, 0.0
          %v2792 = vmax.f32 %v2536, 0.0
          %v2793 = vmax.f32 %v2537, 0.0
          %v2794 = vmax.f32 %v2538, 0.0
          %v2795 = vmax.f32 %v2539, 0.0
          %v2796 = vmax.f32 %v2540, 0.0
          %v2797 = vmax.f32 %v2541, 0.0
          %v2798 = vmax.f32 %v2542, 0.0
          %v2799 = vmax.f32 %v2543, 0.0
          %v2800 = vmax.f32 %v2544, 0.0
          %v2801 = vmax.f32 %v2545, 0.0
          %v2802 = vmax.f32 %v2546, 0.0
          %v2803 = vmax.f32 %v2547, 0.0
          %v2804 = vmax.f32 %v2548, 0.0
          %v2805 = vmax.f32 %v2549, 0.0
          %v2806 = vmax.f32 %v2550, 0.0
          %v2807 = vmax.f32 %v2551, 0.0
          %v2808 = vmax.f32 %v2552, 0.0
          %v2809 = vmax.f32 %v2553, 0.0
          %v2810 = vmax.f32 %v2554, 0.0
          %v2811 = vmax.f32 %v2555, 0.0
          %v2812 = vmax.f32 %v2556, 0.0
          %v2813 = vmax.f32 %v2557, 0.0
          %v2814 = vmax.f32 %v2558, 0.0
          %v2815 = vmax.f32 %v2559, 0.0
          %v2816 = vmax.f32 %v2560, 0.0
          %v2817 = vmax.f32 %v2561, 0.0
          %v2818 = vmax.f32 %v2562, 0.0
          %v2819 = vmax.f32 %v2563, 0.0
          %v2820 = vmax.f32 %v2564, 0.0
          %v2821 = vmax.f32 %v2565, 0.0
          %v2822 = vmax.f32 %v2566, 0.0
          %v2823 = vmax.f32 %v2567, 0.0
          %v2824 = vmax.f32 %v2568, 0.0
          %v2825 = vmax.f32 %v2569, 0.0
          %v2826 = vmax.f32 %v2570, 0.0
          %v2827 = vmax.f32 %v2571, 0.0
          %v2828 = vmax.f32 %v2572, 0.0
          %v2829 = vmax.f32 %v2573, 0.0
          %v2830 = vmax.f32 %v2574, 0.0
          %v2831 = vmax.f32 %v2575, 0.0
          %v2832 = vmax.f32 %v2576, 0.0
          %v2833 = vmax.f32 %v2577, 0.0
          %v2834 = vmax.f32 %v2578, 0.0
          %v2835 = vmax.f32 %v2579, 0.0
          %v2836 = vmax.f32 %v2580, 0.0
          %v2837 = vmax.f32 %v2581, 0.0
          %v2838 = vmax.f32 %v2582, 0.0
          %v2839 = vmax.f32 %v2583, 0.0
          %v2840 = vmax.f32 %v2584, 0.0
          %v2841 = vmax.f32 %v2585, 0.0
          %v2842 = vmax.f32 %v2586, 0.0
          %v2843 = vmax.f32 %v2587, 0.0
          %v2844 = vmax.f32 %v2588, 0.0
          %v2845 = vmax.f32 %v2589, 0.0
          %v2846 = vmax.f32 %v2590, 0.0
          %v2847 = vmax.f32 %v2591, 0.0
          %v2848 = vmax.f32 %v2592, 0.0
          %v2849 = vmax.f32 %v2593, 0.0
          %v2850 = vmax.f32 %v2594, 0.0
          %v2851 = vmax.f32 %v2595, 0.0
          %v2852 = vmax.f32 %v2596, 0.0
          %v2853 = vmax.f32 %v2597, 0.0
          %v2854 = vmax.f32 %v2598, 0.0
          %v2855 = vmax.f32 %v2599, 0.0
          %v2856 = vmax.f32 %v2600, 0.0
          %v2857 = vmax.f32 %v2601, 0.0
          %v2858 = vmax.f32 %v2602, 0.0
          %v2859 = vmax.f32 %v2603, 0.0
          %v2860 = vmax.f32 %v2604, 0.0
          %v2861 = vmax.f32 %v2605, 0.0
          %v2862 = vmax.f32 %v2606, 0.0
          %v2863 = vmax.f32 %v2607, 0.0
          %v2864 = vmax.f32 %v2608, 0.0
          %v2865 = vmax.f32 %v2609, 0.0
          %v2866 = vmax.f32 %v2610, 0.0
          %v2867 = vmax.f32 %v2611, 0.0
          %v2868 = vmax.f32 %v2612, 0.0
          %v2869 = vmax.f32 %v2613, 0.0
          %v2870 = vmax.f32 %v2614, 0.0
          %v2871 = vmax.f32 %v2615, 0.0
          %v2872 = vmax.f32 %v2616, 0.0
          %v2873 = vmax.f32 %v2617, 0.0
          %v2874 = vmax.f32 %v2618, 0.0
          %v2875 = vmax.f32 %v2619, 0.0
          %v2876 = vpack.c.bf16 %v2624, %v2620
          %v2877 = vpack.c.bf16 %v2625, %v2621
          %v2878 = vpack.c.bf16 %v2626, %v2622
          %v2879 = vpack.c.bf16 %v2627, %v2623
          %v2880 = vpack.c.bf16 %v2632, %v2628
          %v2881 = vpack.c.bf16 %v2633, %v2629
          %v2882 = vpack.c.bf16 %v2634, %v2630
          %v2883 = vpack.c.bf16 %v2635, %v2631
          %v2884 = vpack.c.bf16 %v2640, %v2636
          %v2885 = vpack.c.bf16 %v2641, %v2637
          %v2886 = vpack.c.bf16 %v2642, %v2638
          %v2887 = vpack.c.bf16 %v2643, %v2639
          %v2888 = vpack.c.bf16 %v2648, %v2644
          %v2889 = vpack.c.bf16 %v2649, %v2645
          %v2890 = vpack.c.bf16 %v2650, %v2646
          %v2891 = vpack.c.bf16 %v2651, %v2647
          %v2892 = vpack.c.bf16 %v2656, %v2652
          %v2893 = vpack.c.bf16 %v2657, %v2653
          %v2894 = vpack.c.bf16 %v2658, %v2654
          %v2895 = vpack.c.bf16 %v2659, %v2655
          %v2896 = vpack.c.bf16 %v2664, %v2660
          %v2897 = vpack.c.bf16 %v2665, %v2661
          %v2898 = vpack.c.bf16 %v2666, %v2662
          %v2899 = vpack.c.bf16 %v2667, %v2663
          %v2900 = vpack.c.bf16 %v2672, %v2668
          %v2901 = vpack.c.bf16 %v2673, %v2669
          %v2902 = vpack.c.bf16 %v2674, %v2670
          %v2903 = vpack.c.bf16 %v2675, %v2671
          %v2904 = vpack.c.bf16 %v2680, %v2676
          %v2905 = vpack.c.bf16 %v2681, %v2677
          %v2906 = vpack.c.bf16 %v2682, %v2678
          %v2907 = vpack.c.bf16 %v2683, %v2679
          %v2908 = vpack.c.bf16 %v2688, %v2684
          %v2909 = vpack.c.bf16 %v2689, %v2685
          %v2910 = vpack.c.bf16 %v2690, %v2686
          %v2911 = vpack.c.bf16 %v2691, %v2687
          %v2912 = vpack.c.bf16 %v2696, %v2692
          %v2913 = vpack.c.bf16 %v2697, %v2693
          %v2914 = vpack.c.bf16 %v2698, %v2694
          %v2915 = vpack.c.bf16 %v2699, %v2695
          %v2916 = vpack.c.bf16 %v2704, %v2700
          %v2917 = vpack.c.bf16 %v2705, %v2701
          %v2918 = vpack.c.bf16 %v2706, %v2702
          %v2919 = vpack.c.bf16 %v2707, %v2703
          %v2920 = vpack.c.bf16 %v2712, %v2708
          %v2921 = vpack.c.bf16 %v2713, %v2709
          %v2922 = vpack.c.bf16 %v2714, %v2710
          %v2923 = vpack.c.bf16 %v2715, %v2711
          %v2924 = vpack.c.bf16 %v2720, %v2716
          %v2925 = vpack.c.bf16 %v2721, %v2717
          %v2926 = vpack.c.bf16 %v2722, %v2718
          %v2927 = vpack.c.bf16 %v2723, %v2719
          %v2928 = vpack.c.bf16 %v2728, %v2724
          %v2929 = vpack.c.bf16 %v2729, %v2725
          %v2930 = vpack.c.bf16 %v2730, %v2726
          %v2931 = vpack.c.bf16 %v2731, %v2727
          %v2932 = vpack.c.bf16 %v2736, %v2732
          %v2933 = vpack.c.bf16 %v2737, %v2733
          %v2934 = vpack.c.bf16 %v2738, %v2734
          %v2935 = vpack.c.bf16 %v2739, %v2735
          %v2936 = vpack.c.bf16 %v2744, %v2740
          %v2937 = vpack.c.bf16 %v2745, %v2741
          %v2938 = vpack.c.bf16 %v2746, %v2742
          %v2939 = vpack.c.bf16 %v2747, %v2743
          %v2940 = vpack.c.bf16 %v2752, %v2748
          %v2941 = vpack.c.bf16 %v2753, %v2749
          %v2942 = vpack.c.bf16 %v2754, %v2750
          %v2943 = vpack.c.bf16 %v2755, %v2751
          %v2944 = vpack.c.bf16 %v2760, %v2756
          %v2945 = vpack.c.bf16 %v2761, %v2757
          %v2946 = vpack.c.bf16 %v2762, %v2758
          %v2947 = vpack.c.bf16 %v2763, %v2759
          %v2948 = vpack.c.bf16 %v2768, %v2764
          %v2949 = vpack.c.bf16 %v2769, %v2765
          %v2950 = vpack.c.bf16 %v2770, %v2766
          %v2951 = vpack.c.bf16 %v2771, %v2767
          %v2952 = vpack.c.bf16 %v2776, %v2772
          %v2953 = vpack.c.bf16 %v2777, %v2773
          %v2954 = vpack.c.bf16 %v2778, %v2774
          %v2955 = vpack.c.bf16 %v2779, %v2775
          %v2956 = vpack.c.bf16 %v2784, %v2780
          %v2957 = vpack.c.bf16 %v2785, %v2781
          %v2958 = vpack.c.bf16 %v2786, %v2782
          %v2959 = vpack.c.bf16 %v2787, %v2783
          %v2960 = vpack.c.bf16 %v2792, %v2788
          %v2961 = vpack.c.bf16 %v2793, %v2789
          %v2962 = vpack.c.bf16 %v2794, %v2790
          %v2963 = vpack.c.bf16 %v2795, %v2791
          %v2964 = vpack.c.bf16 %v2800, %v2796
          %v2965 = vpack.c.bf16 %v2801, %v2797
          %v2966 = vpack.c.bf16 %v2802, %v2798
          %v2967 = vpack.c.bf16 %v2803, %v2799
          %v2968 = vpack.c.bf16 %v2808, %v2804
          %v2969 = vpack.c.bf16 %v2809, %v2805
          %v2970 = vpack.c.bf16 %v2810, %v2806
          %v2971 = vpack.c.bf16 %v2811, %v2807
          %v2972 = vpack.c.bf16 %v2816, %v2812
          %v2973 = vpack.c.bf16 %v2817, %v2813
          %v2974 = vpack.c.bf16 %v2818, %v2814
          %v2975 = vpack.c.bf16 %v2819, %v2815
          %v2976 = vpack.c.bf16 %v2824, %v2820
          %v2977 = vpack.c.bf16 %v2825, %v2821
          %v2978 = vpack.c.bf16 %v2826, %v2822
          %v2979 = vpack.c.bf16 %v2827, %v2823
          %v2980 = vpack.c.bf16 %v2832, %v2828
          %v2981 = vpack.c.bf16 %v2833, %v2829
          %v2982 = vpack.c.bf16 %v2834, %v2830
          %v2983 = vpack.c.bf16 %v2835, %v2831
          %v2984 = vpack.c.bf16 %v2840, %v2836
          %v2985 = vpack.c.bf16 %v2841, %v2837
          %v2986 = vpack.c.bf16 %v2842, %v2838
          %v2987 = vpack.c.bf16 %v2843, %v2839
          %v2988 = vpack.c.bf16 %v2848, %v2844
          %v2989 = vpack.c.bf16 %v2849, %v2845
          %v2990 = vpack.c.bf16 %v2850, %v2846
          %v2991 = vpack.c.bf16 %v2851, %v2847
          %v2992 = vpack.c.bf16 %v2856, %v2852
          %v2993 = vpack.c.bf16 %v2857, %v2853
          %v2994 = vpack.c.bf16 %v2858, %v2854
          %v2995 = vpack.c.bf16 %v2859, %v2855
          %v2996 = vpack.c.bf16 %v2864, %v2860
          %v2997 = vpack.c.bf16 %v2865, %v2861
          %v2998 = vpack.c.bf16 %v2866, %v2862
          %v2999 = vpack.c.bf16 %v2867, %v2863
          %v3000 = vpack.c.bf16 %v2872, %v2868
          %v3001 = vpack.c.bf16 %v2873, %v2869
          %v3002 = vpack.c.bf16 %v2874, %v2870
          %v3003 = vpack.c.bf16 %v2875, %v2871
          %v3004 = vld [vmem:[#allocation10] sm:$0xf]
          %v3005 = vld [vmem:[#allocation10 + $0x4] sm:$0xf]
          %v3006 = vld [vmem:[#allocation10 + $0x8] sm:$0xf]
          %v3007 = vld [vmem:[#allocation10 + $0xc] sm:$0xf]
          %v3008 = vld [vmem:[#allocation10 + $0x10] sm:$0xf]
          %v3009 = vld [vmem:[#allocation10 + $0x14] sm:$0xf]
          %v3010 = vld [vmem:[#allocation10 + $0x18] sm:$0xf]
          %v3011 = vld [vmem:[#allocation10 + $0x1c] sm:$0xf]
          %v3012 = vld [vmem:[#allocation10 + $0x20] sm:$0xf]
          %v3013 = vld [vmem:[#allocation10 + $0x24] sm:$0xf]
          %v3014 = vld [vmem:[#allocation10 + $0x28] sm:$0xf]
          %v3015 = vld [vmem:[#allocation10 + $0x2c] sm:$0xf]
          %v3016 = vld [vmem:[#allocation10 + $0x30] sm:$0xf]
          %v3017 = vld [vmem:[#allocation10 + $0x34] sm:$0xf]
          %v3018 = vld [vmem:[#allocation10 + $0x38] sm:$0xf]
          %v3019 = vld [vmem:[#allocation10 + $0x3c] sm:$0xf]
          %v3020 = vld [vmem:[#allocation10 + $0x40] sm:$0xf]
          %v3021 = vld [vmem:[#allocation10 + $0x44] sm:$0xf]
          %v3022 = vld [vmem:[#allocation10 + $0x48] sm:$0xf]
          %v3023 = vld [vmem:[#allocation10 + $0x4c] sm:$0xf]
          %v3024 = vld [vmem:[#allocation10 + $0x50] sm:$0xf]
          %v3025 = vld [vmem:[#allocation10 + $0x54] sm:$0xf]
          %v3026 = vld [vmem:[#allocation10 + $0x58] sm:$0xf]
          %v3027 = vld [vmem:[#allocation10 + $0x5c] sm:$0xf]
          %v3028 = vld [vmem:[#allocation10 + $0x60] sm:$0xf]
          %v3029 = vld [vmem:[#allocation10 + $0x64] sm:$0xf]
          %v3030 = vld [vmem:[#allocation10 + $0x68] sm:$0xf]
          %v3031 = vld [vmem:[#allocation10 + $0x6c] sm:$0xf]
          %v3032 = vld [vmem:[#allocation10 + $0x70] sm:$0xf]
          %v3033 = vld [vmem:[#allocation10 + $0x74] sm:$0xf]
          %v3034 = vld [vmem:[#allocation10 + $0x78] sm:$0xf]
          %v3035 = vld [vmem:[#allocation10 + $0x7c] sm:$0xf]
          %v3036 = vld [vmem:[#allocation10 + $0x80] sm:$0xf]
          %v3037 = vld [vmem:[#allocation10 + $0x84] sm:$0xf]
          %v3038 = vld [vmem:[#allocation10 + $0x88] sm:$0xf]
          %v3039 = vld [vmem:[#allocation10 + $0x8c] sm:$0xf]
          %v3040 = vld [vmem:[#allocation10 + $0x90] sm:$0xf]
          %v3041 = vld [vmem:[#allocation10 + $0x94] sm:$0xf]
          %v3042 = vld [vmem:[#allocation10 + $0x98] sm:$0xf]
          %v3043 = vld [vmem:[#allocation10 + $0x9c] sm:$0xf]
          %v3044 = vld [vmem:[#allocation10 + $0xa0] sm:$0xf]
          %v3045 = vld [vmem:[#allocation10 + $0xa4] sm:$0xf]
          %v3046 = vld [vmem:[#allocation10 + $0xa8] sm:$0xf]
          %v3047 = vld [vmem:[#allocation10 + $0xac] sm:$0xf]
          %v3048 = vld [vmem:[#allocation10 + $0xb0] sm:$0xf]
          %v3049 = vld [vmem:[#allocation10 + $0xb4] sm:$0xf]
          %v3050 = vld [vmem:[#allocation10 + $0xb8] sm:$0xf]
          %v3051 = vld [vmem:[#allocation10 + $0xbc] sm:$0xf]
          %v3052 = vld [vmem:[#allocation10 + $0xc0] sm:$0xf]
          %v3053 = vld [vmem:[#allocation10 + $0xc4] sm:$0xf]
          %v3054 = vld [vmem:[#allocation10 + $0xc8] sm:$0xf]
          %v3055 = vld [vmem:[#allocation10 + $0xcc] sm:$0xf]
          %v3056 = vld [vmem:[#allocation10 + $0xd0] sm:$0xf]
          %v3057 = vld [vmem:[#allocation10 + $0xd4] sm:$0xf]
          %v3058 = vld [vmem:[#allocation10 + $0xd8] sm:$0xf]
          %v3059 = vld [vmem:[#allocation10 + $0xdc] sm:$0xf]
          %v3060 = vld [vmem:[#allocation10 + $0xe0] sm:$0xf]
          %v3061 = vld [vmem:[#allocation10 + $0xe4] sm:$0xf]
          %v3062 = vld [vmem:[#allocation10 + $0xe8] sm:$0xf]
          %v3063 = vld [vmem:[#allocation10 + $0xec] sm:$0xf]
          %v3064 = vld [vmem:[#allocation10 + $0xf0] sm:$0xf]
          %v3065 = vld [vmem:[#allocation10 + $0xf4] sm:$0xf]
          %v3066 = vld [vmem:[#allocation10 + $0xf8] sm:$0xf]
          %v3067 = vld [vmem:[#allocation10 + $0xfc] sm:$0xf]
          %v3068 = vld [vmem:[%s5] sm:$0x1]
          %v3070 = vlaneseq
          %v3071 = vshrl.u32 %v3070, 7
          %v3072 = vsub.s32 0, %v3071
          %v3073 = vrot.slane %v3068, %v3072
          %v3139 = vunpack.c.l.b16 %v3004
          %v3140 = vunpack.c.l.b16 %v3005
          %v3141 = vunpack.c.l.b16 %v3006
          %v3142 = vunpack.c.l.b16 %v3007
          %v3143 = vunpack.c.l.b16 %v3008
          %v3144 = vunpack.c.l.b16 %v3009
          %v3145 = vunpack.c.l.b16 %v3010
          %v3146 = vunpack.c.l.b16 %v3011
          %v3147 = vunpack.c.l.b16 %v3012
          %v3148 = vunpack.c.l.b16 %v3013
          %v3149 = vunpack.c.l.b16 %v3014
          %v3150 = vunpack.c.l.b16 %v3015
          %v3151 = vunpack.c.l.b16 %v3016
          %v3152 = vunpack.c.l.b16 %v3017
          %v3153 = vunpack.c.l.b16 %v3018
          %v3154 = vunpack.c.l.b16 %v3019
          %v3155 = vunpack.c.l.b16 %v3020
          %v3156 = vunpack.c.l.b16 %v3021
          %v3157 = vunpack.c.l.b16 %v3022
          %v3158 = vunpack.c.l.b16 %v3023
          %v3159 = vunpack.c.l.b16 %v3024
          %v3160 = vunpack.c.l.b16 %v3025
          %v3161 = vunpack.c.l.b16 %v3026
          %v3162 = vunpack.c.l.b16 %v3027
          %v3163 = vunpack.c.l.b16 %v3028
          %v3164 = vunpack.c.l.b16 %v3029
          %v3165 = vunpack.c.l.b16 %v3030
          %v3166 = vunpack.c.l.b16 %v3031
          %v3167 = vunpack.c.l.b16 %v3032
          %v3168 = vunpack.c.l.b16 %v3033
          %v3169 = vunpack.c.l.b16 %v3034
          %v3170 = vunpack.c.l.b16 %v3035
          %v3171 = vunpack.c.l.b16 %v3036
          %v3172 = vunpack.c.l.b16 %v3037
          %v3173 = vunpack.c.l.b16 %v3038
          %v3174 = vunpack.c.l.b16 %v3039
          %v3175 = vunpack.c.l.b16 %v3040
          %v3176 = vunpack.c.l.b16 %v3041
          %v3177 = vunpack.c.l.b16 %v3042
          %v3178 = vunpack.c.l.b16 %v3043
          %v3179 = vunpack.c.l.b16 %v3044
          %v3180 = vunpack.c.l.b16 %v3045
          %v3181 = vunpack.c.l.b16 %v3046
          %v3182 = vunpack.c.l.b16 %v3047
          %v3183 = vunpack.c.l.b16 %v3048
          %v3184 = vunpack.c.l.b16 %v3049
          %v3185 = vunpack.c.l.b16 %v3050
          %v3186 = vunpack.c.l.b16 %v3051
          %v3187 = vunpack.c.l.b16 %v3052
          %v3188 = vunpack.c.l.b16 %v3053
          %v3189 = vunpack.c.l.b16 %v3054
          %v3190 = vunpack.c.l.b16 %v3055
          %v3191 = vunpack.c.l.b16 %v3056
          %v3192 = vunpack.c.l.b16 %v3057
          %v3193 = vunpack.c.l.b16 %v3058
          %v3194 = vunpack.c.l.b16 %v3059
          %v3195 = vunpack.c.l.b16 %v3060
          %v3196 = vunpack.c.l.b16 %v3061
          %v3197 = vunpack.c.l.b16 %v3062
          %v3198 = vunpack.c.l.b16 %v3063
          %v3199 = vunpack.c.l.b16 %v3064
          %v3200 = vunpack.c.l.b16 %v3065
          %v3201 = vunpack.c.l.b16 %v3066
          %v3202 = vunpack.c.l.b16 %v3067
          %v3203 = vpack.c.b16 %v3140, %v3139
          %v3204 = vpack.c.b16 %v3142, %v3141
          %v3205 = vpack.c.b16 %v3144, %v3143
          %v3206 = vpack.c.b16 %v3146, %v3145
          %v3207 = vpack.c.b16 %v3148, %v3147
          %v3208 = vpack.c.b16 %v3150, %v3149
          %v3209 = vpack.c.b16 %v3152, %v3151
          %v3210 = vpack.c.b16 %v3154, %v3153
          %v3211 = vpack.c.b16 %v3156, %v3155
          %v3212 = vpack.c.b16 %v3158, %v3157
          %v3213 = vpack.c.b16 %v3160, %v3159
          %v3214 = vpack.c.b16 %v3162, %v3161
          %v3215 = vpack.c.b16 %v3164, %v3163
          %v3216 = vpack.c.b16 %v3166, %v3165
          %v3217 = vpack.c.b16 %v3168, %v3167
          %v3218 = vpack.c.b16 %v3170, %v3169
          %v3219 = vpack.c.b16 %v3172, %v3171
          %v3220 = vpack.c.b16 %v3174, %v3173
          %v3221 = vpack.c.b16 %v3176, %v3175
          %v3222 = vpack.c.b16 %v3178, %v3177
          %v3223 = vpack.c.b16 %v3180, %v3179
          %v3224 = vpack.c.b16 %v3182, %v3181
          %v3225 = vpack.c.b16 %v3184, %v3183
          %v3226 = vpack.c.b16 %v3186, %v3185
          %v3227 = vpack.c.b16 %v3188, %v3187
          %v3228 = vpack.c.b16 %v3190, %v3189
          %v3229 = vpack.c.b16 %v3192, %v3191
          %v3230 = vpack.c.b16 %v3194, %v3193
          %v3231 = vpack.c.b16 %v3196, %v3195
          %v3232 = vpack.c.b16 %v3198, %v3197
          %v3233 = vpack.c.b16 %v3200, %v3199
          %v3234 = vpack.c.b16 %v3202, %v3201
          %3267 = vmatprep.subr.bf16.mxu0 0
          %3268 = vmatpush1.bf16.msra.mxu0 %v3203
          %3269 = vmatprep.subr.bf16.mxu0 0
          %3270 = vmatpush1.bf16.msra.mxu0 %v3204
          %3271 = vmatprep.subr.bf16.mxu0 0
          %3272 = vmatpush1.bf16.msra.mxu0 %v3205
          %3273 = vmatprep.subr.bf16.mxu0 0
          %3274 = vmatpush1.bf16.msra.mxu0 %v3206
          %3275 = vmatprep.subr.bf16.mxu0 0
          %3276 = vmatpush1.bf16.msra.mxu0 %v3207
          %3277 = vmatprep.subr.bf16.mxu0 0
          %3278 = vmatpush1.bf16.msra.mxu0 %v3208
          %3279 = vmatprep.subr.bf16.mxu0 0
          %3280 = vmatpush1.bf16.msra.mxu0 %v3209
          %3281 = vmatprep.subr.bf16.mxu0 0
          %3282 = vmatpush1.bf16.msra.mxu0 %v3210
          %3283 = vmatprep.subr.bf16.mxu0 0
          %3284 = vmatpush1.bf16.msra.mxu0 %v3211
          %3285 = vmatprep.subr.bf16.mxu0 0
          %3286 = vmatpush1.bf16.msra.mxu0 %v3212
          %3287 = vmatprep.subr.bf16.mxu0 0
          %3288 = vmatpush1.bf16.msra.mxu0 %v3213
          %3289 = vmatprep.subr.bf16.mxu0 0
          %3290 = vmatpush1.bf16.msra.mxu0 %v3214
          %3291 = vmatprep.subr.bf16.mxu0 0
          %3292 = vmatpush1.bf16.msra.mxu0 %v3215
          %3293 = vmatprep.subr.bf16.mxu0 0
          %3294 = vmatpush1.bf16.msra.mxu0 %v3216
          %3295 = vmatprep.subr.bf16.mxu0 0
          %3296 = vmatpush1.bf16.msra.mxu0 %v3217
          %3297 = vmatprep.subr.bf16.mxu0 0
          %3298 = vmatpush1.bf16.msra.mxu0 %v3218
          %3299 = vmatprep.mubr.bf16.mxu0 %v2877
          %3300 = vmatmul.mubr.bf16.gmra.mrb[0].mxu0 %v2876
          %v3301 = vpop.f32.mrb[0].mxu0
          %v3302 = vadd.f32 %v3073, %v3301
          %v3303 = vpop.f32.mrb[0].mxu0
          %v3304 = vpop.f32.mrb[0].mxu0
          %v3305 = vadd.f32 %v3073, %v3304
          %v3306 = vpop.f32.mrb[0].mxu0
          %3307 = vmatprep.mubr.bf16.mxu0 %v2881
          %3308 = vmatmul.mubr.bf16.gmra.mrb[0].mxu0 %v2880
          %v3309 = vpop.f32.mrb[0].mxu0
          %v3310 = vadd.f32 %v3073, %v3309
          %v3311 = vpop.f32.mrb[0].mxu0
          %v3312 = vpop.f32.mrb[0].mxu0
          %v3313 = vadd.f32 %v3073, %v3312
          %v3314 = vpop.f32.mrb[0].mxu0
          %3315 = vmatprep.mubr.bf16.mxu0 %v2885
          %3316 = vmatmul.mubr.bf16.gmra.mrb[0].mxu0 %v2884
          %v3317 = vpop.f32.mrb[0].mxu0
          %v3318 = vadd.f32 %v3073, %v3317
          %v3319 = vpop.f32.mrb[0].mxu0
          %v3320 = vpop.f32.mrb[0].mxu0
          %v3321 = vadd.f32 %v3073, %v3320
          %v3322 = vpop.f32.mrb[0].mxu0
          %3323 = vmatprep.mubr.bf16.mxu0 %v2889
          %3324 = vmatmul.mubr.bf16.gmra.mrb[0].mxu0 %v2888
          %v3325 = vpop.f32.mrb[0].mxu0
          %v3326 = vadd.f32 %v3073, %v3325
          %v3327 = vpop.f32.mrb[0].mxu0
          %v3328 = vpop.f32.mrb[0].mxu0
          %v3329 = vadd.f32 %v3073, %v3328
          %v3330 = vpop.f32.mrb[0].mxu0
          %3331 = vmatprep.mubr.bf16.mxu0 %v2893
          %3332 = vmatmul.mubr.bf16.gmra.mrb[0].mxu0 %v2892
          %v3333 = vpop.f32.mrb[0].mxu0
          %v3334 = vadd.f32 %v3073, %v3333
          %v3335 = vpop.f32.mrb[0].mxu0
          %v3336 = vpop.f32.mrb[0].mxu0
          %v3337 = vadd.f32 %v3073, %v3336
          %v3338 = vpop.f32.mrb[0].mxu0
          %3339 = vmatprep.mubr.bf16.mxu0 %v2897
          %3340 = vmatmul.mubr.bf16.gmra.mrb[0].mxu0 %v2896
          %v3341 = vpop.f32.mrb[0].mxu0
          %v3342 = vadd.f32 %v3073, %v3341
          %v3343 = vpop.f32.mrb[0].mxu0
          %v3344 = vpop.f32.mrb[0].mxu0
          %v3345 = vadd.f32 %v3073, %v3344
          %v3346 = vpop.f32.mrb[0].mxu0
          %3347 = vmatprep.mubr.bf16.mxu0 %v2901
          %3348 = vmatmul.mubr.bf16.gmra.mrb[0].mxu0 %v2900
          %v3349 = vpop.f32.mrb[0].mxu0
          %v3350 = vadd.f32 %v3073, %v3349
          %v3351 = vpop.f32.mrb[0].mxu0
          %v3352 = vpop.f32.mrb[0].mxu0
          %v3353 = vadd.f32 %v3073, %v3352
          %v3354 = vpop.f32.mrb[0].mxu0
          %3355 = vmatprep.mubr.bf16.mxu0 %v2905
          %3356 = vmatmul.mubr.bf16.gmra.mrb[0].mxu0 %v2904
          %v3357 = vpop.f32.mrb[0].mxu0
          %v3358 = vadd.f32 %v3073, %v3357
          %v3359 = vpop.f32.mrb[0].mxu0
          %v3360 = vpop.f32.mrb[0].mxu0
          %v3361 = vadd.f32 %v3073, %v3360
          %v3362 = vpop.f32.mrb[0].mxu0
          %3363 = vmatprep.mubr.bf16.mxu0 %v2909
          %3364 = vmatmul.mubr.bf16.gmra.mrb[0].mxu0 %v2908
          %v3365 = vpop.f32.mrb[0].mxu0
          %v3366 = vadd.f32 %v3073, %v3365
          %v3367 = vpop.f32.mrb[0].mxu0
          %v3368 = vpop.f32.mrb[0].mxu0
          %v3369 = vadd.f32 %v3073, %v3368
          %v3370 = vpop.f32.mrb[0].mxu0
          %3371 = vmatprep.mubr.bf16.mxu0 %v2913
          %3372 = vmatmul.mubr.bf16.gmra.mrb[0].mxu0 %v2912
          %v3373 = vpop.f32.mrb[0].mxu0
          %v3374 = vadd.f32 %v3073, %v3373
          %v3375 = vpop.f32.mrb[0].mxu0
          %v3376 = vpop.f32.mrb[0].mxu0
          %v3377 = vadd.f32 %v3073, %v3376
          %v3378 = vpop.f32.mrb[0].mxu0
          %3379 = vmatprep.mubr.bf16.mxu0 %v2917
          %3380 = vmatmul.mubr.bf16.gmra.mrb[0].mxu0 %v2916
          %v3381 = vpop.f32.mrb[0].mxu0
          %v3382 = vadd.f32 %v3073, %v3381
          %v3383 = vpop.f32.mrb[0].mxu0
          %v3384 = vpop.f32.mrb[0].mxu0
          %v3385 = vadd.f32 %v3073, %v3384
          %v3386 = vpop.f32.mrb[0].mxu0
          %3387 = vmatprep.mubr.bf16.mxu0 %v2921
          %3388 = vmatmul.mubr.bf16.gmra.mrb[0].mxu0 %v2920
          %v3389 = vpop.f32.mrb[0].mxu0
          %v3390 = vadd.f32 %v3073, %v3389
          %v3391 = vpop.f32.mrb[0].mxu0
          %v3392 = vpop.f32.mrb[0].mxu0
          %v3393 = vadd.f32 %v3073, %v3392
          %v3394 = vpop.f32.mrb[0].mxu0
          %3395 = vmatprep.mubr.bf16.mxu0 %v2925
          %3396 = vmatmul.mubr.bf16.gmra.mrb[0].mxu0 %v2924
          %v3397 = vpop.f32.mrb[0].mxu0
          %v3398 = vadd.f32 %v3073, %v3397
          %v3399 = vpop.f32.mrb[0].mxu0
          %v3400 = vpop.f32.mrb[0].mxu0
          %v3401 = vadd.f32 %v3073, %v3400
          %v3402 = vpop.f32.mrb[0].mxu0
          %3403 = vmatprep.mubr.bf16.mxu0 %v2929
          %3404 = vmatmul.mubr.bf16.gmra.mrb[0].mxu0 %v2928
          %v3405 = vpop.f32.mrb[0].mxu0
          %v3406 = vadd.f32 %v3073, %v3405
          %v3407 = vpop.f32.mrb[0].mxu0
          %v3408 = vpop.f32.mrb[0].mxu0
          %v3409 = vadd.f32 %v3073, %v3408
          %v3410 = vpop.f32.mrb[0].mxu0
          %3411 = vmatprep.mubr.bf16.mxu0 %v2933
          %3412 = vmatmul.mubr.bf16.gmra.mrb[0].mxu0 %v2932
          %v3413 = vpop.f32.mrb[0].mxu0
          %v3414 = vadd.f32 %v3073, %v3413
          %v3415 = vpop.f32.mrb[0].mxu0
          %v3416 = vpop.f32.mrb[0].mxu0
          %v3417 = vadd.f32 %v3073, %v3416
          %v3418 = vpop.f32.mrb[0].mxu0
          %3419 = vmatprep.mubr.bf16.mxu0 %v2937
          %3420 = vmatmul.mubr.bf16.gmra.mrb[0].mxu0 %v2936
          %v3421 = vpop.f32.mrb[0].mxu0
          %v3422 = vadd.f32 %v3073, %v3421
          %v3423 = vpop.f32.mrb[0].mxu0
          %v3424 = vpop.f32.mrb[0].mxu0
          %v3425 = vadd.f32 %v3073, %v3424
          %v3426 = vpop.f32.mrb[0].mxu0
          %3427 = vmatprep.mubr.bf16.mxu0 %v2941
          %3428 = vmatmul.mubr.bf16.gmra.mrb[0].mxu0 %v2940
          %v3429 = vpop.f32.mrb[0].mxu0
          %v3430 = vadd.f32 %v3073, %v3429
          %v3431 = vpop.f32.mrb[0].mxu0
          %v3432 = vpop.f32.mrb[0].mxu0
          %v3433 = vadd.f32 %v3073, %v3432
          %v3434 = vpop.f32.mrb[0].mxu0
          %3435 = vmatprep.mubr.bf16.mxu0 %v2945
          %3436 = vmatmul.mubr.bf16.gmra.mrb[0].mxu0 %v2944
          %v3437 = vpop.f32.mrb[0].mxu0
          %v3438 = vadd.f32 %v3073, %v3437
          %v3439 = vpop.f32.mrb[0].mxu0
          %v3440 = vpop.f32.mrb[0].mxu0
          %v3441 = vadd.f32 %v3073, %v3440
          %v3442 = vpop.f32.mrb[0].mxu0
          %3443 = vmatprep.mubr.bf16.mxu0 %v2949
          %3444 = vmatmul.mubr.bf16.gmra.mrb[0].mxu0 %v2948
          %v3445 = vpop.f32.mrb[0].mxu0
          %v3446 = vadd.f32 %v3073, %v3445
          %v3447 = vpop.f32.mrb[0].mxu0
          %v3448 = vpop.f32.mrb[0].mxu0
          %v3449 = vadd.f32 %v3073, %v3448
          %v3450 = vpop.f32.mrb[0].mxu0
          %3451 = vmatprep.mubr.bf16.mxu0 %v2953
          %3452 = vmatmul.mubr.bf16.gmra.mrb[0].mxu0 %v2952
          %v3453 = vpop.f32.mrb[0].mxu0
          %v3454 = vadd.f32 %v3073, %v3453
          %v3455 = vpop.f32.mrb[0].mxu0
          %v3456 = vpop.f32.mrb[0].mxu0
          %v3457 = vadd.f32 %v3073, %v3456
          %v3458 = vpop.f32.mrb[0].mxu0
          %3459 = vmatprep.mubr.bf16.mxu0 %v2957
          %3460 = vmatmul.mubr.bf16.gmra.mrb[0].mxu0 %v2956
          %v3461 = vpop.f32.mrb[0].mxu0
          %v3462 = vadd.f32 %v3073, %v3461
          %v3463 = vpop.f32.mrb[0].mxu0
          %v3464 = vpop.f32.mrb[0].mxu0
          %v3465 = vadd.f32 %v3073, %v3464
          %v3466 = vpop.f32.mrb[0].mxu0
          %3467 = vmatprep.mubr.bf16.mxu0 %v2961
          %3468 = vmatmul.mubr.bf16.gmra.mrb[0].mxu0 %v2960
          %v3469 = vpop.f32.mrb[0].mxu0
          %v3470 = vadd.f32 %v3073, %v3469
          %v3471 = vpop.f32.mrb[0].mxu0
          %v3472 = vpop.f32.mrb[0].mxu0
          %v3473 = vadd.f32 %v3073, %v3472
          %v3474 = vpop.f32.mrb[0].mxu0
          %3475 = vmatprep.mubr.bf16.mxu0 %v2965
          %3476 = vmatmul.mubr.bf16.gmra.mrb[0].mxu0 %v2964
          %v3477 = vpop.f32.mrb[0].mxu0
          %v3478 = vadd.f32 %v3073, %v3477
          %v3479 = vpop.f32.mrb[0].mxu0
          %v3480 = vpop.f32.mrb[0].mxu0
          %v3481 = vadd.f32 %v3073, %v3480
          %v3482 = vpop.f32.mrb[0].mxu0
          %3483 = vmatprep.mubr.bf16.mxu0 %v2969
          %3484 = vmatmul.mubr.bf16.gmra.mrb[0].mxu0 %v2968
          %v3485 = vpop.f32.mrb[0].mxu0
          %v3486 = vadd.f32 %v3073, %v3485
          %v3487 = vpop.f32.mrb[0].mxu0
          %v3488 = vpop.f32.mrb[0].mxu0
          %v3489 = vadd.f32 %v3073, %v3488
          %v3490 = vpop.f32.mrb[0].mxu0
          %3491 = vmatprep.mubr.bf16.mxu0 %v2973
          %3492 = vmatmul.mubr.bf16.gmra.mrb[0].mxu0 %v2972
          %v3493 = vpop.f32.mrb[0].mxu0
          %v3494 = vadd.f32 %v3073, %v3493
          %v3495 = vpop.f32.mrb[0].mxu0
          %v3496 = vpop.f32.mrb[0].mxu0
          %v3497 = vadd.f32 %v3073, %v3496
          %v3498 = vpop.f32.mrb[0].mxu0
          %3499 = vmatprep.mubr.bf16.mxu0 %v2977
          %3500 = vmatmul.mubr.bf16.gmra.mrb[0].mxu0 %v2976
          %v3501 = vpop.f32.mrb[0].mxu0
          %v3502 = vadd.f32 %v3073, %v3501
          %v3503 = vpop.f32.mrb[0].mxu0
          %v3504 = vpop.f32.mrb[0].mxu0
          %v3505 = vadd.f32 %v3073, %v3504
          %v3506 = vpop.f32.mrb[0].mxu0
          %3507 = vmatprep.mubr.bf16.mxu0 %v2981
          %3508 = vmatmul.mubr.bf16.gmra.mrb[0].mxu0 %v2980
          %v3509 = vpop.f32.mrb[0].mxu0
          %v3510 = vadd.f32 %v3073, %v3509
          %v3511 = vpop.f32.mrb[0].mxu0
          %v3512 = vpop.f32.mrb[0].mxu0
          %v3513 = vadd.f32 %v3073, %v3512
          %v3514 = vpop.f32.mrb[0].mxu0
          %3515 = vmatprep.mubr.bf16.mxu0 %v2985
          %3516 = vmatmul.mubr.bf16.gmra.mrb[0].mxu0 %v2984
          %v3517 = vpop.f32.mrb[0].mxu0
          %v3518 = vadd.f32 %v3073, %v3517
          %v3519 = vpop.f32.mrb[0].mxu0
          %v3520 = vpop.f32.mrb[0].mxu0
          %v3521 = vadd.f32 %v3073, %v3520
          %v3522 = vpop.f32.mrb[0].mxu0
          %3523 = vmatprep.mubr.bf16.mxu0 %v2989
          %3524 = vmatmul.mubr.bf16.gmra.mrb[0].mxu0 %v2988
          %v3525 = vpop.f32.mrb[0].mxu0
          %v3526 = vadd.f32 %v3073, %v3525
          %v3527 = vpop.f32.mrb[0].mxu0
          %v3528 = vpop.f32.mrb[0].mxu0
          %v3529 = vadd.f32 %v3073, %v3528
          %v3530 = vpop.f32.mrb[0].mxu0
          %3531 = vmatprep.mubr.bf16.mxu0 %v2993
          %3532 = vmatmul.mubr.bf16.gmra.mrb[0].mxu0 %v2992
          %v3533 = vpop.f32.mrb[0].mxu0
          %v3534 = vadd.f32 %v3073, %v3533
          %v3535 = vpop.f32.mrb[0].mxu0
          %v3536 = vpop.f32.mrb[0].mxu0
          %v3537 = vadd.f32 %v3073, %v3536
          %v3538 = vpop.f32.mrb[0].mxu0
          %3539 = vmatprep.mubr.bf16.mxu0 %v2997
          %3540 = vmatmul.mubr.bf16.gmra.mrb[0].mxu0 %v2996
          %v3541 = vpop.f32.mrb[0].mxu0
          %v3542 = vadd.f32 %v3073, %v3541
          %v3543 = vpop.f32.mrb[0].mxu0
          %v3544 = vpop.f32.mrb[0].mxu0
          %v3545 = vadd.f32 %v3073, %v3544
          %v3546 = vpop.f32.mrb[0].mxu0
          %3547 = vmatprep.mubr.bf16.mxu0 %v3001
          %3548 = vmatmul.mubr.bf16.gmra.mrb[0].mxu0 %v3000
          %v3549 = vpop.f32.mrb[0].mxu0
          %v3550 = vadd.f32 %v3073, %v3549
          %v3551 = vpop.f32.mrb[0].mxu0
          %v3552 = vpop.f32.mrb[0].mxu0
          %v3553 = vadd.f32 %v3073, %v3552
          %v3554 = vpop.f32.mrb[0].mxu0
          %3555 = vdwg.mxu0
          %3556 = vmatprep.subr.bf16.mxu0 0
          %3557 = vmatpush1.bf16.msra.mxu0 %v3219
          %3558 = vmatprep.subr.bf16.mxu0 0
          %3559 = vmatpush1.bf16.msra.mxu0 %v3220
          %3560 = vmatprep.subr.bf16.mxu0 0
          %3561 = vmatpush1.bf16.msra.mxu0 %v3221
          %3562 = vmatprep.subr.bf16.mxu0 0
          %3563 = vmatpush1.bf16.msra.mxu0 %v3222
          %3564 = vmatprep.subr.bf16.mxu0 0
          %3565 = vmatpush1.bf16.msra.mxu0 %v3223
          %3566 = vmatprep.subr.bf16.mxu0 0
          %3567 = vmatpush1.bf16.msra.mxu0 %v3224
          %3568 = vmatprep.subr.bf16.mxu0 0
          %3569 = vmatpush1.bf16.msra.mxu0 %v3225
          %3570 = vmatprep.subr.bf16.mxu0 0
          %3571 = vmatpush1.bf16.msra.mxu0 %v3226
          %3572 = vmatprep.subr.bf16.mxu0 0
          %3573 = vmatpush1.bf16.msra.mxu0 %v3227
          %3574 = vmatprep.subr.bf16.mxu0 0
          %3575 = vmatpush1.bf16.msra.mxu0 %v3228
          %3576 = vmatprep.subr.bf16.mxu0 0
          %3577 = vmatpush1.bf16.msra.mxu0 %v3229
          %3578 = vmatprep.subr.bf16.mxu0 0
          %3579 = vmatpush1.bf16.msra.mxu0 %v3230
          %3580 = vmatprep.subr.bf16.mxu0 0
          %3581 = vmatpush1.bf16.msra.mxu0 %v3231
          %3582 = vmatprep.subr.bf16.mxu0 0
          %3583 = vmatpush1.bf16.msra.mxu0 %v3232
          %3584 = vmatprep.subr.bf16.mxu0 0
          %3585 = vmatpush1.bf16.msra.mxu0 %v3233
          %3586 = vmatprep.subr.bf16.mxu0 0
          %3587 = vmatpush1.bf16.msra.mxu0 %v3234
          %3588 = vmatprep.mubr.bf16.mxu0 %v2879
          %3589 = vmatmul.mubr.bf16.gmra.mrb[0].mxu0 %v2878
          %v3590 = vpop.f32.mrb[0].mxu0
          %v3591 = vadd.f32 %v3302, %v3590
          %v3592 = vpop.f32.mrb[0].mxu0
          %v3593 = vpop.f32.mrb[0].mxu0
          %v3594 = vadd.f32 %v3305, %v3593
          %v3595 = vpop.f32.mrb[0].mxu0
          %3596 = vmatprep.mubr.bf16.mxu0 %v2883
          %3597 = vmatmul.mubr.bf16.gmra.mrb[0].mxu0 %v2882
          %v3598 = vpop.f32.mrb[0].mxu0
          %v3599 = vadd.f32 %v3310, %v3598
          %v3600 = vpop.f32.mrb[0].mxu0
          %v3601 = vpop.f32.mrb[0].mxu0
          %v3602 = vadd.f32 %v3313, %v3601
          %v3603 = vpop.f32.mrb[0].mxu0
          %3604 = vmatprep.mubr.bf16.mxu0 %v2887
          %3605 = vmatmul.mubr.bf16.gmra.mrb[0].mxu0 %v2886
          %v3606 = vpop.f32.mrb[0].mxu0
          %v3607 = vadd.f32 %v3318, %v3606
          %v3608 = vpop.f32.mrb[0].mxu0
          %v3609 = vpop.f32.mrb[0].mxu0
          %v3610 = vadd.f32 %v3321, %v3609
          %v3611 = vpop.f32.mrb[0].mxu0
          %3612 = vmatprep.mubr.bf16.mxu0 %v2891
          %3613 = vmatmul.mubr.bf16.gmra.mrb[0].mxu0 %v2890
          %v3614 = vpop.f32.mrb[0].mxu0
          %v3615 = vadd.f32 %v3326, %v3614
          %v3616 = vpop.f32.mrb[0].mxu0
          %v3617 = vpop.f32.mrb[0].mxu0
          %v3618 = vadd.f32 %v3329, %v3617
          %v3619 = vpop.f32.mrb[0].mxu0
          %3620 = vmatprep.mubr.bf16.mxu0 %v2895
          %3621 = vmatmul.mubr.bf16.gmra.mrb[0].mxu0 %v2894
          %v3622 = vpop.f32.mrb[0].mxu0
          %v3623 = vadd.f32 %v3334, %v3622
          %v3624 = vpop.f32.mrb[0].mxu0
          %v3625 = vpop.f32.mrb[0].mxu0
          %v3626 = vadd.f32 %v3337, %v3625
          %v3627 = vpop.f32.mrb[0].mxu0
          %3628 = vmatprep.mubr.bf16.mxu0 %v2899
          %3629 = vmatmul.mubr.bf16.gmra.mrb[0].mxu0 %v2898
          %v3630 = vpop.f32.mrb[0].mxu0
          %v3631 = vadd.f32 %v3342, %v3630
          %v3632 = vpop.f32.mrb[0].mxu0
          %v3633 = vpop.f32.mrb[0].mxu0
          %v3634 = vadd.f32 %v3345, %v3633
          %v3635 = vpop.f32.mrb[0].mxu0
          %3636 = vmatprep.mubr.bf16.mxu0 %v2903
          %3637 = vmatmul.mubr.bf16.gmra.mrb[0].mxu0 %v2902
          %v3638 = vpop.f32.mrb[0].mxu0
          %v3639 = vadd.f32 %v3350, %v3638
          %v3640 = vpop.f32.mrb[0].mxu0
          %v3641 = vpop.f32.mrb[0].mxu0
          %v3642 = vadd.f32 %v3353, %v3641
          %v3643 = vpop.f32.mrb[0].mxu0
          %3644 = vmatprep.mubr.bf16.mxu0 %v2907
          %3645 = vmatmul.mubr.bf16.gmra.mrb[0].mxu0 %v2906
          %v3646 = vpop.f32.mrb[0].mxu0
          %v3647 = vadd.f32 %v3358, %v3646
          %v3648 = vpop.f32.mrb[0].mxu0
          %v3649 = vpop.f32.mrb[0].mxu0
          %v3650 = vadd.f32 %v3361, %v3649
          %v3651 = vpop.f32.mrb[0].mxu0
          %3652 = vmatprep.mubr.bf16.mxu0 %v2911
          %3653 = vmatmul.mubr.bf16.gmra.mrb[0].mxu0 %v2910
          %v3654 = vpop.f32.mrb[0].mxu0
          %v3655 = vadd.f32 %v3366, %v3654
          %v3656 = vpop.f32.mrb[0].mxu0
          %v3657 = vpop.f32.mrb[0].mxu0
          %v3658 = vadd.f32 %v3369, %v3657
          %v3659 = vpop.f32.mrb[0].mxu0
          %3660 = vmatprep.mubr.bf16.mxu0 %v2915
          %3661 = vmatmul.mubr.bf16.gmra.mrb[0].mxu0 %v2914
          %v3662 = vpop.f32.mrb[0].mxu0
          %v3663 = vadd.f32 %v3374, %v3662
          %v3664 = vpop.f32.mrb[0].mxu0
          %v3665 = vpop.f32.mrb[0].mxu0
          %v3666 = vadd.f32 %v3377, %v3665
          %v3667 = vpop.f32.mrb[0].mxu0
          %3668 = vmatprep.mubr.bf16.mxu0 %v2919
          %3669 = vmatmul.mubr.bf16.gmra.mrb[0].mxu0 %v2918
          %v3670 = vpop.f32.mrb[0].mxu0
          %v3671 = vadd.f32 %v3382, %v3670
          %v3672 = vpop.f32.mrb[0].mxu0
          %v3673 = vpop.f32.mrb[0].mxu0
          %v3674 = vadd.f32 %v3385, %v3673
          %v3675 = vpop.f32.mrb[0].mxu0
          %3676 = vmatprep.mubr.bf16.mxu0 %v2923
          %3677 = vmatmul.mubr.bf16.gmra.mrb[0].mxu0 %v2922
          %v3678 = vpop.f32.mrb[0].mxu0
          %v3679 = vadd.f32 %v3390, %v3678
          %v3680 = vpop.f32.mrb[0].mxu0
          %v3681 = vpop.f32.mrb[0].mxu0
          %v3682 = vadd.f32 %v3393, %v3681
          %v3683 = vpop.f32.mrb[0].mxu0
          %3684 = vmatprep.mubr.bf16.mxu0 %v2927
          %3685 = vmatmul.mubr.bf16.gmra.mrb[0].mxu0 %v2926
          %v3686 = vpop.f32.mrb[0].mxu0
          %v3687 = vadd.f32 %v3398, %v3686
          %v3688 = vpop.f32.mrb[0].mxu0
          %v3689 = vpop.f32.mrb[0].mxu0
          %v3690 = vadd.f32 %v3401, %v3689
          %v3691 = vpop.f32.mrb[0].mxu0
          %3692 = vmatprep.mubr.bf16.mxu0 %v2931
          %3693 = vmatmul.mubr.bf16.gmra.mrb[0].mxu0 %v2930
          %v3694 = vpop.f32.mrb[0].mxu0
          %v3695 = vadd.f32 %v3406, %v3694
          %v3696 = vpop.f32.mrb[0].mxu0
          %v3697 = vpop.f32.mrb[0].mxu0
          %v3698 = vadd.f32 %v3409, %v3697
          %v3699 = vpop.f32.mrb[0].mxu0
          %3700 = vmatprep.mubr.bf16.mxu0 %v2935
          %3701 = vmatmul.mubr.bf16.gmra.mrb[0].mxu0 %v2934
          %v3702 = vpop.f32.mrb[0].mxu0
          %v3703 = vadd.f32 %v3414, %v3702
          %v3704 = vpop.f32.mrb[0].mxu0
          %v3705 = vpop.f32.mrb[0].mxu0
          %v3706 = vadd.f32 %v3417, %v3705
          %v3707 = vpop.f32.mrb[0].mxu0
          %3708 = vmatprep.mubr.bf16.mxu0 %v2939
          %3709 = vmatmul.mubr.bf16.gmra.mrb[0].mxu0 %v2938
          %v3710 = vpop.f32.mrb[0].mxu0
          %v3711 = vadd.f32 %v3422, %v3710
          %v3712 = vpop.f32.mrb[0].mxu0
          %v3713 = vpop.f32.mrb[0].mxu0
          %v3714 = vadd.f32 %v3425, %v3713
          %v3715 = vpop.f32.mrb[0].mxu0
          %3716 = vmatprep.mubr.bf16.mxu0 %v2943
          %3717 = vmatmul.mubr.bf16.gmra.mrb[0].mxu0 %v2942
          %v3718 = vpop.f32.mrb[0].mxu0
          %v3719 = vadd.f32 %v3430, %v3718
          %v3720 = vpop.f32.mrb[0].mxu0
          %v3721 = vpop.f32.mrb[0].mxu0
          %v3722 = vadd.f32 %v3433, %v3721
          %v3723 = vpop.f32.mrb[0].mxu0
          %3724 = vmatprep.mubr.bf16.mxu0 %v2947
          %3725 = vmatmul.mubr.bf16.gmra.mrb[0].mxu0 %v2946
          %v3726 = vpop.f32.mrb[0].mxu0
          %v3727 = vadd.f32 %v3438, %v3726
          %v3728 = vpop.f32.mrb[0].mxu0
          %v3729 = vpop.f32.mrb[0].mxu0
          %v3730 = vadd.f32 %v3441, %v3729
          %v3731 = vpop.f32.mrb[0].mxu0
          %3732 = vmatprep.mubr.bf16.mxu0 %v2951
          %3733 = vmatmul.mubr.bf16.gmra.mrb[0].mxu0 %v2950
          %v3734 = vpop.f32.mrb[0].mxu0
          %v3735 = vadd.f32 %v3446, %v3734
          %v3736 = vpop.f32.mrb[0].mxu0
          %v3737 = vpop.f32.mrb[0].mxu0
          %v3738 = vadd.f32 %v3449, %v3737
          %v3739 = vpop.f32.mrb[0].mxu0
          %3740 = vmatprep.mubr.bf16.mxu0 %v2955
          %3741 = vmatmul.mubr.bf16.gmra.mrb[0].mxu0 %v2954
          %v3742 = vpop.f32.mrb[0].mxu0
          %v3743 = vadd.f32 %v3454, %v3742
          %v3744 = vpop.f32.mrb[0].mxu0
          %v3745 = vpop.f32.mrb[0].mxu0
          %v3746 = vadd.f32 %v3457, %v3745
          %v3747 = vpop.f32.mrb[0].mxu0
          %3748 = vmatprep.mubr.bf16.mxu0 %v2959
          %3749 = vmatmul.mubr.bf16.gmra.mrb[0].mxu0 %v2958
          %v3750 = vpop.f32.mrb[0].mxu0
          %v3751 = vadd.f32 %v3462, %v3750
          %v3752 = vpop.f32.mrb[0].mxu0
          %v3753 = vpop.f32.mrb[0].mxu0
          %v3754 = vadd.f32 %v3465, %v3753
          %v3755 = vpop.f32.mrb[0].mxu0
          %3756 = vmatprep.mubr.bf16.mxu0 %v2963
          %3757 = vmatmul.mubr.bf16.gmra.mrb[0].mxu0 %v2962
          %v3758 = vpop.f32.mrb[0].mxu0
          %v3759 = vadd.f32 %v3470, %v3758
          %v3760 = vpop.f32.mrb[0].mxu0
          %v3761 = vpop.f32.mrb[0].mxu0
          %v3762 = vadd.f32 %v3473, %v3761
          %v3763 = vpop.f32.mrb[0].mxu0
          %3764 = vmatprep.mubr.bf16.mxu0 %v2967
          %3765 = vmatmul.mubr.bf16.gmra.mrb[0].mxu0 %v2966
          %v3766 = vpop.f32.mrb[0].mxu0
          %v3767 = vadd.f32 %v3478, %v3766
          %v3768 = vpop.f32.mrb[0].mxu0
          %v3769 = vpop.f32.mrb[0].mxu0
          %v3770 = vadd.f32 %v3481, %v3769
          %v3771 = vpop.f32.mrb[0].mxu0
          %3772 = vmatprep.mubr.bf16.mxu0 %v2971
          %3773 = vmatmul.mubr.bf16.gmra.mrb[0].mxu0 %v2970
          %v3774 = vpop.f32.mrb[0].mxu0
          %v3775 = vadd.f32 %v3486, %v3774
          %v3776 = vpop.f32.mrb[0].mxu0
          %v3777 = vpop.f32.mrb[0].mxu0
          %v3778 = vadd.f32 %v3489, %v3777
          %v3779 = vpop.f32.mrb[0].mxu0
          %3780 = vmatprep.mubr.bf16.mxu0 %v2975
          %3781 = vmatmul.mubr.bf16.gmra.mrb[0].mxu0 %v2974
          %v3782 = vpop.f32.mrb[0].mxu0
          %v3783 = vadd.f32 %v3494, %v3782
          %v3784 = vpop.f32.mrb[0].mxu0
          %v3785 = vpop.f32.mrb[0].mxu0
          %v3786 = vadd.f32 %v3497, %v3785
          %v3787 = vpop.f32.mrb[0].mxu0
          %3788 = vmatprep.mubr.bf16.mxu0 %v2979
          %3789 = vmatmul.mubr.bf16.gmra.mrb[0].mxu0 %v2978
          %v3790 = vpop.f32.mrb[0].mxu0
          %v3791 = vadd.f32 %v3502, %v3790
          %v3792 = vpop.f32.mrb[0].mxu0
          %v3793 = vpop.f32.mrb[0].mxu0
          %v3794 = vadd.f32 %v3505, %v3793
          %v3795 = vpop.f32.mrb[0].mxu0
          %3796 = vmatprep.mubr.bf16.mxu0 %v2983
          %3797 = vmatmul.mubr.bf16.gmra.mrb[0].mxu0 %v2982
          %v3798 = vpop.f32.mrb[0].mxu0
          %v3799 = vadd.f32 %v3510, %v3798
          %v3800 = vpop.f32.mrb[0].mxu0
          %v3801 = vpop.f32.mrb[0].mxu0
          %v3802 = vadd.f32 %v3513, %v3801
          %v3803 = vpop.f32.mrb[0].mxu0
          %3804 = vmatprep.mubr.bf16.mxu0 %v2987
          %3805 = vmatmul.mubr.bf16.gmra.mrb[0].mxu0 %v2986
          %v3806 = vpop.f32.mrb[0].mxu0
          %v3807 = vadd.f32 %v3518, %v3806
          %v3808 = vpop.f32.mrb[0].mxu0
          %v3809 = vpop.f32.mrb[0].mxu0
          %v3810 = vadd.f32 %v3521, %v3809
          %v3811 = vpop.f32.mrb[0].mxu0
          %3812 = vmatprep.mubr.bf16.mxu0 %v2991
          %3813 = vmatmul.mubr.bf16.gmra.mrb[0].mxu0 %v2990
          %v3814 = vpop.f32.mrb[0].mxu0
          %v3815 = vadd.f32 %v3526, %v3814
          %v3816 = vpop.f32.mrb[0].mxu0
          %v3817 = vpop.f32.mrb[0].mxu0
          %v3818 = vadd.f32 %v3529, %v3817
          %v3819 = vpop.f32.mrb[0].mxu0
          %3820 = vmatprep.mubr.bf16.mxu0 %v2995
          %3821 = vmatmul.mubr.bf16.gmra.mrb[0].mxu0 %v2994
          %v3822 = vpop.f32.mrb[0].mxu0
          %v3823 = vadd.f32 %v3534, %v3822
          %v3824 = vpop.f32.mrb[0].mxu0
          %v3825 = vpop.f32.mrb[0].mxu0
          %v3826 = vadd.f32 %v3537, %v3825
          %v3827 = vpop.f32.mrb[0].mxu0
          %3828 = vmatprep.mubr.bf16.mxu0 %v2999
          %3829 = vmatmul.mubr.bf16.gmra.mrb[0].mxu0 %v2998
          %v3830 = vpop.f32.mrb[0].mxu0
          %v3831 = vadd.f32 %v3542, %v3830
          %v3832 = vpop.f32.mrb[0].mxu0
          %v3833 = vpop.f32.mrb[0].mxu0
          %v3834 = vadd.f32 %v3545, %v3833
          %v3835 = vpop.f32.mrb[0].mxu0
          %3836 = vmatprep.mubr.bf16.mxu0 %v3003
          %3837 = vmatmul.mubr.bf16.gmra.mrb[0].mxu0 %v3002
          %v3838 = vpop.f32.mrb[0].mxu0
          %v3839 = vadd.f32 %v3550, %v3838
          %v3840 = vpop.f32.mrb[0].mxu0
          %v3841 = vpop.f32.mrb[0].mxu0
          %v3842 = vadd.f32 %v3553, %v3841
          %v3843 = vpop.f32.mrb[0].mxu0
          %3844 = vdwg.mxu0
          %3845 = vst [vmem:[#allocation11] sm:$0xff] %v3591
          %3846 = vst [vmem:[#allocation11 + $0x8] sm:$0xff] %v3594
          %3847 = vst [vmem:[#allocation11 + $0x10] sm:$0xff] %v3599
          %3848 = vst [vmem:[#allocation11 + $0x18] sm:$0xff] %v3602
          %3849 = vst [vmem:[#allocation11 + $0x20] sm:$0xff] %v3607
          %3850 = vst [vmem:[#allocation11 + $0x28] sm:$0xff] %v3610
          %3851 = vst [vmem:[#allocation11 + $0x30] sm:$0xff] %v3615
          %3852 = vst [vmem:[#allocation11 + $0x38] sm:$0xff] %v3618
          %3853 = vst [vmem:[#allocation11 + $0x40] sm:$0xff] %v3623
          %3854 = vst [vmem:[#allocation11 + $0x48] sm:$0xff] %v3626
          %3855 = vst [vmem:[#allocation11 + $0x50] sm:$0xff] %v3631
          %3856 = vst [vmem:[#allocation11 + $0x58] sm:$0xff] %v3634
          %3857 = vst [vmem:[#allocation11 + $0x60] sm:$0xff] %v3639
          %3858 = vst [vmem:[#allocation11 + $0x68] sm:$0xff] %v3642
          %3859 = vst [vmem:[#allocation11 + $0x70] sm:$0xff] %v3647
          %3860 = vst [vmem:[#allocation11 + $0x78] sm:$0xff] %v3650
          %3861 = vst [vmem:[#allocation11 + $0x80] sm:$0xff] %v3655
          %3862 = vst [vmem:[#allocation11 + $0x88] sm:$0xff] %v3658
          %3863 = vst [vmem:[#allocation11 + $0x90] sm:$0xff] %v3663
          %3864 = vst [vmem:[#allocation11 + $0x98] sm:$0xff] %v3666
          %3865 = vst [vmem:[#allocation11 + $0xa0] sm:$0xff] %v3671
          %3866 = vst [vmem:[#allocation11 + $0xa8] sm:$0xff] %v3674
          %3867 = vst [vmem:[#allocation11 + $0xb0] sm:$0xff] %v3679
          %3868 = vst [vmem:[#allocation11 + $0xb8] sm:$0xff] %v3682
          %3869 = vst [vmem:[#allocation11 + $0xc0] sm:$0xff] %v3687
          %3870 = vst [vmem:[#allocation11 + $0xc8] sm:$0xff] %v3690
          %3871 = vst [vmem:[#allocation11 + $0xd0] sm:$0xff] %v3695
          %3872 = vst [vmem:[#allocation11 + $0xd8] sm:$0xff] %v3698
          %3873 = vst [vmem:[#allocation11 + $0xe0] sm:$0xff] %v3703
          %3874 = vst [vmem:[#allocation11 + $0xe8] sm:$0xff] %v3706
          %3875 = vst [vmem:[#allocation11 + $0xf0] sm:$0xff] %v3711
          %3876 = vst [vmem:[#allocation11 + $0xf8] sm:$0xff] %v3714
          %3877 = vst [vmem:[#allocation11 + $0x100] sm:$0xff] %v3719
          %3878 = vst [vmem:[#allocation11 + $0x108] sm:$0xff] %v3722
          %3879 = vst [vmem:[#allocation11 + $0x110] sm:$0xff] %v3727
          %3880 = vst [vmem:[#allocation11 + $0x118] sm:$0xff] %v3730
          %3881 = vst [vmem:[#allocation11 + $0x120] sm:$0xff] %v3735
          %3882 = vst [vmem:[#allocation11 + $0x128] sm:$0xff] %v3738
          %3883 = vst [vmem:[#allocation11 + $0x130] sm:$0xff] %v3743
          %3884 = vst [vmem:[#allocation11 + $0x138] sm:$0xff] %v3746
          %3885 = vst [vmem:[#allocation11 + $0x140] sm:$0xff] %v3751
          %3886 = vst [vmem:[#allocation11 + $0x148] sm:$0xff] %v3754
          %3887 = vst [vmem:[#allocation11 + $0x150] sm:$0xff] %v3759
          %3888 = vst [vmem:[#allocation11 + $0x158] sm:$0xff] %v3762
          %3889 = vst [vmem:[#allocation11 + $0x160] sm:$0xff] %v3767
          %3890 = vst [vmem:[#allocation11 + $0x168] sm:$0xff] %v3770
          %3891 = vst [vmem:[#allocation11 + $0x170] sm:$0xff] %v3775
          %3892 = vst [vmem:[#allocation11 + $0x178] sm:$0xff] %v3778
          %3893 = vst [vmem:[#allocation11 + $0x180] sm:$0xff] %v3783
          %3894 = vst [vmem:[#allocation11 + $0x188] sm:$0xff] %v3786
          %3895 = vst [vmem:[#allocation11 + $0x190] sm:$0xff] %v3791
          %3896 = vst [vmem:[#allocation11 + $0x198] sm:$0xff] %v3794
          %3897 = vst [vmem:[#allocation11 + $0x1a0] sm:$0xff] %v3799
          %3898 = vst [vmem:[#allocation11 + $0x1a8] sm:$0xff] %v3802
          %3899 = vst [vmem:[#allocation11 + $0x1b0] sm:$0xff] %v3807
          %3900 = vst [vmem:[#allocation11 + $0x1b8] sm:$0xff] %v3810
          %3901 = vst [vmem:[#allocation11 + $0x1c0] sm:$0xff] %v3815
          %3902 = vst [vmem:[#allocation11 + $0x1c8] sm:$0xff] %v3818
          %3903 = vst [vmem:[#allocation11 + $0x1d0] sm:$0xff] %v3823
          %3904 = vst [vmem:[#allocation11 + $0x1d8] sm:$0xff] %v3826
          %3905 = vst [vmem:[#allocation11 + $0x1e0] sm:$0xff] %v3831
          %3906 = vst [vmem:[#allocation11 + $0x1e8] sm:$0xff] %v3834
          %3907 = vst [vmem:[#allocation11 + $0x1f0] sm:$0xff] %v3839
          %3908 = vst [vmem:[#allocation11 + $0x1f8] sm:$0xff] %v3842
        $region64: #{tpu_custom_call.1} parent=43 // pred_fallthru
          _
        // Predicated region
        $region65: #{tpu_custom_call.1} parent=43 // pred_check
          %p3909 = pneg %p166
        $region66: #{tpu_custom_call.1} parent=43 // pred_check_branch
          %3911 = sbr.rel (%p3909) target = $region68
        $region67: #{tpu_custom_call.1} parent=43 // pred_region
          %s3913 = ssub.s32 8192, 8192
          %3914 = vsyncadd [#allocation7], %s3913
          %s3915 = sshll.u32 [#allocation11], 4
          %s3916 = int_to_ptr.vmem [resolvable:$true] %s3915
          %3921 = dma.vmem_to_hbm [thread:$0]  %s3916, 8192, %s6, [#allocation7], 128, 128, 8
        $region68: #{tpu_custom_call.1} parent=43 // pred_fallthru
          _
        // Predicated region
        $region69: #{tpu_custom_call.1} parent=43 // pred_check
          %p3922 = pneg %p166
        $region70: #{tpu_custom_call.1} parent=43 // pred_check_branch
          %3924 = sbr.rel (%p3922) target = $region72
        $region71: #{tpu_custom_call.1} parent=43 // pred_region
          %3925 = dma.done [#allocation7], 8192
        $region72: #{tpu_custom_call.1} parent=43 // pred_fallthru
          _
      $region44: #{tpu_custom_call.1} parent=5 // pred_fallthru
        _
      %p3926 = scmp.le.s32.totalorder 2, %s17
      // Predicated region
      $region73: #{tpu_custom_call.1} parent=5 // pred_check
        %p3927 = pneg %p3926
      $region74: #{tpu_custom_call.1} parent=5 // pred_check_branch
        %3929 = sbr.rel (%p3927) target = $region76
      $region75: #{tpu_custom_call.1} parent=5 // pred_region
        %s3930 = ssub.s32 %s17, 2
      $region76: #{tpu_custom_call.1} parent=5 // pred_fallthru
        _
    $region6: #{tpu_custom_call.1} parent=1 // loop_footer
      %s21 = sadd.s32 1, %s17
    $region7: #{tpu_custom_call.1} parent=1 // loop_footer_branch
      %16 = sbr.rel target = $region3
    $region8: #{tpu_custom_call.1} parent=1 // loop_exit
      _
    %3931 = vsyncpa [#allocation6], 1
    %s3932 = scalar_lea.sflag [#allocation6], 1
    %3933 = vsyncpa %s3932, 1
    %3934 = vsyncpa [#allocation9], 1
    %3935 = vsyncpa [#allocation7], 1
    %s3936 = scalar_lea.sflag [#allocation7], 1
    %3937 = vsyncpa %s3936, 1

</llo_original>
